<compile_context>
chip_gen: v7x
topology: tpu7x:2x2x1
jax: 0.10.0
libtpu: 0.0.40
codegen_flags: <defaults>
</compile_context>

<pallas_src>
import functools
import math

import jax
import jax.numpy as jnp
from jax.experimental import pallas as pl
from jax.experimental.pallas import tpu as pltpu

LANE = 128
SUBLANE = 8


def _round_up(n, m=LANE):
    return ((n + m - 1) // m) * m


def _pad_to(a, shape):
    pads = [(0, t - s) for s, t in zip(a.shape, shape)]
    return jnp.pad(a, pads)


def _pick_tile(dim, pref=512):
    """Tile size for a 128-padded dim: 512 if it divides, else 128."""
    return pref if dim % pref == 0 else LANE


# ---------------------------------------------------------------------------
# Fused kernel: encoders + GAP + front-door attention + classifier
#   grid = (num_op_tiles ["parallel"], num_d_tiles ["arbitrary"])
# ---------------------------------------------------------------------------
def gradsp_kernel(x_ref, w1_ref, b1_ref,
                  w2_bb_ref, b2_bb_ref, w2_fd_ref, b2_fd_ref,
                  cls_w_ref, cls_b_ref,
                  o_ref,
                  pooled_sc, fea_sc, xp_sc, scores_sc,
                  *, hw, n_real, scale):
    d = pl.program_id(1)
    num_d = pl.num_programs(1)
    n_pad = pooled_sc.shape[0]
    f2 = pooled_sc.shape[1]
    fp = f2 // 2
    dt = w2_bb_ref.shape[1]

    # -------- Stage 1 (independent of the D tile; recomputed per op tile,
    # num_op_tiles == 1 at toy shapes) --------
    @pl.when(d == 0)
    def _():
        xt = x_ref[...]                                           # (Npad*HW, Cp) bf16
        # Fused bb|fd first stage: one matmul + one ReLU.
        h = jnp.dot(xt, w1_ref[...],
                    preferred_element_type=jnp.float32) + b1_ref[...]
        h = jnp.maximum(h, 0.0)                                   # (Npad*HW, 2F)
        # GAP as reshape + sublane reduce (no dense averaging matrix).
        h3 = h.reshape(n_pad, hw, f2)
        pooled_sc[...] = jnp.sum(h3, axis=1) * (1.0 / hw)         # (Npad, 2F)
        scores_sc[...] = jnp.zeros_like(scores_sc)

    # -------- Stage 2: one latent-dim tile of both encoders' second FC ------
    pooled = pooled_sc[...]
    pooled_bb = pooled[:, :fp].astype(jnp.bfloat16)
    pooled_fd = pooled[:, fp:].astype(jnp.bfloat16)
    fea_t = jnp.dot(pooled_bb, w2_bb_ref[...],
                    preferred_element_type=jnp.float32) + b2_bb_ref[...]
    xp_t = jnp.dot(pooled_fd, w2_fd_ref[...],
                   preferred_element_type=jnp.float32) + b2_fd_ref[...]
    fea_sc[d] = fea_t                                             # (Npad, dt)
    xp_sc[d] = xp_t
    # Accumulate attention scores over D tiles (tiny (Npad, Npad) matmul, f32).
    scores_sc[...] += jax.lax.dot_general(
        fea_t, xp_t, (((1,), (1,)), ((), ())),
        preferred_element_type=jnp.float32) * scale

    # -------- Finalize on last D tile: softmax, front-door mix, classifier ---
    @pl.when(d == num_d - 1)
    def _():
        scores = scores_sc[...]
        # Mask padded batch rows out of the attention (keeps sliced logits exact).
        col = jax.lax.broadcasted_iota(jnp.int32, scores.shape, 1)
        scores = jnp.where(col < n_real, scores, -1e30)
        scores = scores - jnp.max(scores, axis=-1, keepdims=True)
        p = jnp.exp(scores)
        # EUP reciprocal; use approx=False if bit-parity with torch.softmax needed.
        p = p * pl.reciprocal(jnp.sum(p, axis=-1, keepdims=True), approx=True)

        op_t = o_ref.shape[1]

        def body(dd, acc):
            # combined[:, d-tile] = fea + attention-aggregated xp, then one
            # classifier D-tile contraction (cls weight slice is resident VMEM).
            comb = fea_sc[dd] + jnp.dot(p, xp_sc[dd],
                                        preferred_element_type=jnp.float32)
            start = pl.multiple_of(dd * dt, dt)
            w_d = cls_w_ref[pl.ds(start, dt), :]
            return acc + jnp.dot(comb.astype(jnp.bfloat16), w_d,
                                 preferred_element_type=jnp.float32)

        logits = jax.lax.fori_loop(0, num_d, body,
                                   jnp.zeros((n_pad, op_t), jnp.float32),
                                   unroll=True)
        o_ref[...] = logits + cls_b_ref[...]                      # unmasked lane-dense store


# ---------------------------------------------------------------------------
# Wrapper
# ---------------------------------------------------------------------------
@functools.partial(jax.jit, static_argnames=("latent_dim", "outdim"))
def grad_sp_wrap(x, params, *, latent_dim, outdim):
    """x: (N, C, H, W) float32 -> (N, outdim) float32 logits."""
    N, C, H, W = x.shape
    HW = H * W

    Cp, F2 = params["w1"].shape
    Fp = F2 // 2
    Dp = params["w2_bb"].shape[1]
    Op = params["cls_w"].shape[1]
    Np = _round_up(N, SUBLANE)            # 8-sublane batch padding (masked in softmax)

    dt = _pick_tile(Dp)                   # latent-dim tile (streams w2 weights)
    op_t = _pick_tile(Op)                 # classifier-output tile
    num_d = Dp // dt
    num_op = Op // op_t

    # Relayout in the wrapper (fuses with the producer): kernel sees (Npad*HW, Cp).
    x2 = jnp.transpose(x, (0, 2, 3, 1)).reshape(N * HW, C)
    x2 = jnp.pad(x2, ((0, (Np - N) * HW), (0, Cp - C))).astype(jnp.bfloat16)

    kern = functools.partial(gradsp_kernel, hw=HW, n_real=N,
                             scale=1.0 / math.sqrt(latent_dim))

    out = pl.pallas_call(
        kern,
        out_shape=jax.ShapeDtypeStruct((Np, Op), jnp.float32),
        grid=(num_op, num_d),
        in_specs=[
            pl.BlockSpec((Np * HW, Cp), lambda op, d: (0, 0)),     # activations (resident)
            pl.BlockSpec((Cp, F2), lambda op, d: (0, 0)),          # fused first-stage weight
            pl.BlockSpec((1, F2), lambda op, d: (0, 0)),
            pl.BlockSpec((Fp, dt), lambda op, d: (0, d)),          # w2_bb: streamed per D tile
            pl.BlockSpec((1, dt), lambda op, d: (0, d)),
            pl.BlockSpec((Fp, dt), lambda op, d: (0, d)),          # w2_fd: streamed per D tile
            pl.BlockSpec((1, dt), lambda op, d: (0, d)),
            pl.BlockSpec((Dp, op_t), lambda op, d: (0, op)),       # cls_w: tiled on output axis
            pl.BlockSpec((1, op_t), lambda op, d: (0, op)),
        ],
        out_specs=pl.BlockSpec((Np, op_t), lambda op, d: (0, op)),
        scratch_shapes=[
            pltpu.VMEM((Np, F2), jnp.float32),            # pooled (bb|fd)
            pltpu.VMEM((num_d, Np, dt), jnp.float32),     # fea tiles
            pltpu.VMEM((num_d, Np, dt), jnp.float32),     # xp tiles
            pltpu.VMEM((Np, Np), jnp.float32),            # attention scores accumulator
        ],
        compiler_params=pltpu.CompilerParams(
            dimension_semantics=("parallel", "arbitrary"),
            vmem_limit_bytes=48 * 1024 * 1024),
    )(x2, params["w1"], params["b1"],
      params["w2_bb"], params["b2_bb"],
      params["w2_fd"], params["b2_fd"],
      params["cls_w"], params["cls_b"])

    return out[:N, :outdim]


def init_params(key, channels, hidden_f, latent_dim, outdim):
    ks = jax.random.split(key, 10)
    s = 0.1
    return {
        # backbone-lite (stands in for resnet50x4)
        "bb_w1": s * jax.random.normal(ks[0], (channels, hidden_f), jnp.float32),
        "bb_b1": s * jax.random.normal(ks[1], (1, hidden_f), jnp.float32),
        "bb_w2": s * jax.random.normal(ks[2], (hidden_f, latent_dim), jnp.float32),
        "bb_b2": s * jax.random.normal(ks[3], (1, latent_dim), jnp.float32),
        # FDC5-internal encoder
        "fd_w1": s * jax.random.normal(ks[4], (channels, hidden_f), jnp.float32),
        "fd_b1": s * jax.random.normal(ks[5], (1, hidden_f), jnp.float32),
        "fd_w2": s * jax.random.normal(ks[6], (hidden_f, latent_dim), jnp.float32),
        "fd_b2": s * jax.random.normal(ks[7], (1, latent_dim), jnp.float32),
        # classifier head
        "cls_w": s * jax.random.normal(ks[8], (latent_dim, outdim), jnp.float32),
        "cls_b": s * jax.random.normal(ks[9], (1, outdim), jnp.float32),
    }


def prepare_params(p):
    """Zero-pad (channels->8 sublanes, features->128 lanes), fuse the two
    first-stage weights along the output axis, and cast matmul weights to
    bf16 (biases stay f32 and are added after the f32 accumulation).
    Padding is exact: padded rows/cols stay zero through ReLU and matmuls,
    so the sliced logits are unchanged."""
    C, F = p["bb_w1"].shape
    D = p["bb_w2"].shape[1]
    O = p["cls_w"].shape[1]
    Cp = _round_up(C, SUBLANE)
    Fp, Dp, Op = _round_up(F), _round_up(D), _round_up(O)

    w1 = jnp.concatenate([_pad_to(p["bb_w1"], (Cp, Fp)),
                          _pad_to(p["fd_w1"], (Cp, Fp))], axis=1)
    b1 = jnp.concatenate([_pad_to(p["bb_b1"], (1, Fp)),
                          _pad_to(p["fd_b1"], (1, Fp))], axis=1)
    return {
        "w1": w1.astype(jnp.bfloat16),
        "b1": b1.astype(jnp.float32),
        "w2_bb": _pad_to(p["bb_w2"], (Fp, Dp)).astype(jnp.bfloat16),
        "b2_bb": _pad_to(p["bb_b2"], (1, Dp)).astype(jnp.float32),
        "w2_fd": _pad_to(p["fd_w2"], (Fp, Dp)).astype(jnp.bfloat16),
        "b2_fd": _pad_to(p["fd_b2"], (1, Dp)).astype(jnp.float32),
        "cls_w": _pad_to(p["cls_w"], (Dp, Op)).astype(jnp.bfloat16),
        "cls_b": _pad_to(p["cls_b"], (1, Op)).astype(jnp.float32),
    }


if __name__ == "__main__":
    key = jax.random.PRNGKey(0)
    k_in, k_par = jax.random.split(key)

    # Small shapes consistent with the module (latent_dim 8192 -> 32, outdim 1000 -> 4).
    N, C, H, W = 2, 4, 16, 16
    hidden_f, latent_dim, outdim = 8, 32, 4

    x = jax.random.normal(k_in, (N, C, H, W), jnp.float32)
    params = prepare_params(init_params(k_par, C, hidden_f, latent_dim, outdim))

    pred = grad_sp_wrap(x, params, latent_dim=latent_dim, outdim=outdim)
    pred = jax.block_until_ready(pred)

    assert pred.shape == (N, outdim), pred.shape
    assert bool(jnp.all(jnp.isfinite(pred)))
    print("KERNEL_OK")
</pallas_src>

<mosaic_0001>
module attributes {stable_mosaic.version = 11 : i64} {
  func.func @gradsp_kernel(%arg0: i32, %arg1: i32, %arg2: memref<2048x8xbf16, #tpu.memory_space<vmem>>, %arg3: memref<8x256xbf16, #tpu.memory_space<vmem>>, %arg4: memref<1x256xf32, #tpu.memory_space<vmem>>, %arg5: memref<128x128xbf16, #tpu.memory_space<vmem>>, %arg6: memref<1x128xf32, #tpu.memory_space<vmem>>, %arg7: memref<128x128xbf16, #tpu.memory_space<vmem>>, %arg8: memref<1x128xf32, #tpu.memory_space<vmem>>, %arg9: memref<128x128xbf16, #tpu.memory_space<vmem>>, %arg10: memref<1x128xf32, #tpu.memory_space<vmem>>, %arg11: memref<8x128xf32, #tpu.memory_space<vmem>>, %arg12: memref<8x256xf32, #tpu.memory_space<vmem>>, %arg13: memref<1x8x128xf32, #tpu.memory_space<vmem>>, %arg14: memref<1x8x128xf32, #tpu.memory_space<vmem>>, %arg15: memref<8x8xf32, #tpu.memory_space<vmem>>) attributes {dimension_semantics = [#tpu.dimension_semantics<parallel>, #tpu.dimension_semantics<arbitrary>], iteration_bounds = array<i64: 1, 1>, scalar_prefetch = 0 : i64, scratch_operands = 4 : i64, tpu.core_type = #tpu.core_type<tc>, window_params = [{pipeline_mode = #tpu.pipeline_mode<synchronous>, transform_indices = @transform_0, window_bounds = array<i64: 2048, 8>}, {pipeline_mode = #tpu.pipeline_mode<synchronous>, transform_indices = @transform_1, window_bounds = array<i64: 8, 256>}, {pipeline_mode = #tpu.pipeline_mode<synchronous>, transform_indices = @transform_2, window_bounds = array<i64: 1, 256>}, {transform_indices = @transform_3, window_bounds = array<i64: 128, 128>}, {transform_indices = @transform_4, window_bounds = array<i64: 1, 128>}, {transform_indices = @transform_5, window_bounds = array<i64: 128, 128>}, {transform_indices = @transform_6, window_bounds = array<i64: 1, 128>}, {transform_indices = @transform_7, window_bounds = array<i64: 128, 128>}, {transform_indices = @transform_8, window_bounds = array<i64: 1, 128>}, {transform_indices = @transform_9, window_bounds = array<i64: 8, 128>}]} {
    %c0_i32 = arith.constant 0 : i32
    %0 = arith.cmpi eq, %arg1, %c0_i32 : i32
    %1 = arith.extui %0 : i1 to i32
    %c0_i32_0 = arith.constant 0 : i32
    %2 = arith.cmpi ne, %1, %c0_i32_0 : i32
    scf.if %2 {
      %c0_23 = arith.constant 0 : index
      %c0_24 = arith.constant 0 : index
      %35 = vector.load %arg2[%c0_23, %c0_24] : memref<2048x8xbf16, #tpu.memory_space<vmem>>, vector<2048x8xbf16>
      %c0_25 = arith.constant 0 : index
      %c0_26 = arith.constant 0 : index
      %36 = vector.load %arg3[%c0_25, %c0_26] : memref<8x256xbf16, #tpu.memory_space<vmem>>, vector<8x256xbf16>
      %cst_27 = arith.constant dense<0.000000e+00> : vector<2048x256xf32>
      %37 = tpu.matmul %35, %36, %cst_27 {dimension_numbers = #tpu.dot_dimension_numbers<[1], [0], [0], [1], [0, 0, 1, 1], [], []>} : vector<2048x8xbf16>, vector<8x256xbf16>, vector<2048x256xf32> -> vector<2048x256xf32>
      %c0_28 = arith.constant 0 : index
      %c0_29 = arith.constant 0 : index
      %38 = vector.load %arg4[%c0_28, %c0_29] : memref<1x256xf32, #tpu.memory_space<vmem>>, vector<1x256xf32>
      %39 = vector.broadcast %38 : vector<1x256xf32> to vector<2048x256xf32>
      %40 = arith.addf %37, %39 : vector<2048x256xf32>
      %cst_30 = arith.constant 0.000000e+00 : f32
      %41 = vector.broadcast %cst_30 : f32 to vector<2048x256xf32>
      %42 = arith.maximumf %40, %41 : vector<2048x256xf32>
      %43 = vector.shape_cast %42 : vector<2048x256xf32> to vector<8x256x256xf32>
      %cst_31 = arith.constant dense<0.000000e+00> : vector<8x256xf32>
      %44 = vector.multi_reduction <add>, %43, %cst_31 [1] : vector<8x256x256xf32> to vector<8x256xf32>
      %cst_32 = arith.constant 3.906250e-03 : f32
      %45 = vector.broadcast %cst_32 : f32 to vector<8x256xf32>
      %46 = arith.mulf %44, %45 : vector<8x256xf32>
      %c0_33 = arith.constant 0 : index
      %c0_34 = arith.constant 0 : index
      %47 = vector.load %arg12[%c0_33, %c0_34] : memref<8x256xf32, #tpu.memory_space<vmem>>, vector<8x256xf32>
      tpu.vector_store %arg12[%c0_33, %c0_34], %46 {strides = array<i32>} : memref<8x256xf32, #tpu.memory_space<vmem>>, vector<8x256xf32>,
      %cst_35 = arith.constant 0.000000e+00 : f32
      %48 = vector.broadcast %cst_35 : f32 to vector<8x8xf32>
      %c0_36 = arith.constant 0 : index
      %c0_37 = arith.constant 0 : index
      %49 = vector.load %arg15[%c0_36, %c0_37] : memref<8x8xf32, #tpu.memory_space<vmem>>, vector<8x8xf32>
      tpu.vector_store %arg15[%c0_36, %c0_37], %48 {strides = array<i32>} : memref<8x8xf32, #tpu.memory_space<vmem>>, vector<8x8xf32>,
    } else {
    }
    %c0 = arith.constant 0 : index
    %c0_1 = arith.constant 0 : index
    %3 = vector.load %arg12[%c0, %c0_1] : memref<8x256xf32, #tpu.memory_space<vmem>>, vector<8x256xf32>
    %4 = vector.extract_strided_slice %3 {offsets = [0, 0], sizes = [8, 128], strides = [1, 1]} : vector<8x256xf32> to vector<8x128xf32>
    %5 = arith.truncf %4 : vector<8x128xf32> to vector<8x128xbf16>
    %6 = vector.extract_strided_slice %3 {offsets = [0, 128], sizes = [8, 128], strides = [1, 1]} : vector<8x256xf32> to vector<8x128xf32>
    %7 = arith.truncf %6 : vector<8x128xf32> to vector<8x128xbf16>
    %c0_2 = arith.constant 0 : index
    %c0_3 = arith.constant 0 : index
    %8 = vector.load %arg5[%c0_2, %c0_3] : memref<128x128xbf16, #tpu.memory_space<vmem>>, vector<128x128xbf16>
    %cst = arith.constant dense<0.000000e+00> : vector<8x128xf32>
    %9 = tpu.matmul %5, %8, %cst {dimension_numbers = #tpu.dot_dimension_numbers<[1], [0], [0], [1], [0, 0, 1, 1], [], []>} : vector<8x128xbf16>, vector<128x128xbf16>, vector<8x128xf32> -> vector<8x128xf32>
    %c0_4 = arith.constant 0 : index
    %c0_5 = arith.constant 0 : index
    %10 = vector.load %arg6[%c0_4, %c0_5] : memref<1x128xf32, #tpu.memory_space<vmem>>, vector<1x128xf32>
    %11 = vector.broadcast %10 : vector<1x128xf32> to vector<8x128xf32>
    %12 = arith.addf %9, %11 : vector<8x128xf32>
    %c0_6 = arith.constant 0 : index
    %c0_7 = arith.constant 0 : index
    %13 = vector.load %arg7[%c0_6, %c0_7] : memref<128x128xbf16, #tpu.memory_space<vmem>>, vector<128x128xbf16>
    %cst_8 = arith.constant dense<0.000000e+00> : vector<8x128xf32>
    %14 = tpu.matmul %7, %13, %cst_8 {dimension_numbers = #tpu.dot_dimension_numbers<[1], [0], [0], [1], [0, 0, 1, 1], [], []>} : vector<8x128xbf16>, vector<128x128xbf16>, vector<8x128xf32> -> vector<8x128xf32>
    %c0_9 = arith.constant 0 : index
    %c0_10 = arith.constant 0 : index
    %15 = vector.load %arg8[%c0_9, %c0_10] : memref<1x128xf32, #tpu.memory_space<vmem>>, vector<1x128xf32>
    %16 = vector.broadcast %15 : vector<1x128xf32> to vector<8x128xf32>
    %17 = arith.addf %14, %16 : vector<8x128xf32>
    %18 = arith.index_cast %arg1 : i32 to index
    %c0_11 = arith.constant 0 : index
    %c0_12 = arith.constant 0 : index
    %19 = vector.load %arg13[%18, %c0_11, %c0_12] : memref<1x8x128xf32, #tpu.memory_space<vmem>>, vector<1x8x128xf32>
    %20 = vector.shape_cast %19 : vector<1x8x128xf32> to vector<8x128xf32>
    %21 = vector.shape_cast %12 : vector<8x128xf32> to vector<1x8x128xf32>
    tpu.vector_store %arg13[%18, %c0_11, %c0_12], %21 {strides = array<i32>} : memref<1x8x128xf32, #tpu.memory_space<vmem>>, vector<1x8x128xf32>,
    %22 = arith.index_cast %arg1 : i32 to index
    %c0_13 = arith.constant 0 : index
    %c0_14 = arith.constant 0 : index
    %23 = vector.load %arg14[%22, %c0_13, %c0_14] : memref<1x8x128xf32, #tpu.memory_space<vmem>>, vector<1x8x128xf32>
    %24 = vector.shape_cast %23 : vector<1x8x128xf32> to vector<8x128xf32>
    %25 = vector.shape_cast %17 : vector<8x128xf32> to vector<1x8x128xf32>
    tpu.vector_store %arg14[%22, %c0_13, %c0_14], %25 {strides = array<i32>} : memref<1x8x128xf32, #tpu.memory_space<vmem>>, vector<1x8x128xf32>,
    %c0_15 = arith.constant 0 : index
    %c0_16 = arith.constant 0 : index
    %26 = vector.load %arg15[%c0_15, %c0_16] : memref<8x8xf32, #tpu.memory_space<vmem>>, vector<8x8xf32>
    %cst_17 = arith.constant dense<0.000000e+00> : vector<8x8xf32>
    %27 = tpu.matmul %12, %17, %cst_17 {dimension_numbers = #tpu.dot_dimension_numbers<[1], [1], [0], [0], [0, 0, 1, 0], [], []>} : vector<8x128xf32>, vector<8x128xf32>, vector<8x8xf32> -> vector<8x8xf32>
    %cst_18 = arith.constant 0.176776692 : f32
    %28 = vector.broadcast %cst_18 : f32 to vector<8x8xf32>
    %29 = arith.mulf %27, %28 : vector<8x8xf32>
    %30 = arith.addf %26, %29 : vector<8x8xf32>
    %c0_19 = arith.constant 0 : index
    %c0_20 = arith.constant 0 : index
    %31 = vector.load %arg15[%c0_19, %c0_20] : memref<8x8xf32, #tpu.memory_space<vmem>>, vector<8x8xf32>
    tpu.vector_store %arg15[%c0_19, %c0_20], %30 {strides = array<i32>} : memref<8x8xf32, #tpu.memory_space<vmem>>, vector<8x8xf32>,
    %c0_i32_21 = arith.constant 0 : i32
    %32 = arith.cmpi eq, %arg1, %c0_i32_21 : i32
    %33 = arith.extui %32 : i1 to i32
    %c0_i32_22 = arith.constant 0 : i32
    %34 = arith.cmpi ne, %33, %c0_i32_22 : i32
    scf.if %34 {
      %c0_23 = arith.constant 0 : index
      %c0_24 = arith.constant 0 : index
      %35 = vector.load %arg15[%c0_23, %c0_24] : memref<8x8xf32, #tpu.memory_space<vmem>>, vector<8x8xf32>
      %36 = tpu.iota {dimensions = array<i32: 1>} : vector<8x8xi32>
      %c2_i32 = arith.constant 2 : i32
      %37 = vector.broadcast %c2_i32 : i32 to vector<8x8xi32>
      %38 = arith.cmpi slt, %36, %37 : vector<8x8xi32>
      %cst_25 = arith.constant -1.000000e+30 : f32
      %39 = vector.broadcast %cst_25 : f32 to vector<8x8xf32>
      %40 = arith.select %38, %35, %39 : vector<8x8xi1>, vector<8x8xf32>
      %cst_26 = arith.constant dense<0xFF800000> : vector<8xf32>
      %41 = vector.multi_reduction <maximumf>, %40, %cst_26 [1] : vector<8x8xf32> to vector<8xf32>
      %42 = vector.shape_cast %41 : vector<8xf32> to vector<8x1xf32>
      %43 = vector.broadcast %42 : vector<8x1xf32> to vector<8x8xf32>
      %44 = arith.subf %40, %43 : vector<8x8xf32>
      %45 = math.exp %44 : vector<8x8xf32>
      %cst_27 = arith.constant dense<0.000000e+00> : vector<8xf32>
      %46 = vector.multi_reduction <add>, %45, %cst_27 [1] : vector<8x8xf32> to vector<8xf32>
      %47 = vector.shape_cast %46 : vector<8xf32> to vector<8x1xf32>
      %48 = tpu.reciprocal %47 {approx = true} : vector<8x1xf32> -> vector<8x1xf32>
      %49 = vector.broadcast %48 : vector<8x1xf32> to vector<8x8xf32>
      %50 = arith.mulf %45, %49 : vector<8x8xf32>
      %cst_28 = arith.constant 0.000000e+00 : f32
      %51 = vector.broadcast %cst_28 : f32 to vector<8x128xf32>
      %c0_i32_29 = arith.constant 0 : i32
      %52 = arith.index_cast %c0_i32_29 : i32 to index
      %c0_30 = arith.constant 0 : index
      %c0_31 = arith.constant 0 : index
      %53 = vector.load %arg13[%52, %c0_30, %c0_31] : memref<1x8x128xf32, #tpu.memory_space<vmem>>, vector<1x8x128xf32>
      %54 = vector.shape_cast %53 : vector<1x8x128xf32> to vector<8x128xf32>
      %55 = arith.index_cast %c0_i32_29 : i32 to index
      %c0_32 = arith.constant 0 : index
      %c0_33 = arith.constant 0 : index
      %56 = vector.load %arg14[%55, %c0_32, %c0_33] : memref<1x8x128xf32, #tpu.memory_space<vmem>>, vector<1x8x128xf32>
      %57 = vector.shape_cast %56 : vector<1x8x128xf32> to vector<8x128xf32>
      %cst_34 = arith.constant dense<0.000000e+00> : vector<8x128xf32>
      %58 = tpu.matmul %50, %57, %cst_34 {dimension_numbers = #tpu.dot_dimension_numbers<[1], [0], [0], [1], [0, 0, 1, 1], [], []>} : vector<8x8xf32>, vector<8x128xf32>, vector<8x128xf32> -> vector<8x128xf32>
      %59 = arith.addf %54, %58 : vector<8x128xf32>
      %c128_i32 = arith.constant 128 : i32
      %60 = arith.muli %c0_i32_29, %c128_i32 : i32
      %61 = tpu.assume_multiple %60, 128 : i32
      %62 = arith.index_cast %61 : i32 to index
      %c0_35 = arith.constant 0 : index
      %63 = vector.load %arg9[%62, %c0_35] : memref<128x128xbf16, #tpu.memory_space<vmem>>, vector<128x128xbf16>
      %64 = arith.truncf %59 : vector<8x128xf32> to vector<8x128xbf16>
      %cst_36 = arith.constant dense<0.000000e+00> : vector<8x128xf32>
      %65 = tpu.matmul %64, %63, %cst_36 {dimension_numbers = #tpu.dot_dimension_numbers<[1], [0], [0], [1], [0, 0, 1, 1], [], []>} : vector<8x128xbf16>, vector<128x128xbf16>, vector<8x128xf32> -> vector<8x128xf32>
      %66 = arith.addf %51, %65 : vector<8x128xf32>
      %c1_i32 = arith.constant 1 : i32
      %c0_37 = arith.constant 0 : index
      %c0_38 = arith.constant 0 : index
      %67 = vector.load %arg10[%c0_37, %c0_38] : memref<1x128xf32, #tpu.memory_space<vmem>>, vector<1x128xf32>
      %68 = vector.broadcast %67 : vector<1x128xf32> to vector<8x128xf32>
      %69 = arith.addf %66, %68 : vector<8x128xf32>
      %c0_39 = arith.constant 0 : index
      %c0_40 = arith.constant 0 : index
      %70 = vector.load %arg11[%c0_39, %c0_40] : memref<8x128xf32, #tpu.memory_space<vmem>>, vector<8x128xf32>
      tpu.vector_store %arg11[%c0_39, %c0_40], %69 {strides = array<i32>} : memref<8x128xf32, #tpu.memory_space<vmem>>, vector<8x128xf32>,
    } else {
    }
    return
  }
  func.func @transform_0(%arg0: i32, %arg1: i32) -> (i32, i32) {
    %c0_i32 = arith.constant 0 : i32
    %c0_i32_0 = arith.constant 0 : i32
    %c0_i32_1 = arith.constant 0 : i32
    return %c0_i32, %c0_i32_0 : i32, i32
  }
  func.func @transform_1(%arg0: i32, %arg1: i32) -> (i32, i32) {
    %c0_i32 = arith.constant 0 : i32
    %c0_i32_0 = arith.constant 0 : i32
    %c0_i32_1 = arith.constant 0 : i32
    return %c0_i32, %c0_i32_0 : i32, i32
  }
  func.func @transform_2(%arg0: i32, %arg1: i32) -> (i32, i32) {
    %c0_i32 = arith.constant 0 : i32
    %c0_i32_0 = arith.constant 0 : i32
    %c0_i32_1 = arith.constant 0 : i32
    return %c0_i32, %c0_i32_0 : i32, i32
  }
  func.func @transform_3(%arg0: i32, %arg1: i32) -> (i32, i32) {
    %c0_i32 = arith.constant 0 : i32
    %c0_i32_0 = arith.constant 0 : i32
    return %c0_i32, %arg1 : i32, i32
  }
  func.func @transform_4(%arg0: i32, %arg1: i32) -> (i32, i32) {
    %c0_i32 = arith.constant 0 : i32
    %c0_i32_0 = arith.constant 0 : i32
    return %c0_i32, %arg1 : i32, i32
  }
  func.func @transform_5(%arg0: i32, %arg1: i32) -> (i32, i32) {
    %c0_i32 = arith.constant 0 : i32
    %c0_i32_0 = arith.constant 0 : i32
    return %c0_i32, %arg1 : i32, i32
  }
  func.func @transform_6(%arg0: i32, %arg1: i32) -> (i32, i32) {
    %c0_i32 = arith.constant 0 : i32
    %c0_i32_0 = arith.constant 0 : i32
    return %c0_i32, %arg1 : i32, i32
  }
  func.func @transform_7(%arg0: i32, %arg1: i32) -> (i32, i32) {
    %c0_i32 = arith.constant 0 : i32
    %c0_i32_0 = arith.constant 0 : i32
    return %c0_i32, %arg0 : i32, i32
  }
  func.func @transform_8(%arg0: i32, %arg1: i32) -> (i32, i32) {
    %c0_i32 = arith.constant 0 : i32
    %c0_i32_0 = arith.constant 0 : i32
    return %c0_i32, %arg0 : i32, i32
  }
  func.func @transform_9(%arg0: i32, %arg1: i32) -> (i32, i32) {
    %c0_i32 = arith.constant 0 : i32
    %c0_i32_0 = arith.constant 0 : i32
    return %c0_i32, %arg0 : i32, i32
  }
}

</mosaic_0001>

<llo_original>
// kernel: grad_sp_wrap.1
$region0: #{grad_sp_wrap.1}
  #allocation0 [shape = 'u32[]', space=smem, size = 0x4, offset = 0x4, fixed_abs, tag = 'smem constant byte address 0x4 - core index']
  #allocation1 [shape = 'u32[144,128]{1,0:T(1,128)}', space=vmem, size = 0x12000, scoped, tag = 'internal scratch']
  #allocation2 [shape = 'f32[8,256]{1,0:T(8,128)}', space=vmem, size = 0x2000, scoped, tag = 'scratch operand']
  #allocation3 [shape = 'f32[1,8,128]{2,1,0:T(8,128)}', space=vmem, size = 0x1000, scoped, tag = 'scratch operand']
  #allocation4 [shape = 'f32[1,8,128]{2,1,0:T(8,128)}', space=vmem, size = 0x1000, scoped, tag = 'scratch operand']
  #allocation5 [shape = 'f32[8,8]{1,0:T(8,128)}', space=vmem, size = 0x1000, scoped, tag = 'scratch operand']
  %s0 = inlined_call_operand.vmem [shape: bf16[2048,8], index: 0, kind: input, shape index: {}]
  %s1 = inlined_call_operand.vmem [shape: bf16[8,256], index: 1, kind: input, shape index: {}]
  %s2 = inlined_call_operand.vmem [shape: f32[1,256], index: 2, kind: input, shape index: {}]
  %s3 = inlined_call_operand.vmem [shape: bf16[128,128], index: 3, kind: input, shape index: {}]
  %s4 = inlined_call_operand.vmem [shape: f32[1,128], index: 4, kind: input, shape index: {}]
  %s5 = inlined_call_operand.vmem [shape: bf16[128,128], index: 5, kind: input, shape index: {}]
  %s6 = inlined_call_operand.vmem [shape: f32[1,128], index: 6, kind: input, shape index: {}]
  %s7 = inlined_call_operand.vmem [shape: bf16[128,128], index: 7, kind: input, shape index: {}]
  %s8 = inlined_call_operand.vmem [shape: f32[1,128], index: 8, kind: input, shape index: {}]
  %s9 = inlined_call_operand.vmem [shape: f32[8,128], index: 9, kind: output, shape index: {}]
  %s10 = sld [smem:[#allocation0]]
  $region54: #{grad_sp_wrap.1} parent=0
    _
  %s12 = ssub.s32 1, %s10
  %s13 = scalar_select 0, %s12, %s10
  // Predicated region
  $region2: #{grad_sp_wrap.1} parent=0 // pred_check
    _
  $region3: #{grad_sp_wrap.1} parent=0 // pred_check_branch
    %15 = sbr.rel (0) target = $region5
  $region4: #{grad_sp_wrap.1} parent=0 // pred_region
    _
  $region5: #{grad_sp_wrap.1} parent=0 // pred_fallthru
    _
  // Predicated region
  $region6: #{grad_sp_wrap.1} parent=0 // pred_check
    _
  $region7: #{grad_sp_wrap.1} parent=0 // pred_check_branch
    %17 = sbr.rel (0) target = $region9
  $region8: #{grad_sp_wrap.1} parent=0 // pred_region
    _
  $region9: #{grad_sp_wrap.1} parent=0 // pred_fallthru
    _
  // Predicated region
  $region10: #{grad_sp_wrap.1} parent=0 // pred_check
    _
  $region11: #{grad_sp_wrap.1} parent=0 // pred_check_branch
    %19 = sbr.rel (0) target = $region13
  $region12: #{grad_sp_wrap.1} parent=0 // pred_region
    _
  $region13: #{grad_sp_wrap.1} parent=0 // pred_fallthru
    _
  // Predicated region
  $region14: #{grad_sp_wrap.1} parent=0 // pred_check
    _
  $region15: #{grad_sp_wrap.1} parent=0 // pred_check_branch
    %21 = sbr.rel (0) target = $region17
  $region16: #{grad_sp_wrap.1} parent=0 // pred_region
    _
  $region17: #{grad_sp_wrap.1} parent=0 // pred_fallthru
    _
  // Predicated region
  $region18: #{grad_sp_wrap.1} parent=0 // pred_check
    _
  $region19: #{grad_sp_wrap.1} parent=0 // pred_check_branch
    %23 = sbr.rel (0) target = $region21
  $region20: #{grad_sp_wrap.1} parent=0 // pred_region
    _
  $region21: #{grad_sp_wrap.1} parent=0 // pred_fallthru
    _
  // Predicated region
  $region22: #{grad_sp_wrap.1} parent=0 // pred_check
    _
  $region23: #{grad_sp_wrap.1} parent=0 // pred_check_branch
    %25 = sbr.rel (0) target = $region25
  $region24: #{grad_sp_wrap.1} parent=0 // pred_region
    _
  $region25: #{grad_sp_wrap.1} parent=0 // pred_fallthru
    _
  // Predicated region
  $region26: #{grad_sp_wrap.1} parent=0 // pred_check
    _
  $region27: #{grad_sp_wrap.1} parent=0 // pred_check_branch
    %27 = sbr.rel (0) target = $region29
  $region28: #{grad_sp_wrap.1} parent=0 // pred_region
    _
  $region29: #{grad_sp_wrap.1} parent=0 // pred_fallthru
    _
  // Predicated region
  $region30: #{grad_sp_wrap.1} parent=0 // pred_check
    _
  $region31: #{grad_sp_wrap.1} parent=0 // pred_check_branch
    %29 = sbr.rel (0) target = $region33
  $region32: #{grad_sp_wrap.1} parent=0 // pred_region
    _
  $region33: #{grad_sp_wrap.1} parent=0 // pred_fallthru
    _
  // Predicated region
  $region34: #{grad_sp_wrap.1} parent=0 // pred_check
    _
  $region35: #{grad_sp_wrap.1} parent=0 // pred_check_branch
    %31 = sbr.rel (0) target = $region37
  $region36: #{grad_sp_wrap.1} parent=0 // pred_region
    _
  $region37: #{grad_sp_wrap.1} parent=0 // pred_fallthru
    _
  %p33 = scmp.eq.s32.totalorder 0, 0
  // Predicated region
  $region38: #{grad_sp_wrap.1} parent=0 // pred_check
    %p34 = pneg %p33
  $region39: #{grad_sp_wrap.1} parent=0 // pred_check_branch
    %36 = sbr.rel (%p34) target = $region41
  $region40: #{grad_sp_wrap.1} parent=0 // pred_region
    %v37 = vld [vmem:[%s0] sm:$0xf]
    %v38 = vld [vmem:[%s0 + $0x4] sm:$0xf]
    %v39 = vld [vmem:[%s0 + $0x8] sm:$0xf]
    %v40 = vld [vmem:[%s0 + $0xc] sm:$0xf]
    %v41 = vld [vmem:[%s0 + $0x10] sm:$0xf]
    %v42 = vld [vmem:[%s0 + $0x14] sm:$0xf]
    %v43 = vld [vmem:[%s0 + $0x18] sm:$0xf]
    %v44 = vld [vmem:[%s0 + $0x1c] sm:$0xf]
    %v45 = vld [vmem:[%s0 + $0x20] sm:$0xf]
    %v46 = vld [vmem:[%s0 + $0x24] sm:$0xf]
    %v47 = vld [vmem:[%s0 + $0x28] sm:$0xf]
    %v48 = vld [vmem:[%s0 + $0x2c] sm:$0xf]
    %v49 = vld [vmem:[%s0 + $0x30] sm:$0xf]
    %v50 = vld [vmem:[%s0 + $0x34] sm:$0xf]
    %v51 = vld [vmem:[%s0 + $0x38] sm:$0xf]
    %v52 = vld [vmem:[%s0 + $0x3c] sm:$0xf]
    %v53 = vld [vmem:[%s0 + $0x40] sm:$0xf]
    %v54 = vld [vmem:[%s0 + $0x44] sm:$0xf]
    %v55 = vld [vmem:[%s0 + $0x48] sm:$0xf]
    %v56 = vld [vmem:[%s0 + $0x4c] sm:$0xf]
    %v57 = vld [vmem:[%s0 + $0x50] sm:$0xf]
    %v58 = vld [vmem:[%s0 + $0x54] sm:$0xf]
    %v59 = vld [vmem:[%s0 + $0x58] sm:$0xf]
    %v60 = vld [vmem:[%s0 + $0x5c] sm:$0xf]
    %v61 = vld [vmem:[%s0 + $0x60] sm:$0xf]
    %v62 = vld [vmem:[%s0 + $0x64] sm:$0xf]
    %v63 = vld [vmem:[%s0 + $0x68] sm:$0xf]
    %v64 = vld [vmem:[%s0 + $0x6c] sm:$0xf]
    %v65 = vld [vmem:[%s0 + $0x70] sm:$0xf]
    %v66 = vld [vmem:[%s0 + $0x74] sm:$0xf]
    %v67 = vld [vmem:[%s0 + $0x78] sm:$0xf]
    %v68 = vld [vmem:[%s0 + $0x7c] sm:$0xf]
    %v69 = vld [vmem:[%s0 + $0x80] sm:$0xf]
    %v70 = vld [vmem:[%s0 + $0x84] sm:$0xf]
    %v71 = vld [vmem:[%s0 + $0x88] sm:$0xf]
    %v72 = vld [vmem:[%s0 + $0x8c] sm:$0xf]
    %v73 = vld [vmem:[%s0 + $0x90] sm:$0xf]
    %v74 = vld [vmem:[%s0 + $0x94] sm:$0xf]
    %v75 = vld [vmem:[%s0 + $0x98] sm:$0xf]
    %v76 = vld [vmem:[%s0 + $0x9c] sm:$0xf]
    %v77 = vld [vmem:[%s0 + $0xa0] sm:$0xf]
    %v78 = vld [vmem:[%s0 + $0xa4] sm:$0xf]
    %v79 = vld [vmem:[%s0 + $0xa8] sm:$0xf]
    %v80 = vld [vmem:[%s0 + $0xac] sm:$0xf]
    %v81 = vld [vmem:[%s0 + $0xb0] sm:$0xf]
    %v82 = vld [vmem:[%s0 + $0xb4] sm:$0xf]
    %v83 = vld [vmem:[%s0 + $0xb8] sm:$0xf]
    %v84 = vld [vmem:[%s0 + $0xbc] sm:$0xf]
    %v85 = vld [vmem:[%s0 + $0xc0] sm:$0xf]
    %v86 = vld [vmem:[%s0 + $0xc4] sm:$0xf]
    %v87 = vld [vmem:[%s0 + $0xc8] sm:$0xf]
    %v88 = vld [vmem:[%s0 + $0xcc] sm:$0xf]
    %v89 = vld [vmem:[%s0 + $0xd0] sm:$0xf]
    %v90 = vld [vmem:[%s0 + $0xd4] sm:$0xf]
    %v91 = vld [vmem:[%s0 + $0xd8] sm:$0xf]
    %v92 = vld [vmem:[%s0 + $0xdc] sm:$0xf]
    %v93 = vld [vmem:[%s0 + $0xe0] sm:$0xf]
    %v94 = vld [vmem:[%s0 + $0xe4] sm:$0xf]
    %v95 = vld [vmem:[%s0 + $0xe8] sm:$0xf]
    %v96 = vld [vmem:[%s0 + $0xec] sm:$0xf]
    %v97 = vld [vmem:[%s0 + $0xf0] sm:$0xf]
    %v98 = vld [vmem:[%s0 + $0xf4] sm:$0xf]
    %v99 = vld [vmem:[%s0 + $0xf8] sm:$0xf]
    %v100 = vld [vmem:[%s0 + $0xfc] sm:$0xf]
    %v101 = vld [vmem:[%s0 + $0x100] sm:$0xf]
    %v102 = vld [vmem:[%s0 + $0x104] sm:$0xf]
    %v103 = vld [vmem:[%s0 + $0x108] sm:$0xf]
    %v104 = vld [vmem:[%s0 + $0x10c] sm:$0xf]
    %v105 = vld [vmem:[%s0 + $0x110] sm:$0xf]
    %v106 = vld [vmem:[%s0 + $0x114] sm:$0xf]
    %v107 = vld [vmem:[%s0 + $0x118] sm:$0xf]
    %v108 = vld [vmem:[%s0 + $0x11c] sm:$0xf]
    %v109 = vld [vmem:[%s0 + $0x120] sm:$0xf]
    %v110 = vld [vmem:[%s0 + $0x124] sm:$0xf]
    %v111 = vld [vmem:[%s0 + $0x128] sm:$0xf]
    %v112 = vld [vmem:[%s0 + $0x12c] sm:$0xf]
    %v113 = vld [vmem:[%s0 + $0x130] sm:$0xf]
    %v114 = vld [vmem:[%s0 + $0x134] sm:$0xf]
    %v115 = vld [vmem:[%s0 + $0x138] sm:$0xf]
    %v116 = vld [vmem:[%s0 + $0x13c] sm:$0xf]
    %v117 = vld [vmem:[%s0 + $0x140] sm:$0xf]
    %v118 = vld [vmem:[%s0 + $0x144] sm:$0xf]
    %v119 = vld [vmem:[%s0 + $0x148] sm:$0xf]
    %v120 = vld [vmem:[%s0 + $0x14c] sm:$0xf]
    %v121 = vld [vmem:[%s0 + $0x150] sm:$0xf]
    %v122 = vld [vmem:[%s0 + $0x154] sm:$0xf]
    %v123 = vld [vmem:[%s0 + $0x158] sm:$0xf]
    %v124 = vld [vmem:[%s0 + $0x15c] sm:$0xf]
    %v125 = vld [vmem:[%s0 + $0x160] sm:$0xf]
    %v126 = vld [vmem:[%s0 + $0x164] sm:$0xf]
    %v127 = vld [vmem:[%s0 + $0x168] sm:$0xf]
    %v128 = vld [vmem:[%s0 + $0x16c] sm:$0xf]
    %v129 = vld [vmem:[%s0 + $0x170] sm:$0xf]
    %v130 = vld [vmem:[%s0 + $0x174] sm:$0xf]
    %v131 = vld [vmem:[%s0 + $0x178] sm:$0xf]
    %v132 = vld [vmem:[%s0 + $0x17c] sm:$0xf]
    %v133 = vld [vmem:[%s0 + $0x180] sm:$0xf]
    %v134 = vld [vmem:[%s0 + $0x184] sm:$0xf]
    %v135 = vld [vmem:[%s0 + $0x188] sm:$0xf]
    %v136 = vld [vmem:[%s0 + $0x18c] sm:$0xf]
    %v137 = vld [vmem:[%s0 + $0x190] sm:$0xf]
    %v138 = vld [vmem:[%s0 + $0x194] sm:$0xf]
    %v139 = vld [vmem:[%s0 + $0x198] sm:$0xf]
    %v140 = vld [vmem:[%s0 + $0x19c] sm:$0xf]
    %v141 = vld [vmem:[%s0 + $0x1a0] sm:$0xf]
    %v142 = vld [vmem:[%s0 + $0x1a4] sm:$0xf]
    %v143 = vld [vmem:[%s0 + $0x1a8] sm:$0xf]
    %v144 = vld [vmem:[%s0 + $0x1ac] sm:$0xf]
    %v145 = vld [vmem:[%s0 + $0x1b0] sm:$0xf]
    %v146 = vld [vmem:[%s0 + $0x1b4] sm:$0xf]
    %v147 = vld [vmem:[%s0 + $0x1b8] sm:$0xf]
    %v148 = vld [vmem:[%s0 + $0x1bc] sm:$0xf]
    %v149 = vld [vmem:[%s0 + $0x1c0] sm:$0xf]
    %v150 = vld [vmem:[%s0 + $0x1c4] sm:$0xf]
    %v151 = vld [vmem:[%s0 + $0x1c8] sm:$0xf]
    %v152 = vld [vmem:[%s0 + $0x1cc] sm:$0xf]
    %v153 = vld [vmem:[%s0 + $0x1d0] sm:$0xf]
    %v154 = vld [vmem:[%s0 + $0x1d4] sm:$0xf]
    %v155 = vld [vmem:[%s0 + $0x1d8] sm:$0xf]
    %v156 = vld [vmem:[%s0 + $0x1dc] sm:$0xf]
    %v157 = vld [vmem:[%s0 + $0x1e0] sm:$0xf]
    %v158 = vld [vmem:[%s0 + $0x1e4] sm:$0xf]
    %v159 = vld [vmem:[%s0 + $0x1e8] sm:$0xf]
    %v160 = vld [vmem:[%s0 + $0x1ec] sm:$0xf]
    %v161 = vld [vmem:[%s0 + $0x1f0] sm:$0xf]
    %v162 = vld [vmem:[%s0 + $0x1f4] sm:$0xf]
    %v163 = vld [vmem:[%s0 + $0x1f8] sm:$0xf]
    %v164 = vld [vmem:[%s0 + $0x1fc] sm:$0xf]
    %v165 = vld [vmem:[%s0 + $0x200] sm:$0xf]
    %v166 = vld [vmem:[%s0 + $0x204] sm:$0xf]
    %v167 = vld [vmem:[%s0 + $0x208] sm:$0xf]
    %v168 = vld [vmem:[%s0 + $0x20c] sm:$0xf]
    %v169 = vld [vmem:[%s0 + $0x210] sm:$0xf]
    %v170 = vld [vmem:[%s0 + $0x214] sm:$0xf]
    %v171 = vld [vmem:[%s0 + $0x218] sm:$0xf]
    %v172 = vld [vmem:[%s0 + $0x21c] sm:$0xf]
    %v173 = vld [vmem:[%s0 + $0x220] sm:$0xf]
    %v174 = vld [vmem:[%s0 + $0x224] sm:$0xf]
    %v175 = vld [vmem:[%s0 + $0x228] sm:$0xf]
    %v176 = vld [vmem:[%s0 + $0x22c] sm:$0xf]
    %v177 = vld [vmem:[%s0 + $0x230] sm:$0xf]
    %v178 = vld [vmem:[%s0 + $0x234] sm:$0xf]
    %v179 = vld [vmem:[%s0 + $0x238] sm:$0xf]
    %v180 = vld [vmem:[%s0 + $0x23c] sm:$0xf]
    %v181 = vld [vmem:[%s0 + $0x240] sm:$0xf]
    %v182 = vld [vmem:[%s0 + $0x244] sm:$0xf]
    %v183 = vld [vmem:[%s0 + $0x248] sm:$0xf]
    %v184 = vld [vmem:[%s0 + $0x24c] sm:$0xf]
    %v185 = vld [vmem:[%s0 + $0x250] sm:$0xf]
    %v186 = vld [vmem:[%s0 + $0x254] sm:$0xf]
    %v187 = vld [vmem:[%s0 + $0x258] sm:$0xf]
    %v188 = vld [vmem:[%s0 + $0x25c] sm:$0xf]
    %v189 = vld [vmem:[%s0 + $0x260] sm:$0xf]
    %v190 = vld [vmem:[%s0 + $0x264] sm:$0xf]
    %v191 = vld [vmem:[%s0 + $0x268] sm:$0xf]
    %v192 = vld [vmem:[%s0 + $0x26c] sm:$0xf]
    %v193 = vld [vmem:[%s0 + $0x270] sm:$0xf]
    %v194 = vld [vmem:[%s0 + $0x274] sm:$0xf]
    %v195 = vld [vmem:[%s0 + $0x278] sm:$0xf]
    %v196 = vld [vmem:[%s0 + $0x27c] sm:$0xf]
    %v197 = vld [vmem:[%s0 + $0x280] sm:$0xf]
    %v198 = vld [vmem:[%s0 + $0x284] sm:$0xf]
    %v199 = vld [vmem:[%s0 + $0x288] sm:$0xf]
    %v200 = vld [vmem:[%s0 + $0x28c] sm:$0xf]
    %v201 = vld [vmem:[%s0 + $0x290] sm:$0xf]
    %v202 = vld [vmem:[%s0 + $0x294] sm:$0xf]
    %v203 = vld [vmem:[%s0 + $0x298] sm:$0xf]
    %v204 = vld [vmem:[%s0 + $0x29c] sm:$0xf]
    %v205 = vld [vmem:[%s0 + $0x2a0] sm:$0xf]
    %v206 = vld [vmem:[%s0 + $0x2a4] sm:$0xf]
    %v207 = vld [vmem:[%s0 + $0x2a8] sm:$0xf]
    %v208 = vld [vmem:[%s0 + $0x2ac] sm:$0xf]
    %v209 = vld [vmem:[%s0 + $0x2b0] sm:$0xf]
    %v210 = vld [vmem:[%s0 + $0x2b4] sm:$0xf]
    %v211 = vld [vmem:[%s0 + $0x2b8] sm:$0xf]
    %v212 = vld [vmem:[%s0 + $0x2bc] sm:$0xf]
    %v213 = vld [vmem:[%s0 + $0x2c0] sm:$0xf]
    %v214 = vld [vmem:[%s0 + $0x2c4] sm:$0xf]
    %v215 = vld [vmem:[%s0 + $0x2c8] sm:$0xf]
    %v216 = vld [vmem:[%s0 + $0x2cc] sm:$0xf]
    %v217 = vld [vmem:[%s0 + $0x2d0] sm:$0xf]
    %v218 = vld [vmem:[%s0 + $0x2d4] sm:$0xf]
    %v219 = vld [vmem:[%s0 + $0x2d8] sm:$0xf]
    %v220 = vld [vmem:[%s0 + $0x2dc] sm:$0xf]
    %v221 = vld [vmem:[%s0 + $0x2e0] sm:$0xf]
    %v222 = vld [vmem:[%s0 + $0x2e4] sm:$0xf]
    %v223 = vld [vmem:[%s0 + $0x2e8] sm:$0xf]
    %v224 = vld [vmem:[%s0 + $0x2ec] sm:$0xf]
    %v225 = vld [vmem:[%s0 + $0x2f0] sm:$0xf]
    %v226 = vld [vmem:[%s0 + $0x2f4] sm:$0xf]
    %v227 = vld [vmem:[%s0 + $0x2f8] sm:$0xf]
    %v228 = vld [vmem:[%s0 + $0x2fc] sm:$0xf]
    %v229 = vld [vmem:[%s0 + $0x300] sm:$0xf]
    %v230 = vld [vmem:[%s0 + $0x304] sm:$0xf]
    %v231 = vld [vmem:[%s0 + $0x308] sm:$0xf]
    %v232 = vld [vmem:[%s0 + $0x30c] sm:$0xf]
    %v233 = vld [vmem:[%s0 + $0x310] sm:$0xf]
    %v234 = vld [vmem:[%s0 + $0x314] sm:$0xf]
    %v235 = vld [vmem:[%s0 + $0x318] sm:$0xf]
    %v236 = vld [vmem:[%s0 + $0x31c] sm:$0xf]
    %v237 = vld [vmem:[%s0 + $0x320] sm:$0xf]
    %v238 = vld [vmem:[%s0 + $0x324] sm:$0xf]
    %v239 = vld [vmem:[%s0 + $0x328] sm:$0xf]
    %v240 = vld [vmem:[%s0 + $0x32c] sm:$0xf]
    %v241 = vld [vmem:[%s0 + $0x330] sm:$0xf]
    %v242 = vld [vmem:[%s0 + $0x334] sm:$0xf]
    %v243 = vld [vmem:[%s0 + $0x338] sm:$0xf]
    %v244 = vld [vmem:[%s0 + $0x33c] sm:$0xf]
    %v245 = vld [vmem:[%s0 + $0x340] sm:$0xf]
    %v246 = vld [vmem:[%s0 + $0x344] sm:$0xf]
    %v247 = vld [vmem:[%s0 + $0x348] sm:$0xf]
    %v248 = vld [vmem:[%s0 + $0x34c] sm:$0xf]
    %v249 = vld [vmem:[%s0 + $0x350] sm:$0xf]
    %v250 = vld [vmem:[%s0 + $0x354] sm:$0xf]
    %v251 = vld [vmem:[%s0 + $0x358] sm:$0xf]
    %v252 = vld [vmem:[%s0 + $0x35c] sm:$0xf]
    %v253 = vld [vmem:[%s0 + $0x360] sm:$0xf]
    %v254 = vld [vmem:[%s0 + $0x364] sm:$0xf]
    %v255 = vld [vmem:[%s0 + $0x368] sm:$0xf]
    %v256 = vld [vmem:[%s0 + $0x36c] sm:$0xf]
    %v257 = vld [vmem:[%s0 + $0x370] sm:$0xf]
    %v258 = vld [vmem:[%s0 + $0x374] sm:$0xf]
    %v259 = vld [vmem:[%s0 + $0x378] sm:$0xf]
    %v260 = vld [vmem:[%s0 + $0x37c] sm:$0xf]
    %v261 = vld [vmem:[%s0 + $0x380] sm:$0xf]
    %v262 = vld [vmem:[%s0 + $0x384] sm:$0xf]
    %v263 = vld [vmem:[%s0 + $0x388] sm:$0xf]
    %v264 = vld [vmem:[%s0 + $0x38c] sm:$0xf]
    %v265 = vld [vmem:[%s0 + $0x390] sm:$0xf]
    %v266 = vld [vmem:[%s0 + $0x394] sm:$0xf]
    %v267 = vld [vmem:[%s0 + $0x398] sm:$0xf]
    %v268 = vld [vmem:[%s0 + $0x39c] sm:$0xf]
    %v269 = vld [vmem:[%s0 + $0x3a0] sm:$0xf]
    %v270 = vld [vmem:[%s0 + $0x3a4] sm:$0xf]
    %v271 = vld [vmem:[%s0 + $0x3a8] sm:$0xf]
    %v272 = vld [vmem:[%s0 + $0x3ac] sm:$0xf]
    %v273 = vld [vmem:[%s0 + $0x3b0] sm:$0xf]
    %v274 = vld [vmem:[%s0 + $0x3b4] sm:$0xf]
    %v275 = vld [vmem:[%s0 + $0x3b8] sm:$0xf]
    %v276 = vld [vmem:[%s0 + $0x3bc] sm:$0xf]
    %v277 = vld [vmem:[%s0 + $0x3c0] sm:$0xf]
    %v278 = vld [vmem:[%s0 + $0x3c4] sm:$0xf]
    %v279 = vld [vmem:[%s0 + $0x3c8] sm:$0xf]
    %v280 = vld [vmem:[%s0 + $0x3cc] sm:$0xf]
    %v281 = vld [vmem:[%s0 + $0x3d0] sm:$0xf]
    %v282 = vld [vmem:[%s0 + $0x3d4] sm:$0xf]
    %v283 = vld [vmem:[%s0 + $0x3d8] sm:$0xf]
    %v284 = vld [vmem:[%s0 + $0x3dc] sm:$0xf]
    %v285 = vld [vmem:[%s0 + $0x3e0] sm:$0xf]
    %v286 = vld [vmem:[%s0 + $0x3e4] sm:$0xf]
    %v287 = vld [vmem:[%s0 + $0x3e8] sm:$0xf]
    %v288 = vld [vmem:[%s0 + $0x3ec] sm:$0xf]
    %v289 = vld [vmem:[%s0 + $0x3f0] sm:$0xf]
    %v290 = vld [vmem:[%s0 + $0x3f4] sm:$0xf]
    %v291 = vld [vmem:[%s0 + $0x3f8] sm:$0xf]
    %v292 = vld [vmem:[%s0 + $0x3fc] sm:$0xf]
    %v293 = vld [vmem:[%s1] sm:$0xff]
    %v294 = vld [vmem:[%s2] sm:$0x3]
    %v296 = vlaneseq
    %v297 = vshrl.u32 %v296, 7
    %v298 = vsub.s32 0, %v297
    %v299 = vrot.slane %v294, %v298
    %v300 = vlaneseq
    %v301 = vshrl.u32 %v300, 7
    %v302 = vsub.s32 1, %v301
    %v303 = vrot.slane %v294, %v302
    %v562 = vunpack.c.l.b16 %v37
    %v563 = vunpack.c.l.b16 %v38
    %v564 = vunpack.c.l.b16 %v39
    %v565 = vunpack.c.l.b16 %v40
    %v566 = vunpack.c.l.b16 %v41
    %v567 = vunpack.c.l.b16 %v42
    %v568 = vunpack.c.l.b16 %v43
    %v569 = vunpack.c.l.b16 %v44
    %v570 = vunpack.c.l.b16 %v45
    %v571 = vunpack.c.l.b16 %v46
    %v572 = vunpack.c.l.b16 %v47
    %v573 = vunpack.c.l.b16 %v48
    %v574 = vunpack.c.l.b16 %v49
    %v575 = vunpack.c.l.b16 %v50
    %v576 = vunpack.c.l.b16 %v51
    %v577 = vunpack.c.l.b16 %v52
    %v578 = vunpack.c.l.b16 %v53
    %v579 = vunpack.c.l.b16 %v54
    %v580 = vunpack.c.l.b16 %v55
    %v581 = vunpack.c.l.b16 %v56
    %v582 = vunpack.c.l.b16 %v57
    %v583 = vunpack.c.l.b16 %v58
    %v584 = vunpack.c.l.b16 %v59
    %v585 = vunpack.c.l.b16 %v60
    %v586 = vunpack.c.l.b16 %v61
    %v587 = vunpack.c.l.b16 %v62
    %v588 = vunpack.c.l.b16 %v63
    %v589 = vunpack.c.l.b16 %v64
    %v590 = vunpack.c.l.b16 %v65
    %v591 = vunpack.c.l.b16 %v66
    %v592 = vunpack.c.l.b16 %v67
    %v593 = vunpack.c.l.b16 %v68
    %v594 = vunpack.c.l.b16 %v69
    %v595 = vunpack.c.l.b16 %v70
    %v596 = vunpack.c.l.b16 %v71
    %v597 = vunpack.c.l.b16 %v72
    %v598 = vunpack.c.l.b16 %v73
    %v599 = vunpack.c.l.b16 %v74
    %v600 = vunpack.c.l.b16 %v75
    %v601 = vunpack.c.l.b16 %v76
    %v602 = vunpack.c.l.b16 %v77
    %v603 = vunpack.c.l.b16 %v78
    %v604 = vunpack.c.l.b16 %v79
    %v605 = vunpack.c.l.b16 %v80
    %v606 = vunpack.c.l.b16 %v81
    %v607 = vunpack.c.l.b16 %v82
    %v608 = vunpack.c.l.b16 %v83
    %v609 = vunpack.c.l.b16 %v84
    %v610 = vunpack.c.l.b16 %v85
    %v611 = vunpack.c.l.b16 %v86
    %v612 = vunpack.c.l.b16 %v87
    %v613 = vunpack.c.l.b16 %v88
    %v614 = vunpack.c.l.b16 %v89
    %v615 = vunpack.c.l.b16 %v90
    %v616 = vunpack.c.l.b16 %v91
    %v617 = vunpack.c.l.b16 %v92
    %v618 = vunpack.c.l.b16 %v93
    %v619 = vunpack.c.l.b16 %v94
    %v620 = vunpack.c.l.b16 %v95
    %v621 = vunpack.c.l.b16 %v96
    %v622 = vunpack.c.l.b16 %v97
    %v623 = vunpack.c.l.b16 %v98
    %v624 = vunpack.c.l.b16 %v99
    %v625 = vunpack.c.l.b16 %v100
    %v626 = vunpack.c.l.b16 %v101
    %v627 = vunpack.c.l.b16 %v102
    %v628 = vunpack.c.l.b16 %v103
    %v629 = vunpack.c.l.b16 %v104
    %v630 = vunpack.c.l.b16 %v105
    %v631 = vunpack.c.l.b16 %v106
    %v632 = vunpack.c.l.b16 %v107
    %v633 = vunpack.c.l.b16 %v108
    %v634 = vunpack.c.l.b16 %v109
    %v635 = vunpack.c.l.b16 %v110
    %v636 = vunpack.c.l.b16 %v111
    %v637 = vunpack.c.l.b16 %v112
    %v638 = vunpack.c.l.b16 %v113
    %v639 = vunpack.c.l.b16 %v114
    %v640 = vunpack.c.l.b16 %v115
    %v641 = vunpack.c.l.b16 %v116
    %v642 = vunpack.c.l.b16 %v117
    %v643 = vunpack.c.l.b16 %v118
    %v644 = vunpack.c.l.b16 %v119
    %v645 = vunpack.c.l.b16 %v120
    %v646 = vunpack.c.l.b16 %v121
    %v647 = vunpack.c.l.b16 %v122
    %v648 = vunpack.c.l.b16 %v123
    %v649 = vunpack.c.l.b16 %v124
    %v650 = vunpack.c.l.b16 %v125
    %v651 = vunpack.c.l.b16 %v126
    %v652 = vunpack.c.l.b16 %v127
    %v653 = vunpack.c.l.b16 %v128
    %v654 = vunpack.c.l.b16 %v129
    %v655 = vunpack.c.l.b16 %v130
    %v656 = vunpack.c.l.b16 %v131
    %v657 = vunpack.c.l.b16 %v132
    %v658 = vunpack.c.l.b16 %v133
    %v659 = vunpack.c.l.b16 %v134
    %v660 = vunpack.c.l.b16 %v135
    %v661 = vunpack.c.l.b16 %v136
    %v662 = vunpack.c.l.b16 %v137
    %v663 = vunpack.c.l.b16 %v138
    %v664 = vunpack.c.l.b16 %v139
    %v665 = vunpack.c.l.b16 %v140
    %v666 = vunpack.c.l.b16 %v141
    %v667 = vunpack.c.l.b16 %v142
    %v668 = vunpack.c.l.b16 %v143
    %v669 = vunpack.c.l.b16 %v144
    %v670 = vunpack.c.l.b16 %v145
    %v671 = vunpack.c.l.b16 %v146
    %v672 = vunpack.c.l.b16 %v147
    %v673 = vunpack.c.l.b16 %v148
    %v674 = vunpack.c.l.b16 %v149
    %v675 = vunpack.c.l.b16 %v150
    %v676 = vunpack.c.l.b16 %v151
    %v677 = vunpack.c.l.b16 %v152
    %v678 = vunpack.c.l.b16 %v153
    %v679 = vunpack.c.l.b16 %v154
    %v680 = vunpack.c.l.b16 %v155
    %v681 = vunpack.c.l.b16 %v156
    %v682 = vunpack.c.l.b16 %v157
    %v683 = vunpack.c.l.b16 %v158
    %v684 = vunpack.c.l.b16 %v159
    %v685 = vunpack.c.l.b16 %v160
    %v686 = vunpack.c.l.b16 %v161
    %v687 = vunpack.c.l.b16 %v162
    %v688 = vunpack.c.l.b16 %v163
    %v689 = vunpack.c.l.b16 %v164
    %v690 = vunpack.c.l.b16 %v165
    %v691 = vunpack.c.l.b16 %v166
    %v692 = vunpack.c.l.b16 %v167
    %v693 = vunpack.c.l.b16 %v168
    %v694 = vunpack.c.l.b16 %v169
    %v695 = vunpack.c.l.b16 %v170
    %v696 = vunpack.c.l.b16 %v171
    %v697 = vunpack.c.l.b16 %v172
    %v698 = vunpack.c.l.b16 %v173
    %v699 = vunpack.c.l.b16 %v174
    %v700 = vunpack.c.l.b16 %v175
    %v701 = vunpack.c.l.b16 %v176
    %v702 = vunpack.c.l.b16 %v177
    %v703 = vunpack.c.l.b16 %v178
    %v704 = vunpack.c.l.b16 %v179
    %v705 = vunpack.c.l.b16 %v180
    %v706 = vunpack.c.l.b16 %v181
    %v707 = vunpack.c.l.b16 %v182
    %v708 = vunpack.c.l.b16 %v183
    %v709 = vunpack.c.l.b16 %v184
    %v710 = vunpack.c.l.b16 %v185
    %v711 = vunpack.c.l.b16 %v186
    %v712 = vunpack.c.l.b16 %v187
    %v713 = vunpack.c.l.b16 %v188
    %v714 = vunpack.c.l.b16 %v189
    %v715 = vunpack.c.l.b16 %v190
    %v716 = vunpack.c.l.b16 %v191
    %v717 = vunpack.c.l.b16 %v192
    %v718 = vunpack.c.l.b16 %v193
    %v719 = vunpack.c.l.b16 %v194
    %v720 = vunpack.c.l.b16 %v195
    %v721 = vunpack.c.l.b16 %v196
    %v722 = vunpack.c.l.b16 %v197
    %v723 = vunpack.c.l.b16 %v198
    %v724 = vunpack.c.l.b16 %v199
    %v725 = vunpack.c.l.b16 %v200
    %v726 = vunpack.c.l.b16 %v201
    %v727 = vunpack.c.l.b16 %v202
    %v728 = vunpack.c.l.b16 %v203
    %v729 = vunpack.c.l.b16 %v204
    %v730 = vunpack.c.l.b16 %v205
    %v731 = vunpack.c.l.b16 %v206
    %v732 = vunpack.c.l.b16 %v207
    %v733 = vunpack.c.l.b16 %v208
    %v734 = vunpack.c.l.b16 %v209
    %v735 = vunpack.c.l.b16 %v210
    %v736 = vunpack.c.l.b16 %v211
    %v737 = vunpack.c.l.b16 %v212
    %v738 = vunpack.c.l.b16 %v213
    %v739 = vunpack.c.l.b16 %v214
    %v740 = vunpack.c.l.b16 %v215
    %v741 = vunpack.c.l.b16 %v216
    %v742 = vunpack.c.l.b16 %v217
    %v743 = vunpack.c.l.b16 %v218
    %v744 = vunpack.c.l.b16 %v219
    %v745 = vunpack.c.l.b16 %v220
    %v746 = vunpack.c.l.b16 %v221
    %v747 = vunpack.c.l.b16 %v222
    %v748 = vunpack.c.l.b16 %v223
    %v749 = vunpack.c.l.b16 %v224
    %v750 = vunpack.c.l.b16 %v225
    %v751 = vunpack.c.l.b16 %v226
    %v752 = vunpack.c.l.b16 %v227
    %v753 = vunpack.c.l.b16 %v228
    %v754 = vunpack.c.l.b16 %v229
    %v755 = vunpack.c.l.b16 %v230
    %v756 = vunpack.c.l.b16 %v231
    %v757 = vunpack.c.l.b16 %v232
    %v758 = vunpack.c.l.b16 %v233
    %v759 = vunpack.c.l.b16 %v234
    %v760 = vunpack.c.l.b16 %v235
    %v761 = vunpack.c.l.b16 %v236
    %v762 = vunpack.c.l.b16 %v237
    %v763 = vunpack.c.l.b16 %v238
    %v764 = vunpack.c.l.b16 %v239
    %v765 = vunpack.c.l.b16 %v240
    %v766 = vunpack.c.l.b16 %v241
    %v767 = vunpack.c.l.b16 %v242
    %v768 = vunpack.c.l.b16 %v243
    %v769 = vunpack.c.l.b16 %v244
    %v770 = vunpack.c.l.b16 %v245
    %v771 = vunpack.c.l.b16 %v246
    %v772 = vunpack.c.l.b16 %v247
    %v773 = vunpack.c.l.b16 %v248
    %v774 = vunpack.c.l.b16 %v249
    %v775 = vunpack.c.l.b16 %v250
    %v776 = vunpack.c.l.b16 %v251
    %v777 = vunpack.c.l.b16 %v252
    %v778 = vunpack.c.l.b16 %v253
    %v779 = vunpack.c.l.b16 %v254
    %v780 = vunpack.c.l.b16 %v255
    %v781 = vunpack.c.l.b16 %v256
    %v782 = vunpack.c.l.b16 %v257
    %v783 = vunpack.c.l.b16 %v258
    %v784 = vunpack.c.l.b16 %v259
    %v785 = vunpack.c.l.b16 %v260
    %v786 = vunpack.c.l.b16 %v261
    %v787 = vunpack.c.l.b16 %v262
    %v788 = vunpack.c.l.b16 %v263
    %v789 = vunpack.c.l.b16 %v264
    %v790 = vunpack.c.l.b16 %v265
    %v791 = vunpack.c.l.b16 %v266
    %v792 = vunpack.c.l.b16 %v267
    %v793 = vunpack.c.l.b16 %v268
    %v794 = vunpack.c.l.b16 %v269
    %v795 = vunpack.c.l.b16 %v270
    %v796 = vunpack.c.l.b16 %v271
    %v797 = vunpack.c.l.b16 %v272
    %v798 = vunpack.c.l.b16 %v273
    %v799 = vunpack.c.l.b16 %v274
    %v800 = vunpack.c.l.b16 %v275
    %v801 = vunpack.c.l.b16 %v276
    %v802 = vunpack.c.l.b16 %v277
    %v803 = vunpack.c.l.b16 %v278
    %v804 = vunpack.c.l.b16 %v279
    %v805 = vunpack.c.l.b16 %v280
    %v806 = vunpack.c.l.b16 %v281
    %v807 = vunpack.c.l.b16 %v282
    %v808 = vunpack.c.l.b16 %v283
    %v809 = vunpack.c.l.b16 %v284
    %v810 = vunpack.c.l.b16 %v285
    %v811 = vunpack.c.l.b16 %v286
    %v812 = vunpack.c.l.b16 %v287
    %v813 = vunpack.c.l.b16 %v288
    %v814 = vunpack.c.l.b16 %v289
    %v815 = vunpack.c.l.b16 %v290
    %v816 = vunpack.c.l.b16 %v291
    %v817 = vunpack.c.l.b16 %v292
    %v818 = vpack.c.b16 %v563, %v562
    %v819 = vpack.c.b16 %v565, %v564
    %v820 = vpack.c.b16 %v567, %v566
    %v821 = vpack.c.b16 %v569, %v568
    %v822 = vpack.c.b16 %v571, %v570
    %v823 = vpack.c.b16 %v573, %v572
    %v824 = vpack.c.b16 %v575, %v574
    %v825 = vpack.c.b16 %v577, %v576
    %v826 = vpack.c.b16 %v579, %v578
    %v827 = vpack.c.b16 %v581, %v580
    %v828 = vpack.c.b16 %v583, %v582
    %v829 = vpack.c.b16 %v585, %v584
    %v830 = vpack.c.b16 %v587, %v586
    %v831 = vpack.c.b16 %v589, %v588
    %v832 = vpack.c.b16 %v591, %v590
    %v833 = vpack.c.b16 %v593, %v592
    %v834 = vpack.c.b16 %v595, %v594
    %v835 = vpack.c.b16 %v597, %v596
    %v836 = vpack.c.b16 %v599, %v598
    %v837 = vpack.c.b16 %v601, %v600
    %v838 = vpack.c.b16 %v603, %v602
    %v839 = vpack.c.b16 %v605, %v604
    %v840 = vpack.c.b16 %v607, %v606
    %v841 = vpack.c.b16 %v609, %v608
    %v842 = vpack.c.b16 %v611, %v610
    %v843 = vpack.c.b16 %v613, %v612
    %v844 = vpack.c.b16 %v615, %v614
    %v845 = vpack.c.b16 %v617, %v616
    %v846 = vpack.c.b16 %v619, %v618
    %v847 = vpack.c.b16 %v621, %v620
    %v848 = vpack.c.b16 %v623, %v622
    %v849 = vpack.c.b16 %v625, %v624
    %v850 = vpack.c.b16 %v627, %v626
    %v851 = vpack.c.b16 %v629, %v628
    %v852 = vpack.c.b16 %v631, %v630
    %v853 = vpack.c.b16 %v633, %v632
    %v854 = vpack.c.b16 %v635, %v634
    %v855 = vpack.c.b16 %v637, %v636
    %v856 = vpack.c.b16 %v639, %v638
    %v857 = vpack.c.b16 %v641, %v640
    %v858 = vpack.c.b16 %v643, %v642
    %v859 = vpack.c.b16 %v645, %v644
    %v860 = vpack.c.b16 %v647, %v646
    %v861 = vpack.c.b16 %v649, %v648
    %v862 = vpack.c.b16 %v651, %v650
    %v863 = vpack.c.b16 %v653, %v652
    %v864 = vpack.c.b16 %v655, %v654
    %v865 = vpack.c.b16 %v657, %v656
    %v866 = vpack.c.b16 %v659, %v658
    %v867 = vpack.c.b16 %v661, %v660
    %v868 = vpack.c.b16 %v663, %v662
    %v869 = vpack.c.b16 %v665, %v664
    %v870 = vpack.c.b16 %v667, %v666
    %v871 = vpack.c.b16 %v669, %v668
    %v872 = vpack.c.b16 %v671, %v670
    %v873 = vpack.c.b16 %v673, %v672
    %v874 = vpack.c.b16 %v675, %v674
    %v875 = vpack.c.b16 %v677, %v676
    %v876 = vpack.c.b16 %v679, %v678
    %v877 = vpack.c.b16 %v681, %v680
    %v878 = vpack.c.b16 %v683, %v682
    %v879 = vpack.c.b16 %v685, %v684
    %v880 = vpack.c.b16 %v687, %v686
    %v881 = vpack.c.b16 %v689, %v688
    %v882 = vpack.c.b16 %v691, %v690
    %v883 = vpack.c.b16 %v693, %v692
    %v884 = vpack.c.b16 %v695, %v694
    %v885 = vpack.c.b16 %v697, %v696
    %v886 = vpack.c.b16 %v699, %v698
    %v887 = vpack.c.b16 %v701, %v700
    %v888 = vpack.c.b16 %v703, %v702
    %v889 = vpack.c.b16 %v705, %v704
    %v890 = vpack.c.b16 %v707, %v706
    %v891 = vpack.c.b16 %v709, %v708
    %v892 = vpack.c.b16 %v711, %v710
    %v893 = vpack.c.b16 %v713, %v712
    %v894 = vpack.c.b16 %v715, %v714
    %v895 = vpack.c.b16 %v717, %v716
    %v896 = vpack.c.b16 %v719, %v718
    %v897 = vpack.c.b16 %v721, %v720
    %v898 = vpack.c.b16 %v723, %v722
    %v899 = vpack.c.b16 %v725, %v724
    %v900 = vpack.c.b16 %v727, %v726
    %v901 = vpack.c.b16 %v729, %v728
    %v902 = vpack.c.b16 %v731, %v730
    %v903 = vpack.c.b16 %v733, %v732
    %v904 = vpack.c.b16 %v735, %v734
    %v905 = vpack.c.b16 %v737, %v736
    %v906 = vpack.c.b16 %v739, %v738
    %v907 = vpack.c.b16 %v741, %v740
    %v908 = vpack.c.b16 %v743, %v742
    %v909 = vpack.c.b16 %v745, %v744
    %v910 = vpack.c.b16 %v747, %v746
    %v911 = vpack.c.b16 %v749, %v748
    %v912 = vpack.c.b16 %v751, %v750
    %v913 = vpack.c.b16 %v753, %v752
    %v914 = vpack.c.b16 %v755, %v754
    %v915 = vpack.c.b16 %v757, %v756
    %v916 = vpack.c.b16 %v759, %v758
    %v917 = vpack.c.b16 %v761, %v760
    %v918 = vpack.c.b16 %v763, %v762
    %v919 = vpack.c.b16 %v765, %v764
    %v920 = vpack.c.b16 %v767, %v766
    %v921 = vpack.c.b16 %v769, %v768
    %v922 = vpack.c.b16 %v771, %v770
    %v923 = vpack.c.b16 %v773, %v772
    %v924 = vpack.c.b16 %v775, %v774
    %v925 = vpack.c.b16 %v777, %v776
    %v926 = vpack.c.b16 %v779, %v778
    %v927 = vpack.c.b16 %v781, %v780
    %v928 = vpack.c.b16 %v783, %v782
    %v929 = vpack.c.b16 %v785, %v784
    %v930 = vpack.c.b16 %v787, %v786
    %v931 = vpack.c.b16 %v789, %v788
    %v932 = vpack.c.b16 %v791, %v790
    %v933 = vpack.c.b16 %v793, %v792
    %v934 = vpack.c.b16 %v795, %v794
    %v935 = vpack.c.b16 %v797, %v796
    %v936 = vpack.c.b16 %v799, %v798
    %v937 = vpack.c.b16 %v801, %v800
    %v938 = vpack.c.b16 %v803, %v802
    %v939 = vpack.c.b16 %v805, %v804
    %v940 = vpack.c.b16 %v807, %v806
    %v941 = vpack.c.b16 %v809, %v808
    %v942 = vpack.c.b16 %v811, %v810
    %v943 = vpack.c.b16 %v813, %v812
    %v944 = vpack.c.b16 %v815, %v814
    %v945 = vpack.c.b16 %v817, %v816
    %v947 = vunpack.c.l.b16 %v293
    %v948 = vunpack.c.h.b16 %v293
    %v949 = vpack.c.b16 %v947, %v947
    %v950 = vpack.c.b16 %v948, %v948
    %vm951 = vcmask 64512
    %v953 = vsel %vm951, %v818, 0
    %v956 = vsel %vm951, %v819, 0
    %v959 = vsel %vm951, %v820, 0
    %v962 = vsel %vm951, %v821, 0
    %v965 = vsel %vm951, %v822, 0
    %v968 = vsel %vm951, %v823, 0
    %v971 = vsel %vm951, %v824, 0
    %v974 = vsel %vm951, %v825, 0
    %v977 = vsel %vm951, %v826, 0
    %v980 = vsel %vm951, %v827, 0
    %v983 = vsel %vm951, %v828, 0
    %v986 = vsel %vm951, %v829, 0
    %v989 = vsel %vm951, %v830, 0
    %v992 = vsel %vm951, %v831, 0
    %v995 = vsel %vm951, %v832, 0
    %v998 = vsel %vm951, %v833, 0
    %v1001 = vsel %vm951, %v834, 0
    %v1004 = vsel %vm951, %v835, 0
    %v1007 = vsel %vm951, %v836, 0
    %v1010 = vsel %vm951, %v837, 0
    %v1013 = vsel %vm951, %v838, 0
    %v1016 = vsel %vm951, %v839, 0
    %v1019 = vsel %vm951, %v840, 0
    %v1022 = vsel %vm951, %v841, 0
    %v1025 = vsel %vm951, %v842, 0
    %v1028 = vsel %vm951, %v843, 0
    %v1031 = vsel %vm951, %v844, 0
    %v1034 = vsel %vm951, %v845, 0
    %v1037 = vsel %vm951, %v846, 0
    %v1040 = vsel %vm951, %v847, 0
    %v1043 = vsel %vm951, %v848, 0
    %v1046 = vsel %vm951, %v849, 0
    %v1049 = vsel %vm951, %v850, 0
    %v1052 = vsel %vm951, %v851, 0
    %v1055 = vsel %vm951, %v852, 0
    %v1058 = vsel %vm951, %v853, 0
    %v1061 = vsel %vm951, %v854, 0
    %v1064 = vsel %vm951, %v855, 0
    %v1067 = vsel %vm951, %v856, 0
    %v1070 = vsel %vm951, %v857, 0
    %v1073 = vsel %vm951, %v858, 0
    %v1076 = vsel %vm951, %v859, 0
    %v1079 = vsel %vm951, %v860, 0
    %v1082 = vsel %vm951, %v861, 0
    %v1085 = vsel %vm951, %v862, 0
    %v1088 = vsel %vm951, %v863, 0
    %v1091 = vsel %vm951, %v864, 0
    %v1094 = vsel %vm951, %v865, 0
    %v1097 = vsel %vm951, %v866, 0
    %v1100 = vsel %vm951, %v867, 0
    %v1103 = vsel %vm951, %v868, 0
    %v1106 = vsel %vm951, %v869, 0
    %v1109 = vsel %vm951, %v870, 0
    %v1112 = vsel %vm951, %v871, 0
    %v1115 = vsel %vm951, %v872, 0
    %v1118 = vsel %vm951, %v873, 0
    %v1121 = vsel %vm951, %v874, 0
    %v1124 = vsel %vm951, %v875, 0
    %v1127 = vsel %vm951, %v876, 0
    %v1130 = vsel %vm951, %v877, 0
    %v1133 = vsel %vm951, %v878, 0
    %v1136 = vsel %vm951, %v879, 0
    %v1139 = vsel %vm951, %v880, 0
    %v1142 = vsel %vm951, %v881, 0
    %v1145 = vsel %vm951, %v882, 0
    %v1148 = vsel %vm951, %v883, 0
    %v1151 = vsel %vm951, %v884, 0
    %v1154 = vsel %vm951, %v885, 0
    %v1157 = vsel %vm951, %v886, 0
    %v1160 = vsel %vm951, %v887, 0
    %v1163 = vsel %vm951, %v888, 0
    %v1166 = vsel %vm951, %v889, 0
    %v1169 = vsel %vm951, %v890, 0
    %v1172 = vsel %vm951, %v891, 0
    %v1175 = vsel %vm951, %v892, 0
    %v1178 = vsel %vm951, %v893, 0
    %v1181 = vsel %vm951, %v894, 0
    %v1184 = vsel %vm951, %v895, 0
    %v1187 = vsel %vm951, %v896, 0
    %v1190 = vsel %vm951, %v897, 0
    %v1193 = vsel %vm951, %v898, 0
    %v1196 = vsel %vm951, %v899, 0
    %v1199 = vsel %vm951, %v900, 0
    %v1202 = vsel %vm951, %v901, 0
    %v1205 = vsel %vm951, %v902, 0
    %v1208 = vsel %vm951, %v903, 0
    %v1211 = vsel %vm951, %v904, 0
    %v1214 = vsel %vm951, %v905, 0
    %v1217 = vsel %vm951, %v906, 0
    %v1220 = vsel %vm951, %v907, 0
    %v1223 = vsel %vm951, %v908, 0
    %v1226 = vsel %vm951, %v909, 0
    %v1229 = vsel %vm951, %v910, 0
    %v1232 = vsel %vm951, %v911, 0
    %v1235 = vsel %vm951, %v912, 0
    %v1238 = vsel %vm951, %v913, 0
    %v1241 = vsel %vm951, %v914, 0
    %v1244 = vsel %vm951, %v915, 0
    %v1247 = vsel %vm951, %v916, 0
    %v1250 = vsel %vm951, %v917, 0
    %v1253 = vsel %vm951, %v918, 0
    %v1256 = vsel %vm951, %v919, 0
    %v1259 = vsel %vm951, %v920, 0
    %v1262 = vsel %vm951, %v921, 0
    %v1265 = vsel %vm951, %v922, 0
    %v1268 = vsel %vm951, %v923, 0
    %v1271 = vsel %vm951, %v924, 0
    %v1274 = vsel %vm951, %v925, 0
    %v1277 = vsel %vm951, %v926, 0
    %v1280 = vsel %vm951, %v927, 0
    %v1283 = vsel %vm951, %v928, 0
    %v1286 = vsel %vm951, %v929, 0
    %v1289 = vsel %vm951, %v930, 0
    %v1292 = vsel %vm951, %v931, 0
    %v1295 = vsel %vm951, %v932, 0
    %v1298 = vsel %vm951, %v933, 0
    %v1301 = vsel %vm951, %v934, 0
    %v1304 = vsel %vm951, %v935, 0
    %v1307 = vsel %vm951, %v936, 0
    %v1310 = vsel %vm951, %v937, 0
    %v1313 = vsel %vm951, %v938, 0
    %v1316 = vsel %vm951, %v939, 0
    %v1319 = vsel %vm951, %v940, 0
    %v1322 = vsel %vm951, %v941, 0
    %v1325 = vsel %vm951, %v942, 0
    %v1328 = vsel %vm951, %v943, 0
    %v1331 = vsel %vm951, %v944, 0
    %v1334 = vsel %vm951, %v945, 0
    %vm1336 = vcmask 1043456
    %v1338 = vsel %vm1336, %v949, 0
    %v1341 = vsel %vm1336, %v950, 0
    %1343 = vmatprep.subr.bf16.mxu0 %v1341
    %1344 = vmatpush1.bf16.msra.mxu0 %v1338
    %1345 = vmatprep.subr.bf16.mxu0 0
    %1346 = vmatpush1.bf16.msra.mxu0 0
    %1347 = vmatprep.subr.bf16.mxu0 0
    %1348 = vmatpush1.bf16.msra.mxu0 0
    %1349 = vmatprep.subr.bf16.mxu0 0
    %1350 = vmatpush1.bf16.msra.mxu0 0
    %1351 = vmatprep.subr.bf16.mxu0 0
    %1352 = vmatpush1.bf16.msra.mxu0 0
    %1353 = vmatprep.subr.bf16.mxu0 0
    %1354 = vmatpush1.bf16.msra.mxu0 0
    %1355 = vmatprep.subr.bf16.mxu0 0
    %1356 = vmatpush1.bf16.msra.mxu0 0
    %1357 = vmatprep.subr.bf16.mxu0 0
    %1358 = vmatpush1.bf16.msra.mxu0 0
    %1359 = vmatprep.subr.bf16.mxu0 0
    %1360 = vmatpush1.bf16.msra.mxu0 0
    %1361 = vmatprep.subr.bf16.mxu0 0
    %1362 = vmatpush1.bf16.msra.mxu0 0
    %1363 = vmatprep.subr.bf16.mxu0 0
    %1364 = vmatpush1.bf16.msra.mxu0 0
    %1365 = vmatprep.subr.bf16.mxu0 0
    %1366 = vmatpush1.bf16.msra.mxu0 0
    %1367 = vmatprep.subr.bf16.mxu0 0
    %1368 = vmatpush1.bf16.msra.mxu0 0
    %1369 = vmatprep.subr.bf16.mxu0 0
    %1370 = vmatpush1.bf16.msra.mxu0 0
    %1371 = vmatprep.subr.bf16.mxu0 0
    %1372 = vmatpush1.bf16.msra.mxu0 0
    %1373 = vmatprep.subr.bf16.mxu0 0
    %1374 = vmatpush1.bf16.msra.mxu0 0
    %1375 = vmatprep.mubr.bf16.mxu0 0
    %1376 = vmatmul.mubr.bf16.gmra.mrb[0].mxu0 %v953
    %v1377 = vpop.f32.mrb[0].mxu0
    %v1378 = vadd.f32 %v299, %v1377
    %v1379 = vpop.f32.mrb[0].mxu0
    %v1380 = vadd.f32 %v303, %v1379
    %v1381 = vpop.f32.mrb[0].mxu0
    %v1382 = vadd.f32 %v299, %v1381
    %v1383 = vpop.f32.mrb[0].mxu0
    %v1384 = vadd.f32 %v303, %v1383
    %1385 = vmatprep.mubr.bf16.mxu0 0
    %1386 = vmatmul.mubr.bf16.gmra.mrb[0].mxu0 %v956
    %v1387 = vpop.f32.mrb[0].mxu0
    %v1388 = vadd.f32 %v299, %v1387
    %v1389 = vpop.f32.mrb[0].mxu0
    %v1390 = vadd.f32 %v303, %v1389
    %v1391 = vpop.f32.mrb[0].mxu0
    %v1392 = vadd.f32 %v299, %v1391
    %v1393 = vpop.f32.mrb[0].mxu0
    %v1394 = vadd.f32 %v303, %v1393
    %1395 = vmatprep.mubr.bf16.mxu0 0
    %1396 = vmatmul.mubr.bf16.gmra.mrb[0].mxu0 %v959
    %v1397 = vpop.f32.mrb[0].mxu0
    %v1398 = vadd.f32 %v299, %v1397
    %v1399 = vpop.f32.mrb[0].mxu0
    %v1400 = vadd.f32 %v303, %v1399
    %v1401 = vpop.f32.mrb[0].mxu0
    %v1402 = vadd.f32 %v299, %v1401
    %v1403 = vpop.f32.mrb[0].mxu0
    %v1404 = vadd.f32 %v303, %v1403
    %1405 = vmatprep.mubr.bf16.mxu0 0
    %1406 = vmatmul.mubr.bf16.gmra.mrb[0].mxu0 %v962
    %v1407 = vpop.f32.mrb[0].mxu0
    %v1408 = vadd.f32 %v299, %v1407
    %v1409 = vpop.f32.mrb[0].mxu0
    %v1410 = vadd.f32 %v303, %v1409
    %v1411 = vpop.f32.mrb[0].mxu0
    %v1412 = vadd.f32 %v299, %v1411
    %v1413 = vpop.f32.mrb[0].mxu0
    %v1414 = vadd.f32 %v303, %v1413
    %1415 = vmatprep.mubr.bf16.mxu0 0
    %1416 = vmatmul.mubr.bf16.gmra.mrb[0].mxu0 %v965
    %v1417 = vpop.f32.mrb[0].mxu0
    %v1418 = vadd.f32 %v299, %v1417
    %v1419 = vpop.f32.mrb[0].mxu0
    %v1420 = vadd.f32 %v303, %v1419
    %v1421 = vpop.f32.mrb[0].mxu0
    %v1422 = vadd.f32 %v299, %v1421
    %v1423 = vpop.f32.mrb[0].mxu0
    %v1424 = vadd.f32 %v303, %v1423
    %1425 = vmatprep.mubr.bf16.mxu0 0
    %1426 = vmatmul.mubr.bf16.gmra.mrb[0].mxu0 %v968
    %v1427 = vpop.f32.mrb[0].mxu0
    %v1428 = vadd.f32 %v299, %v1427
    %v1429 = vpop.f32.mrb[0].mxu0
    %v1430 = vadd.f32 %v303, %v1429
    %v1431 = vpop.f32.mrb[0].mxu0
    %v1432 = vadd.f32 %v299, %v1431
    %v1433 = vpop.f32.mrb[0].mxu0
    %v1434 = vadd.f32 %v303, %v1433
    %1435 = vmatprep.mubr.bf16.mxu0 0
    %1436 = vmatmul.mubr.bf16.gmra.mrb[0].mxu0 %v971
    %v1437 = vpop.f32.mrb[0].mxu0
    %v1438 = vadd.f32 %v299, %v1437
    %v1439 = vpop.f32.mrb[0].mxu0
    %v1440 = vadd.f32 %v303, %v1439
    %v1441 = vpop.f32.mrb[0].mxu0
    %v1442 = vadd.f32 %v299, %v1441
    %v1443 = vpop.f32.mrb[0].mxu0
    %v1444 = vadd.f32 %v303, %v1443
    %1445 = vmatprep.mubr.bf16.mxu0 0
    %1446 = vmatmul.mubr.bf16.gmra.mrb[0].mxu0 %v974
    %v1447 = vpop.f32.mrb[0].mxu0
    %v1448 = vadd.f32 %v299, %v1447
    %v1449 = vpop.f32.mrb[0].mxu0
    %v1450 = vadd.f32 %v303, %v1449
    %v1451 = vpop.f32.mrb[0].mxu0
    %v1452 = vadd.f32 %v299, %v1451
    %v1453 = vpop.f32.mrb[0].mxu0
    %v1454 = vadd.f32 %v303, %v1453
    %1455 = vmatprep.mubr.bf16.mxu0 0
    %1456 = vmatmul.mubr.bf16.gmra.mrb[0].mxu0 %v977
    %v1457 = vpop.f32.mrb[0].mxu0
    %v1458 = vadd.f32 %v299, %v1457
    %v1459 = vpop.f32.mrb[0].mxu0
    %v1460 = vadd.f32 %v303, %v1459
    %v1461 = vpop.f32.mrb[0].mxu0
    %v1462 = vadd.f32 %v299, %v1461
    %v1463 = vpop.f32.mrb[0].mxu0
    %v1464 = vadd.f32 %v303, %v1463
    %1465 = vmatprep.mubr.bf16.mxu0 0
    %1466 = vmatmul.mubr.bf16.gmra.mrb[0].mxu0 %v980
    %v1467 = vpop.f32.mrb[0].mxu0
    %v1468 = vadd.f32 %v299, %v1467
    %v1469 = vpop.f32.mrb[0].mxu0
    %v1470 = vadd.f32 %v303, %v1469
    %v1471 = vpop.f32.mrb[0].mxu0
    %v1472 = vadd.f32 %v299, %v1471
    %v1473 = vpop.f32.mrb[0].mxu0
    %v1474 = vadd.f32 %v303, %v1473
    %1475 = vmatprep.mubr.bf16.mxu0 0
    %1476 = vmatmul.mubr.bf16.gmra.mrb[0].mxu0 %v983
    %v1477 = vpop.f32.mrb[0].mxu0
    %v1478 = vadd.f32 %v299, %v1477
    %v1479 = vpop.f32.mrb[0].mxu0
    %v1480 = vadd.f32 %v303, %v1479
    %v1481 = vpop.f32.mrb[0].mxu0
    %v1482 = vadd.f32 %v299, %v1481
    %v1483 = vpop.f32.mrb[0].mxu0
    %v1484 = vadd.f32 %v303, %v1483
    %1485 = vmatprep.mubr.bf16.mxu0 0
    %1486 = vmatmul.mubr.bf16.gmra.mrb[0].mxu0 %v986
    %v1487 = vpop.f32.mrb[0].mxu0
    %v1488 = vadd.f32 %v299, %v1487
    %v1489 = vpop.f32.mrb[0].mxu0
    %v1490 = vadd.f32 %v303, %v1489
    %v1491 = vpop.f32.mrb[0].mxu0
    %v1492 = vadd.f32 %v299, %v1491
    %v1493 = vpop.f32.mrb[0].mxu0
    %v1494 = vadd.f32 %v303, %v1493
    %1495 = vmatprep.mubr.bf16.mxu0 0
    %1496 = vmatmul.mubr.bf16.gmra.mrb[0].mxu0 %v989
    %v1497 = vpop.f32.mrb[0].mxu0
    %v1498 = vadd.f32 %v299, %v1497
    %v1499 = vpop.f32.mrb[0].mxu0
    %v1500 = vadd.f32 %v303, %v1499
    %v1501 = vpop.f32.mrb[0].mxu0
    %v1502 = vadd.f32 %v299, %v1501
    %v1503 = vpop.f32.mrb[0].mxu0
    %v1504 = vadd.f32 %v303, %v1503
    %1505 = vmatprep.mubr.bf16.mxu0 0
    %1506 = vmatmul.mubr.bf16.gmra.mrb[0].mxu0 %v992
    %v1507 = vpop.f32.mrb[0].mxu0
    %v1508 = vadd.f32 %v299, %v1507
    %v1509 = vpop.f32.mrb[0].mxu0
    %v1510 = vadd.f32 %v303, %v1509
    %v1511 = vpop.f32.mrb[0].mxu0
    %v1512 = vadd.f32 %v299, %v1511
    %v1513 = vpop.f32.mrb[0].mxu0
    %v1514 = vadd.f32 %v303, %v1513
    %1515 = vmatprep.mubr.bf16.mxu0 0
    %1516 = vmatmul.mubr.bf16.gmra.mrb[0].mxu0 %v995
    %v1517 = vpop.f32.mrb[0].mxu0
    %v1518 = vadd.f32 %v299, %v1517
    %v1519 = vpop.f32.mrb[0].mxu0
    %v1520 = vadd.f32 %v303, %v1519
    %v1521 = vpop.f32.mrb[0].mxu0
    %v1522 = vadd.f32 %v299, %v1521
    %v1523 = vpop.f32.mrb[0].mxu0
    %v1524 = vadd.f32 %v303, %v1523
    %1525 = vmatprep.mubr.bf16.mxu0 0
    %1526 = vmatmul.mubr.bf16.gmra.mrb[0].mxu0 %v998
    %v1527 = vpop.f32.mrb[0].mxu0
    %v1528 = vadd.f32 %v299, %v1527
    %v1529 = vpop.f32.mrb[0].mxu0
    %v1530 = vadd.f32 %v303, %v1529
    %v1531 = vpop.f32.mrb[0].mxu0
    %v1532 = vadd.f32 %v299, %v1531
    %v1533 = vpop.f32.mrb[0].mxu0
    %v1534 = vadd.f32 %v303, %v1533
    %1535 = vmatprep.mubr.bf16.mxu0 0
    %1536 = vmatmul.mubr.bf16.gmra.mrb[0].mxu0 %v1001
    %v1537 = vpop.f32.mrb[0].mxu0
    %v1538 = vadd.f32 %v299, %v1537
    %v1539 = vpop.f32.mrb[0].mxu0
    %v1540 = vadd.f32 %v303, %v1539
    %v1541 = vpop.f32.mrb[0].mxu0
    %v1542 = vadd.f32 %v299, %v1541
    %v1543 = vpop.f32.mrb[0].mxu0
    %v1544 = vadd.f32 %v303, %v1543
    %1545 = vmatprep.mubr.bf16.mxu0 0
    %1546 = vmatmul.mubr.bf16.gmra.mrb[0].mxu0 %v1004
    %v1547 = vpop.f32.mrb[0].mxu0
    %v1548 = vadd.f32 %v299, %v1547
    %v1549 = vpop.f32.mrb[0].mxu0
    %v1550 = vadd.f32 %v303, %v1549
    %v1551 = vpop.f32.mrb[0].mxu0
    %v1552 = vadd.f32 %v299, %v1551
    %v1553 = vpop.f32.mrb[0].mxu0
    %v1554 = vadd.f32 %v303, %v1553
    %1555 = vmatprep.mubr.bf16.mxu0 0
    %1556 = vmatmul.mubr.bf16.gmra.mrb[0].mxu0 %v1007
    %v1557 = vpop.f32.mrb[0].mxu0
    %v1558 = vadd.f32 %v299, %v1557
    %v1559 = vpop.f32.mrb[0].mxu0
    %v1560 = vadd.f32 %v303, %v1559
    %v1561 = vpop.f32.mrb[0].mxu0
    %v1562 = vadd.f32 %v299, %v1561
    %v1563 = vpop.f32.mrb[0].mxu0
    %v1564 = vadd.f32 %v303, %v1563
    %1565 = vmatprep.mubr.bf16.mxu0 0
    %1566 = vmatmul.mubr.bf16.gmra.mrb[0].mxu0 %v1010
    %v1567 = vpop.f32.mrb[0].mxu0
    %v1568 = vadd.f32 %v299, %v1567
    %v1569 = vpop.f32.mrb[0].mxu0
    %v1570 = vadd.f32 %v303, %v1569
    %v1571 = vpop.f32.mrb[0].mxu0
    %v1572 = vadd.f32 %v299, %v1571
    %v1573 = vpop.f32.mrb[0].mxu0
    %v1574 = vadd.f32 %v303, %v1573
    %1575 = vmatprep.mubr.bf16.mxu0 0
    %1576 = vmatmul.mubr.bf16.gmra.mrb[0].mxu0 %v1013
    %v1577 = vpop.f32.mrb[0].mxu0
    %v1578 = vadd.f32 %v299, %v1577
    %v1579 = vpop.f32.mrb[0].mxu0
    %v1580 = vadd.f32 %v303, %v1579
    %v1581 = vpop.f32.mrb[0].mxu0
    %v1582 = vadd.f32 %v299, %v1581
    %v1583 = vpop.f32.mrb[0].mxu0
    %v1584 = vadd.f32 %v303, %v1583
    %1585 = vmatprep.mubr.bf16.mxu0 0
    %1586 = vmatmul.mubr.bf16.gmra.mrb[0].mxu0 %v1016
    %v1587 = vpop.f32.mrb[0].mxu0
    %v1588 = vadd.f32 %v299, %v1587
    %v1589 = vpop.f32.mrb[0].mxu0
    %v1590 = vadd.f32 %v303, %v1589
    %v1591 = vpop.f32.mrb[0].mxu0
    %v1592 = vadd.f32 %v299, %v1591
    %v1593 = vpop.f32.mrb[0].mxu0
    %v1594 = vadd.f32 %v303, %v1593
    %1595 = vmatprep.mubr.bf16.mxu0 0
    %1596 = vmatmul.mubr.bf16.gmra.mrb[0].mxu0 %v1019
    %v1597 = vpop.f32.mrb[0].mxu0
    %v1598 = vadd.f32 %v299, %v1597
    %v1599 = vpop.f32.mrb[0].mxu0
    %v1600 = vadd.f32 %v303, %v1599
    %v1601 = vpop.f32.mrb[0].mxu0
    %v1602 = vadd.f32 %v299, %v1601
    %v1603 = vpop.f32.mrb[0].mxu0
    %v1604 = vadd.f32 %v303, %v1603
    %1605 = vmatprep.mubr.bf16.mxu0 0
    %1606 = vmatmul.mubr.bf16.gmra.mrb[0].mxu0 %v1022
    %v1607 = vpop.f32.mrb[0].mxu0
    %v1608 = vadd.f32 %v299, %v1607
    %v1609 = vpop.f32.mrb[0].mxu0
    %v1610 = vadd.f32 %v303, %v1609
    %v1611 = vpop.f32.mrb[0].mxu0
    %v1612 = vadd.f32 %v299, %v1611
    %v1613 = vpop.f32.mrb[0].mxu0
    %v1614 = vadd.f32 %v303, %v1613
    %1615 = vmatprep.mubr.bf16.mxu0 0
    %1616 = vmatmul.mubr.bf16.gmra.mrb[0].mxu0 %v1025
    %v1617 = vpop.f32.mrb[0].mxu0
    %v1618 = vadd.f32 %v299, %v1617
    %v1619 = vpop.f32.mrb[0].mxu0
    %v1620 = vadd.f32 %v303, %v1619
    %v1621 = vpop.f32.mrb[0].mxu0
    %v1622 = vadd.f32 %v299, %v1621
    %v1623 = vpop.f32.mrb[0].mxu0
    %v1624 = vadd.f32 %v303, %v1623
    %1625 = vmatprep.mubr.bf16.mxu0 0
    %1626 = vmatmul.mubr.bf16.gmra.mrb[0].mxu0 %v1028
    %v1627 = vpop.f32.mrb[0].mxu0
    %v1628 = vadd.f32 %v299, %v1627
    %v1629 = vpop.f32.mrb[0].mxu0
    %v1630 = vadd.f32 %v303, %v1629
    %v1631 = vpop.f32.mrb[0].mxu0
    %v1632 = vadd.f32 %v299, %v1631
    %v1633 = vpop.f32.mrb[0].mxu0
    %v1634 = vadd.f32 %v303, %v1633
    %1635 = vmatprep.mubr.bf16.mxu0 0
    %1636 = vmatmul.mubr.bf16.gmra.mrb[0].mxu0 %v1031
    %v1637 = vpop.f32.mrb[0].mxu0
    %v1638 = vadd.f32 %v299, %v1637
    %v1639 = vpop.f32.mrb[0].mxu0
    %v1640 = vadd.f32 %v303, %v1639
    %v1641 = vpop.f32.mrb[0].mxu0
    %v1642 = vadd.f32 %v299, %v1641
    %v1643 = vpop.f32.mrb[0].mxu0
    %v1644 = vadd.f32 %v303, %v1643
    %1645 = vmatprep.mubr.bf16.mxu0 0
    %1646 = vmatmul.mubr.bf16.gmra.mrb[0].mxu0 %v1034
    %v1647 = vpop.f32.mrb[0].mxu0
    %v1648 = vadd.f32 %v299, %v1647
    %v1649 = vpop.f32.mrb[0].mxu0
    %v1650 = vadd.f32 %v303, %v1649
    %v1651 = vpop.f32.mrb[0].mxu0
    %v1652 = vadd.f32 %v299, %v1651
    %v1653 = vpop.f32.mrb[0].mxu0
    %v1654 = vadd.f32 %v303, %v1653
    %1655 = vmatprep.mubr.bf16.mxu0 0
    %1656 = vmatmul.mubr.bf16.gmra.mrb[0].mxu0 %v1037
    %v1657 = vpop.f32.mrb[0].mxu0
    %v1658 = vadd.f32 %v299, %v1657
    %v1659 = vpop.f32.mrb[0].mxu0
    %v1660 = vadd.f32 %v303, %v1659
    %v1661 = vpop.f32.mrb[0].mxu0
    %v1662 = vadd.f32 %v299, %v1661
    %v1663 = vpop.f32.mrb[0].mxu0
    %v1664 = vadd.f32 %v303, %v1663
    %1665 = vmatprep.mubr.bf16.mxu0 0
    %1666 = vmatmul.mubr.bf16.gmra.mrb[0].mxu0 %v1040
    %v1667 = vpop.f32.mrb[0].mxu0
    %v1668 = vadd.f32 %v299, %v1667
    %v1669 = vpop.f32.mrb[0].mxu0
    %v1670 = vadd.f32 %v303, %v1669
    %v1671 = vpop.f32.mrb[0].mxu0
    %v1672 = vadd.f32 %v299, %v1671
    %v1673 = vpop.f32.mrb[0].mxu0
    %v1674 = vadd.f32 %v303, %v1673
    %1675 = vmatprep.mubr.bf16.mxu0 0
    %1676 = vmatmul.mubr.bf16.gmra.mrb[0].mxu0 %v1043
    %v1677 = vpop.f32.mrb[0].mxu0
    %v1678 = vadd.f32 %v299, %v1677
    %v1679 = vpop.f32.mrb[0].mxu0
    %v1680 = vadd.f32 %v303, %v1679
    %v1681 = vpop.f32.mrb[0].mxu0
    %v1682 = vadd.f32 %v299, %v1681
    %v1683 = vpop.f32.mrb[0].mxu0
    %v1684 = vadd.f32 %v303, %v1683
    %1685 = vmatprep.mubr.bf16.mxu0 0
    %1686 = vmatmul.mubr.bf16.gmra.mrb[0].mxu0 %v1046
    %v1687 = vpop.f32.mrb[0].mxu0
    %v1688 = vadd.f32 %v299, %v1687
    %v1689 = vpop.f32.mrb[0].mxu0
    %v1690 = vadd.f32 %v303, %v1689
    %v1691 = vpop.f32.mrb[0].mxu0
    %v1692 = vadd.f32 %v299, %v1691
    %v1693 = vpop.f32.mrb[0].mxu0
    %v1694 = vadd.f32 %v303, %v1693
    %1695 = vmatprep.mubr.bf16.mxu0 0
    %1696 = vmatmul.mubr.bf16.gmra.mrb[0].mxu0 %v1049
    %v1697 = vpop.f32.mrb[0].mxu0
    %v1698 = vadd.f32 %v299, %v1697
    %v1699 = vpop.f32.mrb[0].mxu0
    %v1700 = vadd.f32 %v303, %v1699
    %v1701 = vpop.f32.mrb[0].mxu0
    %v1702 = vadd.f32 %v299, %v1701
    %v1703 = vpop.f32.mrb[0].mxu0
    %v1704 = vadd.f32 %v303, %v1703
    %1705 = vmatprep.mubr.bf16.mxu0 0
    %1706 = vmatmul.mubr.bf16.gmra.mrb[0].mxu0 %v1052
    %v1707 = vpop.f32.mrb[0].mxu0
    %v1708 = vadd.f32 %v299, %v1707
    %v1709 = vpop.f32.mrb[0].mxu0
    %v1710 = vadd.f32 %v303, %v1709
    %v1711 = vpop.f32.mrb[0].mxu0
    %v1712 = vadd.f32 %v299, %v1711
    %v1713 = vpop.f32.mrb[0].mxu0
    %v1714 = vadd.f32 %v303, %v1713
    %1715 = vmatprep.mubr.bf16.mxu0 0
    %1716 = vmatmul.mubr.bf16.gmra.mrb[0].mxu0 %v1055
    %v1717 = vpop.f32.mrb[0].mxu0
    %v1718 = vadd.f32 %v299, %v1717
    %v1719 = vpop.f32.mrb[0].mxu0
    %v1720 = vadd.f32 %v303, %v1719
    %v1721 = vpop.f32.mrb[0].mxu0
    %v1722 = vadd.f32 %v299, %v1721
    %v1723 = vpop.f32.mrb[0].mxu0
    %v1724 = vadd.f32 %v303, %v1723
    %1725 = vmatprep.mubr.bf16.mxu0 0
    %1726 = vmatmul.mubr.bf16.gmra.mrb[0].mxu0 %v1058
    %v1727 = vpop.f32.mrb[0].mxu0
    %v1728 = vadd.f32 %v299, %v1727
    %v1729 = vpop.f32.mrb[0].mxu0
    %v1730 = vadd.f32 %v303, %v1729
    %v1731 = vpop.f32.mrb[0].mxu0
    %v1732 = vadd.f32 %v299, %v1731
    %v1733 = vpop.f32.mrb[0].mxu0
    %v1734 = vadd.f32 %v303, %v1733
    %1735 = vmatprep.mubr.bf16.mxu0 0
    %1736 = vmatmul.mubr.bf16.gmra.mrb[0].mxu0 %v1061
    %v1737 = vpop.f32.mrb[0].mxu0
    %v1738 = vadd.f32 %v299, %v1737
    %v1739 = vpop.f32.mrb[0].mxu0
    %v1740 = vadd.f32 %v303, %v1739
    %v1741 = vpop.f32.mrb[0].mxu0
    %v1742 = vadd.f32 %v299, %v1741
    %v1743 = vpop.f32.mrb[0].mxu0
    %v1744 = vadd.f32 %v303, %v1743
    %1745 = vmatprep.mubr.bf16.mxu0 0
    %1746 = vmatmul.mubr.bf16.gmra.mrb[0].mxu0 %v1064
    %v1747 = vpop.f32.mrb[0].mxu0
    %v1748 = vadd.f32 %v299, %v1747
    %v1749 = vpop.f32.mrb[0].mxu0
    %v1750 = vadd.f32 %v303, %v1749
    %v1751 = vpop.f32.mrb[0].mxu0
    %v1752 = vadd.f32 %v299, %v1751
    %v1753 = vpop.f32.mrb[0].mxu0
    %v1754 = vadd.f32 %v303, %v1753
    %1755 = vmatprep.mubr.bf16.mxu0 0
    %1756 = vmatmul.mubr.bf16.gmra.mrb[0].mxu0 %v1067
    %v1757 = vpop.f32.mrb[0].mxu0
    %v1758 = vadd.f32 %v299, %v1757
    %v1759 = vpop.f32.mrb[0].mxu0
    %v1760 = vadd.f32 %v303, %v1759
    %v1761 = vpop.f32.mrb[0].mxu0
    %v1762 = vadd.f32 %v299, %v1761
    %v1763 = vpop.f32.mrb[0].mxu0
    %v1764 = vadd.f32 %v303, %v1763
    %1765 = vmatprep.mubr.bf16.mxu0 0
    %1766 = vmatmul.mubr.bf16.gmra.mrb[0].mxu0 %v1070
    %v1767 = vpop.f32.mrb[0].mxu0
    %v1768 = vadd.f32 %v299, %v1767
    %v1769 = vpop.f32.mrb[0].mxu0
    %v1770 = vadd.f32 %v303, %v1769
    %v1771 = vpop.f32.mrb[0].mxu0
    %v1772 = vadd.f32 %v299, %v1771
    %v1773 = vpop.f32.mrb[0].mxu0
    %v1774 = vadd.f32 %v303, %v1773
    %1775 = vmatprep.mubr.bf16.mxu0 0
    %1776 = vmatmul.mubr.bf16.gmra.mrb[0].mxu0 %v1073
    %v1777 = vpop.f32.mrb[0].mxu0
    %v1778 = vadd.f32 %v299, %v1777
    %v1779 = vpop.f32.mrb[0].mxu0
    %v1780 = vadd.f32 %v303, %v1779
    %v1781 = vpop.f32.mrb[0].mxu0
    %v1782 = vadd.f32 %v299, %v1781
    %v1783 = vpop.f32.mrb[0].mxu0
    %v1784 = vadd.f32 %v303, %v1783
    %1785 = vmatprep.mubr.bf16.mxu0 0
    %1786 = vmatmul.mubr.bf16.gmra.mrb[0].mxu0 %v1076
    %v1787 = vpop.f32.mrb[0].mxu0
    %v1788 = vadd.f32 %v299, %v1787
    %v1789 = vpop.f32.mrb[0].mxu0
    %v1790 = vadd.f32 %v303, %v1789
    %v1791 = vpop.f32.mrb[0].mxu0
    %v1792 = vadd.f32 %v299, %v1791
    %v1793 = vpop.f32.mrb[0].mxu0
    %v1794 = vadd.f32 %v303, %v1793
    %1795 = vmatprep.mubr.bf16.mxu0 0
    %1796 = vmatmul.mubr.bf16.gmra.mrb[0].mxu0 %v1079
    %v1797 = vpop.f32.mrb[0].mxu0
    %v1798 = vadd.f32 %v299, %v1797
    %v1799 = vpop.f32.mrb[0].mxu0
    %v1800 = vadd.f32 %v303, %v1799
    %v1801 = vpop.f32.mrb[0].mxu0
    %v1802 = vadd.f32 %v299, %v1801
    %v1803 = vpop.f32.mrb[0].mxu0
    %v1804 = vadd.f32 %v303, %v1803
    %1805 = vmatprep.mubr.bf16.mxu0 0
    %1806 = vmatmul.mubr.bf16.gmra.mrb[0].mxu0 %v1082
    %v1807 = vpop.f32.mrb[0].mxu0
    %v1808 = vadd.f32 %v299, %v1807
    %v1809 = vpop.f32.mrb[0].mxu0
    %v1810 = vadd.f32 %v303, %v1809
    %v1811 = vpop.f32.mrb[0].mxu0
    %v1812 = vadd.f32 %v299, %v1811
    %v1813 = vpop.f32.mrb[0].mxu0
    %v1814 = vadd.f32 %v303, %v1813
    %1815 = vmatprep.mubr.bf16.mxu0 0
    %1816 = vmatmul.mubr.bf16.gmra.mrb[0].mxu0 %v1085
    %v1817 = vpop.f32.mrb[0].mxu0
    %v1818 = vadd.f32 %v299, %v1817
    %v1819 = vpop.f32.mrb[0].mxu0
    %v1820 = vadd.f32 %v303, %v1819
    %v1821 = vpop.f32.mrb[0].mxu0
    %v1822 = vadd.f32 %v299, %v1821
    %v1823 = vpop.f32.mrb[0].mxu0
    %v1824 = vadd.f32 %v303, %v1823
    %1825 = vmatprep.mubr.bf16.mxu0 0
    %1826 = vmatmul.mubr.bf16.gmra.mrb[0].mxu0 %v1088
    %v1827 = vpop.f32.mrb[0].mxu0
    %v1828 = vadd.f32 %v299, %v1827
    %v1829 = vpop.f32.mrb[0].mxu0
    %v1830 = vadd.f32 %v303, %v1829
    %v1831 = vpop.f32.mrb[0].mxu0
    %v1832 = vadd.f32 %v299, %v1831
    %v1833 = vpop.f32.mrb[0].mxu0
    %v1834 = vadd.f32 %v303, %v1833
    %1835 = vmatprep.mubr.bf16.mxu0 0
    %1836 = vmatmul.mubr.bf16.gmra.mrb[0].mxu0 %v1091
    %v1837 = vpop.f32.mrb[0].mxu0
    %v1838 = vadd.f32 %v299, %v1837
    %v1839 = vpop.f32.mrb[0].mxu0
    %v1840 = vadd.f32 %v303, %v1839
    %v1841 = vpop.f32.mrb[0].mxu0
    %v1842 = vadd.f32 %v299, %v1841
    %v1843 = vpop.f32.mrb[0].mxu0
    %v1844 = vadd.f32 %v303, %v1843
    %1845 = vmatprep.mubr.bf16.mxu0 0
    %1846 = vmatmul.mubr.bf16.gmra.mrb[0].mxu0 %v1094
    %v1847 = vpop.f32.mrb[0].mxu0
    %v1848 = vadd.f32 %v299, %v1847
    %v1849 = vpop.f32.mrb[0].mxu0
    %v1850 = vadd.f32 %v303, %v1849
    %v1851 = vpop.f32.mrb[0].mxu0
    %v1852 = vadd.f32 %v299, %v1851
    %v1853 = vpop.f32.mrb[0].mxu0
    %v1854 = vadd.f32 %v303, %v1853
    %1855 = vmatprep.mubr.bf16.mxu0 0
    %1856 = vmatmul.mubr.bf16.gmra.mrb[0].mxu0 %v1097
    %v1857 = vpop.f32.mrb[0].mxu0
    %v1858 = vadd.f32 %v299, %v1857
    %v1859 = vpop.f32.mrb[0].mxu0
    %v1860 = vadd.f32 %v303, %v1859
    %v1861 = vpop.f32.mrb[0].mxu0
    %v1862 = vadd.f32 %v299, %v1861
    %v1863 = vpop.f32.mrb[0].mxu0
    %v1864 = vadd.f32 %v303, %v1863
    %1865 = vmatprep.mubr.bf16.mxu0 0
    %1866 = vmatmul.mubr.bf16.gmra.mrb[0].mxu0 %v1100
    %v1867 = vpop.f32.mrb[0].mxu0
    %v1868 = vadd.f32 %v299, %v1867
    %v1869 = vpop.f32.mrb[0].mxu0
    %v1870 = vadd.f32 %v303, %v1869
    %v1871 = vpop.f32.mrb[0].mxu0
    %v1872 = vadd.f32 %v299, %v1871
    %v1873 = vpop.f32.mrb[0].mxu0
    %v1874 = vadd.f32 %v303, %v1873
    %1875 = vmatprep.mubr.bf16.mxu0 0
    %1876 = vmatmul.mubr.bf16.gmra.mrb[0].mxu0 %v1103
    %v1877 = vpop.f32.mrb[0].mxu0
    %v1878 = vadd.f32 %v299, %v1877
    %v1879 = vpop.f32.mrb[0].mxu0
    %v1880 = vadd.f32 %v303, %v1879
    %v1881 = vpop.f32.mrb[0].mxu0
    %v1882 = vadd.f32 %v299, %v1881
    %v1883 = vpop.f32.mrb[0].mxu0
    %v1884 = vadd.f32 %v303, %v1883
    %1885 = vmatprep.mubr.bf16.mxu0 0
    %1886 = vmatmul.mubr.bf16.gmra.mrb[0].mxu0 %v1106
    %v1887 = vpop.f32.mrb[0].mxu0
    %v1888 = vadd.f32 %v299, %v1887
    %v1889 = vpop.f32.mrb[0].mxu0
    %v1890 = vadd.f32 %v303, %v1889
    %v1891 = vpop.f32.mrb[0].mxu0
    %v1892 = vadd.f32 %v299, %v1891
    %v1893 = vpop.f32.mrb[0].mxu0
    %v1894 = vadd.f32 %v303, %v1893
    %1895 = vmatprep.mubr.bf16.mxu0 0
    %1896 = vmatmul.mubr.bf16.gmra.mrb[0].mxu0 %v1109
    %v1897 = vpop.f32.mrb[0].mxu0
    %v1898 = vadd.f32 %v299, %v1897
    %v1899 = vpop.f32.mrb[0].mxu0
    %v1900 = vadd.f32 %v303, %v1899
    %v1901 = vpop.f32.mrb[0].mxu0
    %v1902 = vadd.f32 %v299, %v1901
    %v1903 = vpop.f32.mrb[0].mxu0
    %v1904 = vadd.f32 %v303, %v1903
    %1905 = vmatprep.mubr.bf16.mxu0 0
    %1906 = vmatmul.mubr.bf16.gmra.mrb[0].mxu0 %v1112
    %v1907 = vpop.f32.mrb[0].mxu0
    %v1908 = vadd.f32 %v299, %v1907
    %v1909 = vpop.f32.mrb[0].mxu0
    %v1910 = vadd.f32 %v303, %v1909
    %v1911 = vpop.f32.mrb[0].mxu0
    %v1912 = vadd.f32 %v299, %v1911
    %v1913 = vpop.f32.mrb[0].mxu0
    %v1914 = vadd.f32 %v303, %v1913
    %1915 = vmatprep.mubr.bf16.mxu0 0
    %1916 = vmatmul.mubr.bf16.gmra.mrb[0].mxu0 %v1115
    %v1917 = vpop.f32.mrb[0].mxu0
    %v1918 = vadd.f32 %v299, %v1917
    %v1919 = vpop.f32.mrb[0].mxu0
    %v1920 = vadd.f32 %v303, %v1919
    %v1921 = vpop.f32.mrb[0].mxu0
    %v1922 = vadd.f32 %v299, %v1921
    %v1923 = vpop.f32.mrb[0].mxu0
    %v1924 = vadd.f32 %v303, %v1923
    %1925 = vmatprep.mubr.bf16.mxu0 0
    %1926 = vmatmul.mubr.bf16.gmra.mrb[0].mxu0 %v1118
    %v1927 = vpop.f32.mrb[0].mxu0
    %v1928 = vadd.f32 %v299, %v1927
    %v1929 = vpop.f32.mrb[0].mxu0
    %v1930 = vadd.f32 %v303, %v1929
    %v1931 = vpop.f32.mrb[0].mxu0
    %v1932 = vadd.f32 %v299, %v1931
    %v1933 = vpop.f32.mrb[0].mxu0
    %v1934 = vadd.f32 %v303, %v1933
    %1935 = vmatprep.mubr.bf16.mxu0 0
    %1936 = vmatmul.mubr.bf16.gmra.mrb[0].mxu0 %v1121
    %v1937 = vpop.f32.mrb[0].mxu0
    %v1938 = vadd.f32 %v299, %v1937
    %v1939 = vpop.f32.mrb[0].mxu0
    %v1940 = vadd.f32 %v303, %v1939
    %v1941 = vpop.f32.mrb[0].mxu0
    %v1942 = vadd.f32 %v299, %v1941
    %v1943 = vpop.f32.mrb[0].mxu0
    %v1944 = vadd.f32 %v303, %v1943
    %1945 = vmatprep.mubr.bf16.mxu0 0
    %1946 = vmatmul.mubr.bf16.gmra.mrb[0].mxu0 %v1124
    %v1947 = vpop.f32.mrb[0].mxu0
    %v1948 = vadd.f32 %v299, %v1947
    %v1949 = vpop.f32.mrb[0].mxu0
    %v1950 = vadd.f32 %v303, %v1949
    %v1951 = vpop.f32.mrb[0].mxu0
    %v1952 = vadd.f32 %v299, %v1951
    %v1953 = vpop.f32.mrb[0].mxu0
    %v1954 = vadd.f32 %v303, %v1953
    %1955 = vmatprep.mubr.bf16.mxu0 0
    %1956 = vmatmul.mubr.bf16.gmra.mrb[0].mxu0 %v1127
    %v1957 = vpop.f32.mrb[0].mxu0
    %v1958 = vadd.f32 %v299, %v1957
    %v1959 = vpop.f32.mrb[0].mxu0
    %v1960 = vadd.f32 %v303, %v1959
    %v1961 = vpop.f32.mrb[0].mxu0
    %v1962 = vadd.f32 %v299, %v1961
    %v1963 = vpop.f32.mrb[0].mxu0
    %v1964 = vadd.f32 %v303, %v1963
    %1965 = vmatprep.mubr.bf16.mxu0 0
    %1966 = vmatmul.mubr.bf16.gmra.mrb[0].mxu0 %v1130
    %v1967 = vpop.f32.mrb[0].mxu0
    %v1968 = vadd.f32 %v299, %v1967
    %v1969 = vpop.f32.mrb[0].mxu0
    %v1970 = vadd.f32 %v303, %v1969
    %v1971 = vpop.f32.mrb[0].mxu0
    %v1972 = vadd.f32 %v299, %v1971
    %v1973 = vpop.f32.mrb[0].mxu0
    %v1974 = vadd.f32 %v303, %v1973
    %1975 = vmatprep.mubr.bf16.mxu0 0
    %1976 = vmatmul.mubr.bf16.gmra.mrb[0].mxu0 %v1133
    %v1977 = vpop.f32.mrb[0].mxu0
    %v1978 = vadd.f32 %v299, %v1977
    %v1979 = vpop.f32.mrb[0].mxu0
    %v1980 = vadd.f32 %v303, %v1979
    %v1981 = vpop.f32.mrb[0].mxu0
    %v1982 = vadd.f32 %v299, %v1981
    %v1983 = vpop.f32.mrb[0].mxu0
    %v1984 = vadd.f32 %v303, %v1983
    %1985 = vmatprep.mubr.bf16.mxu0 0
    %1986 = vmatmul.mubr.bf16.gmra.mrb[0].mxu0 %v1136
    %v1987 = vpop.f32.mrb[0].mxu0
    %v1988 = vadd.f32 %v299, %v1987
    %v1989 = vpop.f32.mrb[0].mxu0
    %v1990 = vadd.f32 %v303, %v1989
    %v1991 = vpop.f32.mrb[0].mxu0
    %v1992 = vadd.f32 %v299, %v1991
    %v1993 = vpop.f32.mrb[0].mxu0
    %v1994 = vadd.f32 %v303, %v1993
    %1995 = vmatprep.mubr.bf16.mxu0 0
    %1996 = vmatmul.mubr.bf16.gmra.mrb[0].mxu0 %v1139
    %v1997 = vpop.f32.mrb[0].mxu0
    %v1998 = vadd.f32 %v299, %v1997
    %v1999 = vpop.f32.mrb[0].mxu0
    %v2000 = vadd.f32 %v303, %v1999
    %v2001 = vpop.f32.mrb[0].mxu0
    %v2002 = vadd.f32 %v299, %v2001
    %v2003 = vpop.f32.mrb[0].mxu0
    %v2004 = vadd.f32 %v303, %v2003
    %2005 = vmatprep.mubr.bf16.mxu0 0
    %2006 = vmatmul.mubr.bf16.gmra.mrb[0].mxu0 %v1142
    %v2007 = vpop.f32.mrb[0].mxu0
    %v2008 = vadd.f32 %v299, %v2007
    %v2009 = vpop.f32.mrb[0].mxu0
    %v2010 = vadd.f32 %v303, %v2009
    %v2011 = vpop.f32.mrb[0].mxu0
    %v2012 = vadd.f32 %v299, %v2011
    %v2013 = vpop.f32.mrb[0].mxu0
    %v2014 = vadd.f32 %v303, %v2013
    %2015 = vmatprep.mubr.bf16.mxu0 0
    %2016 = vmatmul.mubr.bf16.gmra.mrb[0].mxu0 %v1145
    %v2017 = vpop.f32.mrb[0].mxu0
    %v2018 = vadd.f32 %v299, %v2017
    %v2019 = vpop.f32.mrb[0].mxu0
    %v2020 = vadd.f32 %v303, %v2019
    %v2021 = vpop.f32.mrb[0].mxu0
    %v2022 = vadd.f32 %v299, %v2021
    %v2023 = vpop.f32.mrb[0].mxu0
    %v2024 = vadd.f32 %v303, %v2023
    %2025 = vmatprep.mubr.bf16.mxu0 0
    %2026 = vmatmul.mubr.bf16.gmra.mrb[0].mxu0 %v1148
    %v2027 = vpop.f32.mrb[0].mxu0
    %v2028 = vadd.f32 %v299, %v2027
    %v2029 = vpop.f32.mrb[0].mxu0
    %v2030 = vadd.f32 %v303, %v2029
    %v2031 = vpop.f32.mrb[0].mxu0
    %v2032 = vadd.f32 %v299, %v2031
    %v2033 = vpop.f32.mrb[0].mxu0
    %v2034 = vadd.f32 %v303, %v2033
    %2035 = vmatprep.mubr.bf16.mxu0 0
    %2036 = vmatmul.mubr.bf16.gmra.mrb[0].mxu0 %v1151
    %v2037 = vpop.f32.mrb[0].mxu0
    %v2038 = vadd.f32 %v299, %v2037
    %v2039 = vpop.f32.mrb[0].mxu0
    %v2040 = vadd.f32 %v303, %v2039
    %v2041 = vpop.f32.mrb[0].mxu0
    %v2042 = vadd.f32 %v299, %v2041
    %v2043 = vpop.f32.mrb[0].mxu0
    %v2044 = vadd.f32 %v303, %v2043
    %2045 = vmatprep.mubr.bf16.mxu0 0
    %2046 = vmatmul.mubr.bf16.gmra.mrb[0].mxu0 %v1154
    %v2047 = vpop.f32.mrb[0].mxu0
    %v2048 = vadd.f32 %v299, %v2047
    %v2049 = vpop.f32.mrb[0].mxu0
    %v2050 = vadd.f32 %v303, %v2049
    %v2051 = vpop.f32.mrb[0].mxu0
    %v2052 = vadd.f32 %v299, %v2051
    %v2053 = vpop.f32.mrb[0].mxu0
    %v2054 = vadd.f32 %v303, %v2053
    %2055 = vmatprep.mubr.bf16.mxu0 0
    %2056 = vmatmul.mubr.bf16.gmra.mrb[0].mxu0 %v1157
    %v2057 = vpop.f32.mrb[0].mxu0
    %v2058 = vadd.f32 %v299, %v2057
    %v2059 = vpop.f32.mrb[0].mxu0
    %v2060 = vadd.f32 %v303, %v2059
    %v2061 = vpop.f32.mrb[0].mxu0
    %v2062 = vadd.f32 %v299, %v2061
    %v2063 = vpop.f32.mrb[0].mxu0
    %v2064 = vadd.f32 %v303, %v2063
    %2065 = vmatprep.mubr.bf16.mxu0 0
    %2066 = vmatmul.mubr.bf16.gmra.mrb[0].mxu0 %v1160
    %v2067 = vpop.f32.mrb[0].mxu0
    %v2068 = vadd.f32 %v299, %v2067
    %v2069 = vpop.f32.mrb[0].mxu0
    %v2070 = vadd.f32 %v303, %v2069
    %v2071 = vpop.f32.mrb[0].mxu0
    %v2072 = vadd.f32 %v299, %v2071
    %v2073 = vpop.f32.mrb[0].mxu0
    %v2074 = vadd.f32 %v303, %v2073
    %2075 = vmatprep.mubr.bf16.mxu0 0
    %2076 = vmatmul.mubr.bf16.gmra.mrb[0].mxu0 %v1163
    %v2077 = vpop.f32.mrb[0].mxu0
    %v2078 = vadd.f32 %v299, %v2077
    %v2079 = vpop.f32.mrb[0].mxu0
    %v2080 = vadd.f32 %v303, %v2079
    %v2081 = vpop.f32.mrb[0].mxu0
    %v2082 = vadd.f32 %v299, %v2081
    %v2083 = vpop.f32.mrb[0].mxu0
    %v2084 = vadd.f32 %v303, %v2083
    %2085 = vmatprep.mubr.bf16.mxu0 0
    %2086 = vmatmul.mubr.bf16.gmra.mrb[0].mxu0 %v1166
    %v2087 = vpop.f32.mrb[0].mxu0
    %v2088 = vadd.f32 %v299, %v2087
    %v2089 = vpop.f32.mrb[0].mxu0
    %v2090 = vadd.f32 %v303, %v2089
    %v2091 = vpop.f32.mrb[0].mxu0
    %v2092 = vadd.f32 %v299, %v2091
    %v2093 = vpop.f32.mrb[0].mxu0
    %v2094 = vadd.f32 %v303, %v2093
    %2095 = vmatprep.mubr.bf16.mxu0 0
    %2096 = vmatmul.mubr.bf16.gmra.mrb[0].mxu0 %v1169
    %v2097 = vpop.f32.mrb[0].mxu0
    %v2098 = vadd.f32 %v299, %v2097
    %v2099 = vpop.f32.mrb[0].mxu0
    %v2100 = vadd.f32 %v303, %v2099
    %v2101 = vpop.f32.mrb[0].mxu0
    %v2102 = vadd.f32 %v299, %v2101
    %v2103 = vpop.f32.mrb[0].mxu0
    %v2104 = vadd.f32 %v303, %v2103
    %2105 = vmatprep.mubr.bf16.mxu0 0
    %2106 = vmatmul.mubr.bf16.gmra.mrb[0].mxu0 %v1172
    %v2107 = vpop.f32.mrb[0].mxu0
    %v2108 = vadd.f32 %v299, %v2107
    %v2109 = vpop.f32.mrb[0].mxu0
    %v2110 = vadd.f32 %v303, %v2109
    %v2111 = vpop.f32.mrb[0].mxu0
    %v2112 = vadd.f32 %v299, %v2111
    %v2113 = vpop.f32.mrb[0].mxu0
    %v2114 = vadd.f32 %v303, %v2113
    %2115 = vmatprep.mubr.bf16.mxu0 0
    %2116 = vmatmul.mubr.bf16.gmra.mrb[0].mxu0 %v1175
    %v2117 = vpop.f32.mrb[0].mxu0
    %v2118 = vadd.f32 %v299, %v2117
    %v2119 = vpop.f32.mrb[0].mxu0
    %v2120 = vadd.f32 %v303, %v2119
    %v2121 = vpop.f32.mrb[0].mxu0
    %v2122 = vadd.f32 %v299, %v2121
    %v2123 = vpop.f32.mrb[0].mxu0
    %v2124 = vadd.f32 %v303, %v2123
    %2125 = vmatprep.mubr.bf16.mxu0 0
    %2126 = vmatmul.mubr.bf16.gmra.mrb[0].mxu0 %v1178
    %v2127 = vpop.f32.mrb[0].mxu0
    %v2128 = vadd.f32 %v299, %v2127
    %v2129 = vpop.f32.mrb[0].mxu0
    %v2130 = vadd.f32 %v303, %v2129
    %v2131 = vpop.f32.mrb[0].mxu0
    %v2132 = vadd.f32 %v299, %v2131
    %v2133 = vpop.f32.mrb[0].mxu0
    %v2134 = vadd.f32 %v303, %v2133
    %2135 = vmatprep.mubr.bf16.mxu0 0
    %2136 = vmatmul.mubr.bf16.gmra.mrb[0].mxu0 %v1181
    %v2137 = vpop.f32.mrb[0].mxu0
    %v2138 = vadd.f32 %v299, %v2137
    %v2139 = vpop.f32.mrb[0].mxu0
    %v2140 = vadd.f32 %v303, %v2139
    %v2141 = vpop.f32.mrb[0].mxu0
    %v2142 = vadd.f32 %v299, %v2141
    %v2143 = vpop.f32.mrb[0].mxu0
    %v2144 = vadd.f32 %v303, %v2143
    %2145 = vmatprep.mubr.bf16.mxu0 0
    %2146 = vmatmul.mubr.bf16.gmra.mrb[0].mxu0 %v1184
    %v2147 = vpop.f32.mrb[0].mxu0
    %v2148 = vadd.f32 %v299, %v2147
    %v2149 = vpop.f32.mrb[0].mxu0
    %v2150 = vadd.f32 %v303, %v2149
    %v2151 = vpop.f32.mrb[0].mxu0
    %v2152 = vadd.f32 %v299, %v2151
    %v2153 = vpop.f32.mrb[0].mxu0
    %v2154 = vadd.f32 %v303, %v2153
    %2155 = vmatprep.mubr.bf16.mxu0 0
    %2156 = vmatmul.mubr.bf16.gmra.mrb[0].mxu0 %v1187
    %v2157 = vpop.f32.mrb[0].mxu0
    %v2158 = vadd.f32 %v299, %v2157
    %v2159 = vpop.f32.mrb[0].mxu0
    %v2160 = vadd.f32 %v303, %v2159
    %v2161 = vpop.f32.mrb[0].mxu0
    %v2162 = vadd.f32 %v299, %v2161
    %v2163 = vpop.f32.mrb[0].mxu0
    %v2164 = vadd.f32 %v303, %v2163
    %2165 = vmatprep.mubr.bf16.mxu0 0
    %2166 = vmatmul.mubr.bf16.gmra.mrb[0].mxu0 %v1190
    %v2167 = vpop.f32.mrb[0].mxu0
    %v2168 = vadd.f32 %v299, %v2167
    %v2169 = vpop.f32.mrb[0].mxu0
    %v2170 = vadd.f32 %v303, %v2169
    %v2171 = vpop.f32.mrb[0].mxu0
    %v2172 = vadd.f32 %v299, %v2171
    %v2173 = vpop.f32.mrb[0].mxu0
    %v2174 = vadd.f32 %v303, %v2173
    %2175 = vmatprep.mubr.bf16.mxu0 0
    %2176 = vmatmul.mubr.bf16.gmra.mrb[0].mxu0 %v1193
    %v2177 = vpop.f32.mrb[0].mxu0
    %v2178 = vadd.f32 %v299, %v2177
    %v2179 = vpop.f32.mrb[0].mxu0
    %v2180 = vadd.f32 %v303, %v2179
    %v2181 = vpop.f32.mrb[0].mxu0
    %v2182 = vadd.f32 %v299, %v2181
    %v2183 = vpop.f32.mrb[0].mxu0
    %v2184 = vadd.f32 %v303, %v2183
    %2185 = vmatprep.mubr.bf16.mxu0 0
    %2186 = vmatmul.mubr.bf16.gmra.mrb[0].mxu0 %v1196
    %v2187 = vpop.f32.mrb[0].mxu0
    %v2188 = vadd.f32 %v299, %v2187
    %v2189 = vpop.f32.mrb[0].mxu0
    %v2190 = vadd.f32 %v303, %v2189
    %v2191 = vpop.f32.mrb[0].mxu0
    %v2192 = vadd.f32 %v299, %v2191
    %v2193 = vpop.f32.mrb[0].mxu0
    %v2194 = vadd.f32 %v303, %v2193
    %2195 = vmatprep.mubr.bf16.mxu0 0
    %2196 = vmatmul.mubr.bf16.gmra.mrb[0].mxu0 %v1199
    %v2197 = vpop.f32.mrb[0].mxu0
    %v2198 = vadd.f32 %v299, %v2197
    %v2199 = vpop.f32.mrb[0].mxu0
    %v2200 = vadd.f32 %v303, %v2199
    %v2201 = vpop.f32.mrb[0].mxu0
    %v2202 = vadd.f32 %v299, %v2201
    %v2203 = vpop.f32.mrb[0].mxu0
    %v2204 = vadd.f32 %v303, %v2203
    %2205 = vmatprep.mubr.bf16.mxu0 0
    %2206 = vmatmul.mubr.bf16.gmra.mrb[0].mxu0 %v1202
    %v2207 = vpop.f32.mrb[0].mxu0
    %v2208 = vadd.f32 %v299, %v2207
    %v2209 = vpop.f32.mrb[0].mxu0
    %v2210 = vadd.f32 %v303, %v2209
    %v2211 = vpop.f32.mrb[0].mxu0
    %v2212 = vadd.f32 %v299, %v2211
    %v2213 = vpop.f32.mrb[0].mxu0
    %v2214 = vadd.f32 %v303, %v2213
    %2215 = vmatprep.mubr.bf16.mxu0 0
    %2216 = vmatmul.mubr.bf16.gmra.mrb[0].mxu0 %v1205
    %v2217 = vpop.f32.mrb[0].mxu0
    %v2218 = vadd.f32 %v299, %v2217
    %v2219 = vpop.f32.mrb[0].mxu0
    %v2220 = vadd.f32 %v303, %v2219
    %v2221 = vpop.f32.mrb[0].mxu0
    %v2222 = vadd.f32 %v299, %v2221
    %v2223 = vpop.f32.mrb[0].mxu0
    %v2224 = vadd.f32 %v303, %v2223
    %2225 = vmatprep.mubr.bf16.mxu0 0
    %2226 = vmatmul.mubr.bf16.gmra.mrb[0].mxu0 %v1208
    %v2227 = vpop.f32.mrb[0].mxu0
    %v2228 = vadd.f32 %v299, %v2227
    %v2229 = vpop.f32.mrb[0].mxu0
    %v2230 = vadd.f32 %v303, %v2229
    %v2231 = vpop.f32.mrb[0].mxu0
    %v2232 = vadd.f32 %v299, %v2231
    %v2233 = vpop.f32.mrb[0].mxu0
    %v2234 = vadd.f32 %v303, %v2233
    %2235 = vmatprep.mubr.bf16.mxu0 0
    %2236 = vmatmul.mubr.bf16.gmra.mrb[0].mxu0 %v1211
    %v2237 = vpop.f32.mrb[0].mxu0
    %v2238 = vadd.f32 %v299, %v2237
    %v2239 = vpop.f32.mrb[0].mxu0
    %v2240 = vadd.f32 %v303, %v2239
    %v2241 = vpop.f32.mrb[0].mxu0
    %v2242 = vadd.f32 %v299, %v2241
    %v2243 = vpop.f32.mrb[0].mxu0
    %v2244 = vadd.f32 %v303, %v2243
    %2245 = vmatprep.mubr.bf16.mxu0 0
    %2246 = vmatmul.mubr.bf16.gmra.mrb[0].mxu0 %v1214
    %v2247 = vpop.f32.mrb[0].mxu0
    %v2248 = vadd.f32 %v299, %v2247
    %v2249 = vpop.f32.mrb[0].mxu0
    %v2250 = vadd.f32 %v303, %v2249
    %v2251 = vpop.f32.mrb[0].mxu0
    %v2252 = vadd.f32 %v299, %v2251
    %v2253 = vpop.f32.mrb[0].mxu0
    %v2254 = vadd.f32 %v303, %v2253
    %2255 = vmatprep.mubr.bf16.mxu0 0
    %2256 = vmatmul.mubr.bf16.gmra.mrb[0].mxu0 %v1217
    %v2257 = vpop.f32.mrb[0].mxu0
    %v2258 = vadd.f32 %v299, %v2257
    %v2259 = vpop.f32.mrb[0].mxu0
    %v2260 = vadd.f32 %v303, %v2259
    %v2261 = vpop.f32.mrb[0].mxu0
    %v2262 = vadd.f32 %v299, %v2261
    %v2263 = vpop.f32.mrb[0].mxu0
    %v2264 = vadd.f32 %v303, %v2263
    %2265 = vmatprep.mubr.bf16.mxu0 0
    %2266 = vmatmul.mubr.bf16.gmra.mrb[0].mxu0 %v1220
    %v2267 = vpop.f32.mrb[0].mxu0
    %v2268 = vadd.f32 %v299, %v2267
    %v2269 = vpop.f32.mrb[0].mxu0
    %v2270 = vadd.f32 %v303, %v2269
    %v2271 = vpop.f32.mrb[0].mxu0
    %v2272 = vadd.f32 %v299, %v2271
    %v2273 = vpop.f32.mrb[0].mxu0
    %v2274 = vadd.f32 %v303, %v2273
    %2275 = vmatprep.mubr.bf16.mxu0 0
    %2276 = vmatmul.mubr.bf16.gmra.mrb[0].mxu0 %v1223
    %v2277 = vpop.f32.mrb[0].mxu0
    %v2278 = vadd.f32 %v299, %v2277
    %v2279 = vpop.f32.mrb[0].mxu0
    %v2280 = vadd.f32 %v303, %v2279
    %v2281 = vpop.f32.mrb[0].mxu0
    %v2282 = vadd.f32 %v299, %v2281
    %v2283 = vpop.f32.mrb[0].mxu0
    %v2284 = vadd.f32 %v303, %v2283
    %2285 = vmatprep.mubr.bf16.mxu0 0
    %2286 = vmatmul.mubr.bf16.gmra.mrb[0].mxu0 %v1226
    %v2287 = vpop.f32.mrb[0].mxu0
    %v2288 = vadd.f32 %v299, %v2287
    %v2289 = vpop.f32.mrb[0].mxu0
    %v2290 = vadd.f32 %v303, %v2289
    %v2291 = vpop.f32.mrb[0].mxu0
    %v2292 = vadd.f32 %v299, %v2291
    %v2293 = vpop.f32.mrb[0].mxu0
    %v2294 = vadd.f32 %v303, %v2293
    %2295 = vmatprep.mubr.bf16.mxu0 0
    %2296 = vmatmul.mubr.bf16.gmra.mrb[0].mxu0 %v1229
    %v2297 = vpop.f32.mrb[0].mxu0
    %v2298 = vadd.f32 %v299, %v2297
    %v2299 = vpop.f32.mrb[0].mxu0
    %v2300 = vadd.f32 %v303, %v2299
    %v2301 = vpop.f32.mrb[0].mxu0
    %v2302 = vadd.f32 %v299, %v2301
    %v2303 = vpop.f32.mrb[0].mxu0
    %v2304 = vadd.f32 %v303, %v2303
    %2305 = vmatprep.mubr.bf16.mxu0 0
    %2306 = vmatmul.mubr.bf16.gmra.mrb[0].mxu0 %v1232
    %v2307 = vpop.f32.mrb[0].mxu0
    %v2308 = vadd.f32 %v299, %v2307
    %v2309 = vpop.f32.mrb[0].mxu0
    %v2310 = vadd.f32 %v303, %v2309
    %v2311 = vpop.f32.mrb[0].mxu0
    %v2312 = vadd.f32 %v299, %v2311
    %v2313 = vpop.f32.mrb[0].mxu0
    %v2314 = vadd.f32 %v303, %v2313
    %2315 = vmatprep.mubr.bf16.mxu0 0
    %2316 = vmatmul.mubr.bf16.gmra.mrb[0].mxu0 %v1235
    %v2317 = vpop.f32.mrb[0].mxu0
    %v2318 = vadd.f32 %v299, %v2317
    %v2319 = vpop.f32.mrb[0].mxu0
    %v2320 = vadd.f32 %v303, %v2319
    %v2321 = vpop.f32.mrb[0].mxu0
    %v2322 = vadd.f32 %v299, %v2321
    %v2323 = vpop.f32.mrb[0].mxu0
    %v2324 = vadd.f32 %v303, %v2323
    %2325 = vmatprep.mubr.bf16.mxu0 0
    %2326 = vmatmul.mubr.bf16.gmra.mrb[0].mxu0 %v1238
    %v2327 = vpop.f32.mrb[0].mxu0
    %v2328 = vadd.f32 %v299, %v2327
    %v2329 = vpop.f32.mrb[0].mxu0
    %v2330 = vadd.f32 %v303, %v2329
    %v2331 = vpop.f32.mrb[0].mxu0
    %v2332 = vadd.f32 %v299, %v2331
    %v2333 = vpop.f32.mrb[0].mxu0
    %v2334 = vadd.f32 %v303, %v2333
    %2335 = vmatprep.mubr.bf16.mxu0 0
    %2336 = vmatmul.mubr.bf16.gmra.mrb[0].mxu0 %v1241
    %v2337 = vpop.f32.mrb[0].mxu0
    %v2338 = vadd.f32 %v299, %v2337
    %v2339 = vpop.f32.mrb[0].mxu0
    %v2340 = vadd.f32 %v303, %v2339
    %v2341 = vpop.f32.mrb[0].mxu0
    %v2342 = vadd.f32 %v299, %v2341
    %v2343 = vpop.f32.mrb[0].mxu0
    %v2344 = vadd.f32 %v303, %v2343
    %2345 = vmatprep.mubr.bf16.mxu0 0
    %2346 = vmatmul.mubr.bf16.gmra.mrb[0].mxu0 %v1244
    %v2347 = vpop.f32.mrb[0].mxu0
    %v2348 = vadd.f32 %v299, %v2347
    %v2349 = vpop.f32.mrb[0].mxu0
    %v2350 = vadd.f32 %v303, %v2349
    %v2351 = vpop.f32.mrb[0].mxu0
    %v2352 = vadd.f32 %v299, %v2351
    %v2353 = vpop.f32.mrb[0].mxu0
    %v2354 = vadd.f32 %v303, %v2353
    %2355 = vmatprep.mubr.bf16.mxu0 0
    %2356 = vmatmul.mubr.bf16.gmra.mrb[0].mxu0 %v1247
    %v2357 = vpop.f32.mrb[0].mxu0
    %v2358 = vadd.f32 %v299, %v2357
    %v2359 = vpop.f32.mrb[0].mxu0
    %v2360 = vadd.f32 %v303, %v2359
    %v2361 = vpop.f32.mrb[0].mxu0
    %v2362 = vadd.f32 %v299, %v2361
    %v2363 = vpop.f32.mrb[0].mxu0
    %v2364 = vadd.f32 %v303, %v2363
    %2365 = vmatprep.mubr.bf16.mxu0 0
    %2366 = vmatmul.mubr.bf16.gmra.mrb[0].mxu0 %v1250
    %v2367 = vpop.f32.mrb[0].mxu0
    %v2368 = vadd.f32 %v299, %v2367
    %v2369 = vpop.f32.mrb[0].mxu0
    %v2370 = vadd.f32 %v303, %v2369
    %v2371 = vpop.f32.mrb[0].mxu0
    %v2372 = vadd.f32 %v299, %v2371
    %v2373 = vpop.f32.mrb[0].mxu0
    %v2374 = vadd.f32 %v303, %v2373
    %2375 = vmatprep.mubr.bf16.mxu0 0
    %2376 = vmatmul.mubr.bf16.gmra.mrb[0].mxu0 %v1253
    %v2377 = vpop.f32.mrb[0].mxu0
    %v2378 = vadd.f32 %v299, %v2377
    %v2379 = vpop.f32.mrb[0].mxu0
    %v2380 = vadd.f32 %v303, %v2379
    %v2381 = vpop.f32.mrb[0].mxu0
    %v2382 = vadd.f32 %v299, %v2381
    %v2383 = vpop.f32.mrb[0].mxu0
    %v2384 = vadd.f32 %v303, %v2383
    %2385 = vmatprep.mubr.bf16.mxu0 0
    %2386 = vmatmul.mubr.bf16.gmra.mrb[0].mxu0 %v1256
    %v2387 = vpop.f32.mrb[0].mxu0
    %v2388 = vadd.f32 %v299, %v2387
    %v2389 = vpop.f32.mrb[0].mxu0
    %v2390 = vadd.f32 %v303, %v2389
    %v2391 = vpop.f32.mrb[0].mxu0
    %v2392 = vadd.f32 %v299, %v2391
    %v2393 = vpop.f32.mrb[0].mxu0
    %v2394 = vadd.f32 %v303, %v2393
    %2395 = vmatprep.mubr.bf16.mxu0 0
    %2396 = vmatmul.mubr.bf16.gmra.mrb[0].mxu0 %v1259
    %v2397 = vpop.f32.mrb[0].mxu0
    %v2398 = vadd.f32 %v299, %v2397
    %v2399 = vpop.f32.mrb[0].mxu0
    %v2400 = vadd.f32 %v303, %v2399
    %v2401 = vpop.f32.mrb[0].mxu0
    %v2402 = vadd.f32 %v299, %v2401
    %v2403 = vpop.f32.mrb[0].mxu0
    %v2404 = vadd.f32 %v303, %v2403
    %2405 = vmatprep.mubr.bf16.mxu0 0
    %2406 = vmatmul.mubr.bf16.gmra.mrb[0].mxu0 %v1262
    %v2407 = vpop.f32.mrb[0].mxu0
    %v2408 = vadd.f32 %v299, %v2407
    %v2409 = vpop.f32.mrb[0].mxu0
    %v2410 = vadd.f32 %v303, %v2409
    %v2411 = vpop.f32.mrb[0].mxu0
    %v2412 = vadd.f32 %v299, %v2411
    %v2413 = vpop.f32.mrb[0].mxu0
    %v2414 = vadd.f32 %v303, %v2413
    %2415 = vmatprep.mubr.bf16.mxu0 0
    %2416 = vmatmul.mubr.bf16.gmra.mrb[0].mxu0 %v1265
    %v2417 = vpop.f32.mrb[0].mxu0
    %v2418 = vadd.f32 %v299, %v2417
    %v2419 = vpop.f32.mrb[0].mxu0
    %v2420 = vadd.f32 %v303, %v2419
    %v2421 = vpop.f32.mrb[0].mxu0
    %v2422 = vadd.f32 %v299, %v2421
    %v2423 = vpop.f32.mrb[0].mxu0
    %v2424 = vadd.f32 %v303, %v2423
    %2425 = vmatprep.mubr.bf16.mxu0 0
    %2426 = vmatmul.mubr.bf16.gmra.mrb[0].mxu0 %v1268
    %v2427 = vpop.f32.mrb[0].mxu0
    %v2428 = vadd.f32 %v299, %v2427
    %v2429 = vpop.f32.mrb[0].mxu0
    %v2430 = vadd.f32 %v303, %v2429
    %v2431 = vpop.f32.mrb[0].mxu0
    %v2432 = vadd.f32 %v299, %v2431
    %v2433 = vpop.f32.mrb[0].mxu0
    %v2434 = vadd.f32 %v303, %v2433
    %2435 = vmatprep.mubr.bf16.mxu0 0
    %2436 = vmatmul.mubr.bf16.gmra.mrb[0].mxu0 %v1271
    %v2437 = vpop.f32.mrb[0].mxu0
    %v2438 = vadd.f32 %v299, %v2437
    %v2439 = vpop.f32.mrb[0].mxu0
    %v2440 = vadd.f32 %v303, %v2439
    %v2441 = vpop.f32.mrb[0].mxu0
    %v2442 = vadd.f32 %v299, %v2441
    %v2443 = vpop.f32.mrb[0].mxu0
    %v2444 = vadd.f32 %v303, %v2443
    %2445 = vmatprep.mubr.bf16.mxu0 0
    %2446 = vmatmul.mubr.bf16.gmra.mrb[0].mxu0 %v1274
    %v2447 = vpop.f32.mrb[0].mxu0
    %v2448 = vadd.f32 %v299, %v2447
    %v2449 = vpop.f32.mrb[0].mxu0
    %v2450 = vadd.f32 %v303, %v2449
    %v2451 = vpop.f32.mrb[0].mxu0
    %v2452 = vadd.f32 %v299, %v2451
    %v2453 = vpop.f32.mrb[0].mxu0
    %v2454 = vadd.f32 %v303, %v2453
    %2455 = vmatprep.mubr.bf16.mxu0 0
    %2456 = vmatmul.mubr.bf16.gmra.mrb[0].mxu0 %v1277
    %v2457 = vpop.f32.mrb[0].mxu0
    %v2458 = vadd.f32 %v299, %v2457
    %v2459 = vpop.f32.mrb[0].mxu0
    %v2460 = vadd.f32 %v303, %v2459
    %v2461 = vpop.f32.mrb[0].mxu0
    %v2462 = vadd.f32 %v299, %v2461
    %v2463 = vpop.f32.mrb[0].mxu0
    %v2464 = vadd.f32 %v303, %v2463
    %2465 = vmatprep.mubr.bf16.mxu0 0
    %2466 = vmatmul.mubr.bf16.gmra.mrb[0].mxu0 %v1280
    %v2467 = vpop.f32.mrb[0].mxu0
    %v2468 = vadd.f32 %v299, %v2467
    %v2469 = vpop.f32.mrb[0].mxu0
    %v2470 = vadd.f32 %v303, %v2469
    %v2471 = vpop.f32.mrb[0].mxu0
    %v2472 = vadd.f32 %v299, %v2471
    %v2473 = vpop.f32.mrb[0].mxu0
    %v2474 = vadd.f32 %v303, %v2473
    %2475 = vmatprep.mubr.bf16.mxu0 0
    %2476 = vmatmul.mubr.bf16.gmra.mrb[0].mxu0 %v1283
    %v2477 = vpop.f32.mrb[0].mxu0
    %v2478 = vadd.f32 %v299, %v2477
    %v2479 = vpop.f32.mrb[0].mxu0
    %v2480 = vadd.f32 %v303, %v2479
    %v2481 = vpop.f32.mrb[0].mxu0
    %v2482 = vadd.f32 %v299, %v2481
    %v2483 = vpop.f32.mrb[0].mxu0
    %v2484 = vadd.f32 %v303, %v2483
    %2485 = vmatprep.mubr.bf16.mxu0 0
    %2486 = vmatmul.mubr.bf16.gmra.mrb[0].mxu0 %v1286
    %v2487 = vpop.f32.mrb[0].mxu0
    %v2488 = vadd.f32 %v299, %v2487
    %v2489 = vpop.f32.mrb[0].mxu0
    %v2490 = vadd.f32 %v303, %v2489
    %v2491 = vpop.f32.mrb[0].mxu0
    %v2492 = vadd.f32 %v299, %v2491
    %v2493 = vpop.f32.mrb[0].mxu0
    %v2494 = vadd.f32 %v303, %v2493
    %2495 = vmatprep.mubr.bf16.mxu0 0
    %2496 = vmatmul.mubr.bf16.gmra.mrb[0].mxu0 %v1289
    %v2497 = vpop.f32.mrb[0].mxu0
    %v2498 = vadd.f32 %v299, %v2497
    %v2499 = vpop.f32.mrb[0].mxu0
    %v2500 = vadd.f32 %v303, %v2499
    %v2501 = vpop.f32.mrb[0].mxu0
    %v2502 = vadd.f32 %v299, %v2501
    %v2503 = vpop.f32.mrb[0].mxu0
    %v2504 = vadd.f32 %v303, %v2503
    %2505 = vmatprep.mubr.bf16.mxu0 0
    %2506 = vmatmul.mubr.bf16.gmra.mrb[0].mxu0 %v1292
    %v2507 = vpop.f32.mrb[0].mxu0
    %v2508 = vadd.f32 %v299, %v2507
    %v2509 = vpop.f32.mrb[0].mxu0
    %v2510 = vadd.f32 %v303, %v2509
    %v2511 = vpop.f32.mrb[0].mxu0
    %v2512 = vadd.f32 %v299, %v2511
    %v2513 = vpop.f32.mrb[0].mxu0
    %v2514 = vadd.f32 %v303, %v2513
    %2515 = vmatprep.mubr.bf16.mxu0 0
    %2516 = vmatmul.mubr.bf16.gmra.mrb[0].mxu0 %v1295
    %v2517 = vpop.f32.mrb[0].mxu0
    %v2518 = vadd.f32 %v299, %v2517
    %v2519 = vpop.f32.mrb[0].mxu0
    %v2520 = vadd.f32 %v303, %v2519
    %v2521 = vpop.f32.mrb[0].mxu0
    %v2522 = vadd.f32 %v299, %v2521
    %v2523 = vpop.f32.mrb[0].mxu0
    %v2524 = vadd.f32 %v303, %v2523
    %2525 = vmatprep.mubr.bf16.mxu0 0
    %2526 = vmatmul.mubr.bf16.gmra.mrb[0].mxu0 %v1298
    %v2527 = vpop.f32.mrb[0].mxu0
    %v2528 = vadd.f32 %v299, %v2527
    %v2529 = vpop.f32.mrb[0].mxu0
    %v2530 = vadd.f32 %v303, %v2529
    %v2531 = vpop.f32.mrb[0].mxu0
    %v2532 = vadd.f32 %v299, %v2531
    %v2533 = vpop.f32.mrb[0].mxu0
    %v2534 = vadd.f32 %v303, %v2533
    %2535 = vmatprep.mubr.bf16.mxu0 0
    %2536 = vmatmul.mubr.bf16.gmra.mrb[0].mxu0 %v1301
    %v2537 = vpop.f32.mrb[0].mxu0
    %v2538 = vadd.f32 %v299, %v2537
    %v2539 = vpop.f32.mrb[0].mxu0
    %v2540 = vadd.f32 %v303, %v2539
    %v2541 = vpop.f32.mrb[0].mxu0
    %v2542 = vadd.f32 %v299, %v2541
    %v2543 = vpop.f32.mrb[0].mxu0
    %v2544 = vadd.f32 %v303, %v2543
    %2545 = vmatprep.mubr.bf16.mxu0 0
    %2546 = vmatmul.mubr.bf16.gmra.mrb[0].mxu0 %v1304
    %v2547 = vpop.f32.mrb[0].mxu0
    %v2548 = vadd.f32 %v299, %v2547
    %v2549 = vpop.f32.mrb[0].mxu0
    %v2550 = vadd.f32 %v303, %v2549
    %v2551 = vpop.f32.mrb[0].mxu0
    %v2552 = vadd.f32 %v299, %v2551
    %v2553 = vpop.f32.mrb[0].mxu0
    %v2554 = vadd.f32 %v303, %v2553
    %2555 = vmatprep.mubr.bf16.mxu0 0
    %2556 = vmatmul.mubr.bf16.gmra.mrb[0].mxu0 %v1307
    %v2557 = vpop.f32.mrb[0].mxu0
    %v2558 = vadd.f32 %v299, %v2557
    %v2559 = vpop.f32.mrb[0].mxu0
    %v2560 = vadd.f32 %v303, %v2559
    %v2561 = vpop.f32.mrb[0].mxu0
    %v2562 = vadd.f32 %v299, %v2561
    %v2563 = vpop.f32.mrb[0].mxu0
    %v2564 = vadd.f32 %v303, %v2563
    %2565 = vmatprep.mubr.bf16.mxu0 0
    %2566 = vmatmul.mubr.bf16.gmra.mrb[0].mxu0 %v1310
    %v2567 = vpop.f32.mrb[0].mxu0
    %v2568 = vadd.f32 %v299, %v2567
    %v2569 = vpop.f32.mrb[0].mxu0
    %v2570 = vadd.f32 %v303, %v2569
    %v2571 = vpop.f32.mrb[0].mxu0
    %v2572 = vadd.f32 %v299, %v2571
    %v2573 = vpop.f32.mrb[0].mxu0
    %v2574 = vadd.f32 %v303, %v2573
    %2575 = vmatprep.mubr.bf16.mxu0 0
    %2576 = vmatmul.mubr.bf16.gmra.mrb[0].mxu0 %v1313
    %v2577 = vpop.f32.mrb[0].mxu0
    %v2578 = vadd.f32 %v299, %v2577
    %v2579 = vpop.f32.mrb[0].mxu0
    %v2580 = vadd.f32 %v303, %v2579
    %v2581 = vpop.f32.mrb[0].mxu0
    %v2582 = vadd.f32 %v299, %v2581
    %v2583 = vpop.f32.mrb[0].mxu0
    %v2584 = vadd.f32 %v303, %v2583
    %2585 = vmatprep.mubr.bf16.mxu0 0
    %2586 = vmatmul.mubr.bf16.gmra.mrb[0].mxu0 %v1316
    %v2587 = vpop.f32.mrb[0].mxu0
    %v2588 = vadd.f32 %v299, %v2587
    %v2589 = vpop.f32.mrb[0].mxu0
    %v2590 = vadd.f32 %v303, %v2589
    %v2591 = vpop.f32.mrb[0].mxu0
    %v2592 = vadd.f32 %v299, %v2591
    %v2593 = vpop.f32.mrb[0].mxu0
    %v2594 = vadd.f32 %v303, %v2593
    %2595 = vmatprep.mubr.bf16.mxu0 0
    %2596 = vmatmul.mubr.bf16.gmra.mrb[0].mxu0 %v1319
    %v2597 = vpop.f32.mrb[0].mxu0
    %v2598 = vadd.f32 %v299, %v2597
    %v2599 = vpop.f32.mrb[0].mxu0
    %v2600 = vadd.f32 %v303, %v2599
    %v2601 = vpop.f32.mrb[0].mxu0
    %v2602 = vadd.f32 %v299, %v2601
    %v2603 = vpop.f32.mrb[0].mxu0
    %v2604 = vadd.f32 %v303, %v2603
    %2605 = vmatprep.mubr.bf16.mxu0 0
    %2606 = vmatmul.mubr.bf16.gmra.mrb[0].mxu0 %v1322
    %v2607 = vpop.f32.mrb[0].mxu0
    %v2608 = vadd.f32 %v299, %v2607
    %v2609 = vpop.f32.mrb[0].mxu0
    %v2610 = vadd.f32 %v303, %v2609
    %v2611 = vpop.f32.mrb[0].mxu0
    %v2612 = vadd.f32 %v299, %v2611
    %v2613 = vpop.f32.mrb[0].mxu0
    %v2614 = vadd.f32 %v303, %v2613
    %2615 = vmatprep.mubr.bf16.mxu0 0
    %2616 = vmatmul.mubr.bf16.gmra.mrb[0].mxu0 %v1325
    %v2617 = vpop.f32.mrb[0].mxu0
    %v2618 = vadd.f32 %v299, %v2617
    %v2619 = vpop.f32.mrb[0].mxu0
    %v2620 = vadd.f32 %v303, %v2619
    %v2621 = vpop.f32.mrb[0].mxu0
    %v2622 = vadd.f32 %v299, %v2621
    %v2623 = vpop.f32.mrb[0].mxu0
    %v2624 = vadd.f32 %v303, %v2623
    %2625 = vmatprep.mubr.bf16.mxu0 0
    %2626 = vmatmul.mubr.bf16.gmra.mrb[0].mxu0 %v1328
    %v2627 = vpop.f32.mrb[0].mxu0
    %v2628 = vadd.f32 %v299, %v2627
    %v2629 = vpop.f32.mrb[0].mxu0
    %v2630 = vadd.f32 %v303, %v2629
    %v2631 = vpop.f32.mrb[0].mxu0
    %v2632 = vadd.f32 %v299, %v2631
    %v2633 = vpop.f32.mrb[0].mxu0
    %v2634 = vadd.f32 %v303, %v2633
    %2635 = vmatprep.mubr.bf16.mxu0 0
    %2636 = vmatmul.mubr.bf16.gmra.mrb[0].mxu0 %v1331
    %v2637 = vpop.f32.mrb[0].mxu0
    %v2638 = vadd.f32 %v299, %v2637
    %v2639 = vpop.f32.mrb[0].mxu0
    %v2640 = vadd.f32 %v303, %v2639
    %v2641 = vpop.f32.mrb[0].mxu0
    %v2642 = vadd.f32 %v299, %v2641
    %v2643 = vpop.f32.mrb[0].mxu0
    %v2644 = vadd.f32 %v303, %v2643
    %2645 = vmatprep.mubr.bf16.mxu0 0
    %2646 = vmatmul.mubr.bf16.gmra.mrb[0].mxu0 %v1334
    %v2647 = vpop.f32.mrb[0].mxu0
    %v2648 = vadd.f32 %v299, %v2647
    %v2649 = vpop.f32.mrb[0].mxu0
    %v2650 = vadd.f32 %v303, %v2649
    %v2651 = vpop.f32.mrb[0].mxu0
    %v2652 = vadd.f32 %v299, %v2651
    %v2653 = vpop.f32.mrb[0].mxu0
    %v2654 = vadd.f32 %v303, %v2653
    %2655 = vdwg.mxu0
    %v2656 = vmax.f32 %v1378, 0.0
    %v2657 = vmax.f32 %v1380, 0.0
    %v2658 = vmax.f32 %v1382, 0.0
    %v2659 = vmax.f32 %v1384, 0.0
    %v2660 = vmax.f32 %v1388, 0.0
    %v2661 = vmax.f32 %v1390, 0.0
    %v2662 = vmax.f32 %v1392, 0.0
    %v2663 = vmax.f32 %v1394, 0.0
    %v2664 = vmax.f32 %v1398, 0.0
    %v2665 = vmax.f32 %v1400, 0.0
    %v2666 = vmax.f32 %v1402, 0.0
    %v2667 = vmax.f32 %v1404, 0.0
    %v2668 = vmax.f32 %v1408, 0.0
    %v2669 = vmax.f32 %v1410, 0.0
    %v2670 = vmax.f32 %v1412, 0.0
    %v2671 = vmax.f32 %v1414, 0.0
    %v2672 = vmax.f32 %v1418, 0.0
    %v2673 = vmax.f32 %v1420, 0.0
    %v2674 = vmax.f32 %v1422, 0.0
    %v2675 = vmax.f32 %v1424, 0.0
    %v2676 = vmax.f32 %v1428, 0.0
    %v2677 = vmax.f32 %v1430, 0.0
    %v2678 = vmax.f32 %v1432, 0.0
    %v2679 = vmax.f32 %v1434, 0.0
    %v2680 = vmax.f32 %v1438, 0.0
    %v2681 = vmax.f32 %v1440, 0.0
    %v2682 = vmax.f32 %v1442, 0.0
    %v2683 = vmax.f32 %v1444, 0.0
    %v2684 = vmax.f32 %v1448, 0.0
    %v2685 = vmax.f32 %v1450, 0.0
    %v2686 = vmax.f32 %v1452, 0.0
    %v2687 = vmax.f32 %v1454, 0.0
    %v2688 = vmax.f32 %v1458, 0.0
    %v2689 = vmax.f32 %v1460, 0.0
    %v2690 = vmax.f32 %v1462, 0.0
    %v2691 = vmax.f32 %v1464, 0.0
    %v2692 = vmax.f32 %v1468, 0.0
    %v2693 = vmax.f32 %v1470, 0.0
    %v2694 = vmax.f32 %v1472, 0.0
    %v2695 = vmax.f32 %v1474, 0.0
    %v2696 = vmax.f32 %v1478, 0.0
    %v2697 = vmax.f32 %v1480, 0.0
    %v2698 = vmax.f32 %v1482, 0.0
    %v2699 = vmax.f32 %v1484, 0.0
    %v2700 = vmax.f32 %v1488, 0.0
    %v2701 = vmax.f32 %v1490, 0.0
    %v2702 = vmax.f32 %v1492, 0.0
    %v2703 = vmax.f32 %v1494, 0.0
    %v2704 = vmax.f32 %v1498, 0.0
    %v2705 = vmax.f32 %v1500, 0.0
    %v2706 = vmax.f32 %v1502, 0.0
    %v2707 = vmax.f32 %v1504, 0.0
    %v2708 = vmax.f32 %v1508, 0.0
    %v2709 = vmax.f32 %v1510, 0.0
    %v2710 = vmax.f32 %v1512, 0.0
    %v2711 = vmax.f32 %v1514, 0.0
    %v2712 = vmax.f32 %v1518, 0.0
    %v2713 = vmax.f32 %v1520, 0.0
    %v2714 = vmax.f32 %v1522, 0.0
    %v2715 = vmax.f32 %v1524, 0.0
    %v2716 = vmax.f32 %v1528, 0.0
    %v2717 = vmax.f32 %v1530, 0.0
    %v2718 = vmax.f32 %v1532, 0.0
    %v2719 = vmax.f32 %v1534, 0.0
    %v2720 = vmax.f32 %v1538, 0.0
    %v2721 = vmax.f32 %v1540, 0.0
    %v2722 = vmax.f32 %v1542, 0.0
    %v2723 = vmax.f32 %v1544, 0.0
    %v2724 = vmax.f32 %v1548, 0.0
    %v2725 = vmax.f32 %v1550, 0.0
    %v2726 = vmax.f32 %v1552, 0.0
    %v2727 = vmax.f32 %v1554, 0.0
    %v2728 = vmax.f32 %v1558, 0.0
    %v2729 = vmax.f32 %v1560, 0.0
    %v2730 = vmax.f32 %v1562, 0.0
    %v2731 = vmax.f32 %v1564, 0.0
    %v2732 = vmax.f32 %v1568, 0.0
    %v2733 = vmax.f32 %v1570, 0.0
    %v2734 = vmax.f32 %v1572, 0.0
    %v2735 = vmax.f32 %v1574, 0.0
    %v2736 = vmax.f32 %v1578, 0.0
    %v2737 = vmax.f32 %v1580, 0.0
    %v2738 = vmax.f32 %v1582, 0.0
    %v2739 = vmax.f32 %v1584, 0.0
    %v2740 = vmax.f32 %v1588, 0.0
    %v2741 = vmax.f32 %v1590, 0.0
    %v2742 = vmax.f32 %v1592, 0.0
    %v2743 = vmax.f32 %v1594, 0.0
    %v2744 = vmax.f32 %v1598, 0.0
    %v2745 = vmax.f32 %v1600, 0.0
    %v2746 = vmax.f32 %v1602, 0.0
    %v2747 = vmax.f32 %v1604, 0.0
    %v2748 = vmax.f32 %v1608, 0.0
    %v2749 = vmax.f32 %v1610, 0.0
    %v2750 = vmax.f32 %v1612, 0.0
    %v2751 = vmax.f32 %v1614, 0.0
    %v2752 = vmax.f32 %v1618, 0.0
    %v2753 = vmax.f32 %v1620, 0.0
    %v2754 = vmax.f32 %v1622, 0.0
    %v2755 = vmax.f32 %v1624, 0.0
    %v2756 = vmax.f32 %v1628, 0.0
    %v2757 = vmax.f32 %v1630, 0.0
    %v2758 = vmax.f32 %v1632, 0.0
    %v2759 = vmax.f32 %v1634, 0.0
    %v2760 = vmax.f32 %v1638, 0.0
    %v2761 = vmax.f32 %v1640, 0.0
    %v2762 = vmax.f32 %v1642, 0.0
    %v2763 = vmax.f32 %v1644, 0.0
    %v2764 = vmax.f32 %v1648, 0.0
    %v2765 = vmax.f32 %v1650, 0.0
    %v2766 = vmax.f32 %v1652, 0.0
    %v2767 = vmax.f32 %v1654, 0.0
    %v2768 = vmax.f32 %v1658, 0.0
    %v2769 = vmax.f32 %v1660, 0.0
    %v2770 = vmax.f32 %v1662, 0.0
    %v2771 = vmax.f32 %v1664, 0.0
    %v2772 = vmax.f32 %v1668, 0.0
    %v2773 = vmax.f32 %v1670, 0.0
    %v2774 = vmax.f32 %v1672, 0.0
    %v2775 = vmax.f32 %v1674, 0.0
    %v2776 = vmax.f32 %v1678, 0.0
    %v2777 = vmax.f32 %v1680, 0.0
    %v2778 = vmax.f32 %v1682, 0.0
    %v2779 = vmax.f32 %v1684, 0.0
    %v2780 = vmax.f32 %v1688, 0.0
    %v2781 = vmax.f32 %v1690, 0.0
    %v2782 = vmax.f32 %v1692, 0.0
    %v2783 = vmax.f32 %v1694, 0.0
    %v2784 = vmax.f32 %v1698, 0.0
    %v2785 = vmax.f32 %v1700, 0.0
    %v2786 = vmax.f32 %v1702, 0.0
    %v2787 = vmax.f32 %v1704, 0.0
    %v2788 = vmax.f32 %v1708, 0.0
    %v2789 = vmax.f32 %v1710, 0.0
    %v2790 = vmax.f32 %v1712, 0.0
    %v2791 = vmax.f32 %v1714, 0.0
    %v2792 = vmax.f32 %v1718, 0.0
    %v2793 = vmax.f32 %v1720, 0.0
    %v2794 = vmax.f32 %v1722, 0.0
    %v2795 = vmax.f32 %v1724, 0.0
    %v2796 = vmax.f32 %v1728, 0.0
    %v2797 = vmax.f32 %v1730, 0.0
    %v2798 = vmax.f32 %v1732, 0.0
    %v2799 = vmax.f32 %v1734, 0.0
    %v2800 = vmax.f32 %v1738, 0.0
    %v2801 = vmax.f32 %v1740, 0.0
    %v2802 = vmax.f32 %v1742, 0.0
    %v2803 = vmax.f32 %v1744, 0.0
    %v2804 = vmax.f32 %v1748, 0.0
    %v2805 = vmax.f32 %v1750, 0.0
    %v2806 = vmax.f32 %v1752, 0.0
    %v2807 = vmax.f32 %v1754, 0.0
    %v2808 = vmax.f32 %v1758, 0.0
    %v2809 = vmax.f32 %v1760, 0.0
    %v2810 = vmax.f32 %v1762, 0.0
    %v2811 = vmax.f32 %v1764, 0.0
    %v2812 = vmax.f32 %v1768, 0.0
    %v2813 = vmax.f32 %v1770, 0.0
    %v2814 = vmax.f32 %v1772, 0.0
    %v2815 = vmax.f32 %v1774, 0.0
    %v2816 = vmax.f32 %v1778, 0.0
    %v2817 = vmax.f32 %v1780, 0.0
    %v2818 = vmax.f32 %v1782, 0.0
    %v2819 = vmax.f32 %v1784, 0.0
    %v2820 = vmax.f32 %v1788, 0.0
    %v2821 = vmax.f32 %v1790, 0.0
    %v2822 = vmax.f32 %v1792, 0.0
    %v2823 = vmax.f32 %v1794, 0.0
    %v2824 = vmax.f32 %v1798, 0.0
    %v2825 = vmax.f32 %v1800, 0.0
    %v2826 = vmax.f32 %v1802, 0.0
    %v2827 = vmax.f32 %v1804, 0.0
    %v2828 = vmax.f32 %v1808, 0.0
    %v2829 = vmax.f32 %v1810, 0.0
    %v2830 = vmax.f32 %v1812, 0.0
    %v2831 = vmax.f32 %v1814, 0.0
    %v2832 = vmax.f32 %v1818, 0.0
    %v2833 = vmax.f32 %v1820, 0.0
    %v2834 = vmax.f32 %v1822, 0.0
    %v2835 = vmax.f32 %v1824, 0.0
    %v2836 = vmax.f32 %v1828, 0.0
    %v2837 = vmax.f32 %v1830, 0.0
    %v2838 = vmax.f32 %v1832, 0.0
    %v2839 = vmax.f32 %v1834, 0.0
    %v2840 = vmax.f32 %v1838, 0.0
    %v2841 = vmax.f32 %v1840, 0.0
    %v2842 = vmax.f32 %v1842, 0.0
    %v2843 = vmax.f32 %v1844, 0.0
    %v2844 = vmax.f32 %v1848, 0.0
    %v2845 = vmax.f32 %v1850, 0.0
    %v2846 = vmax.f32 %v1852, 0.0
    %v2847 = vmax.f32 %v1854, 0.0
    %v2848 = vmax.f32 %v1858, 0.0
    %v2849 = vmax.f32 %v1860, 0.0
    %v2850 = vmax.f32 %v1862, 0.0
    %v2851 = vmax.f32 %v1864, 0.0
    %v2852 = vmax.f32 %v1868, 0.0
    %v2853 = vmax.f32 %v1870, 0.0
    %v2854 = vmax.f32 %v1872, 0.0
    %v2855 = vmax.f32 %v1874, 0.0
    %v2856 = vmax.f32 %v1878, 0.0
    %v2857 = vmax.f32 %v1880, 0.0
    %v2858 = vmax.f32 %v1882, 0.0
    %v2859 = vmax.f32 %v1884, 0.0
    %v2860 = vmax.f32 %v1888, 0.0
    %v2861 = vmax.f32 %v1890, 0.0
    %v2862 = vmax.f32 %v1892, 0.0
    %v2863 = vmax.f32 %v1894, 0.0
    %v2864 = vmax.f32 %v1898, 0.0
    %v2865 = vmax.f32 %v1900, 0.0
    %v2866 = vmax.f32 %v1902, 0.0
    %v2867 = vmax.f32 %v1904, 0.0
    %v2868 = vmax.f32 %v1908, 0.0
    %v2869 = vmax.f32 %v1910, 0.0
    %v2870 = vmax.f32 %v1912, 0.0
    %v2871 = vmax.f32 %v1914, 0.0
    %v2872 = vmax.f32 %v1918, 0.0
    %v2873 = vmax.f32 %v1920, 0.0
    %v2874 = vmax.f32 %v1922, 0.0
    %v2875 = vmax.f32 %v1924, 0.0
    %v2876 = vmax.f32 %v1928, 0.0
    %v2877 = vmax.f32 %v1930, 0.0
    %v2878 = vmax.f32 %v1932, 0.0
    %v2879 = vmax.f32 %v1934, 0.0
    %v2880 = vmax.f32 %v1938, 0.0
    %v2881 = vmax.f32 %v1940, 0.0
    %v2882 = vmax.f32 %v1942, 0.0
    %v2883 = vmax.f32 %v1944, 0.0
    %v2884 = vmax.f32 %v1948, 0.0
    %v2885 = vmax.f32 %v1950, 0.0
    %v2886 = vmax.f32 %v1952, 0.0
    %v2887 = vmax.f32 %v1954, 0.0
    %v2888 = vmax.f32 %v1958, 0.0
    %v2889 = vmax.f32 %v1960, 0.0
    %v2890 = vmax.f32 %v1962, 0.0
    %v2891 = vmax.f32 %v1964, 0.0
    %v2892 = vmax.f32 %v1968, 0.0
    %v2893 = vmax.f32 %v1970, 0.0
    %v2894 = vmax.f32 %v1972, 0.0
    %v2895 = vmax.f32 %v1974, 0.0
    %v2896 = vmax.f32 %v1978, 0.0
    %v2897 = vmax.f32 %v1980, 0.0
    %v2898 = vmax.f32 %v1982, 0.0
    %v2899 = vmax.f32 %v1984, 0.0
    %v2900 = vmax.f32 %v1988, 0.0
    %v2901 = vmax.f32 %v1990, 0.0
    %v2902 = vmax.f32 %v1992, 0.0
    %v2903 = vmax.f32 %v1994, 0.0
    %v2904 = vmax.f32 %v1998, 0.0
    %v2905 = vmax.f32 %v2000, 0.0
    %v2906 = vmax.f32 %v2002, 0.0
    %v2907 = vmax.f32 %v2004, 0.0
    %v2908 = vmax.f32 %v2008, 0.0
    %v2909 = vmax.f32 %v2010, 0.0
    %v2910 = vmax.f32 %v2012, 0.0
    %v2911 = vmax.f32 %v2014, 0.0
    %v2912 = vmax.f32 %v2018, 0.0
    %v2913 = vmax.f32 %v2020, 0.0
    %v2914 = vmax.f32 %v2022, 0.0
    %v2915 = vmax.f32 %v2024, 0.0
    %v2916 = vmax.f32 %v2028, 0.0
    %v2917 = vmax.f32 %v2030, 0.0
    %v2918 = vmax.f32 %v2032, 0.0
    %v2919 = vmax.f32 %v2034, 0.0
    %v2920 = vmax.f32 %v2038, 0.0
    %v2921 = vmax.f32 %v2040, 0.0
    %v2922 = vmax.f32 %v2042, 0.0
    %v2923 = vmax.f32 %v2044, 0.0
    %v2924 = vmax.f32 %v2048, 0.0
    %v2925 = vmax.f32 %v2050, 0.0
    %v2926 = vmax.f32 %v2052, 0.0
    %v2927 = vmax.f32 %v2054, 0.0
    %v2928 = vmax.f32 %v2058, 0.0
    %v2929 = vmax.f32 %v2060, 0.0
    %v2930 = vmax.f32 %v2062, 0.0
    %v2931 = vmax.f32 %v2064, 0.0
    %v2932 = vmax.f32 %v2068, 0.0
    %v2933 = vmax.f32 %v2070, 0.0
    %v2934 = vmax.f32 %v2072, 0.0
    %v2935 = vmax.f32 %v2074, 0.0
    %v2936 = vmax.f32 %v2078, 0.0
    %v2937 = vmax.f32 %v2080, 0.0
    %v2938 = vmax.f32 %v2082, 0.0
    %v2939 = vmax.f32 %v2084, 0.0
    %v2940 = vmax.f32 %v2088, 0.0
    %v2941 = vmax.f32 %v2090, 0.0
    %v2942 = vmax.f32 %v2092, 0.0
    %v2943 = vmax.f32 %v2094, 0.0
    %v2944 = vmax.f32 %v2098, 0.0
    %v2945 = vmax.f32 %v2100, 0.0
    %v2946 = vmax.f32 %v2102, 0.0
    %v2947 = vmax.f32 %v2104, 0.0
    %v2948 = vmax.f32 %v2108, 0.0
    %v2949 = vmax.f32 %v2110, 0.0
    %v2950 = vmax.f32 %v2112, 0.0
    %v2951 = vmax.f32 %v2114, 0.0
    %v2952 = vmax.f32 %v2118, 0.0
    %v2953 = vmax.f32 %v2120, 0.0
    %v2954 = vmax.f32 %v2122, 0.0
    %v2955 = vmax.f32 %v2124, 0.0
    %v2956 = vmax.f32 %v2128, 0.0
    %v2957 = vmax.f32 %v2130, 0.0
    %v2958 = vmax.f32 %v2132, 0.0
    %v2959 = vmax.f32 %v2134, 0.0
    %v2960 = vmax.f32 %v2138, 0.0
    %v2961 = vmax.f32 %v2140, 0.0
    %v2962 = vmax.f32 %v2142, 0.0
    %v2963 = vmax.f32 %v2144, 0.0
    %v2964 = vmax.f32 %v2148, 0.0
    %v2965 = vmax.f32 %v2150, 0.0
    %v2966 = vmax.f32 %v2152, 0.0
    %v2967 = vmax.f32 %v2154, 0.0
    %v2968 = vmax.f32 %v2158, 0.0
    %v2969 = vmax.f32 %v2160, 0.0
    %v2970 = vmax.f32 %v2162, 0.0
    %v2971 = vmax.f32 %v2164, 0.0
    %v2972 = vmax.f32 %v2168, 0.0
    %v2973 = vmax.f32 %v2170, 0.0
    %v2974 = vmax.f32 %v2172, 0.0
    %v2975 = vmax.f32 %v2174, 0.0
    %v2976 = vmax.f32 %v2178, 0.0
    %v2977 = vmax.f32 %v2180, 0.0
    %v2978 = vmax.f32 %v2182, 0.0
    %v2979 = vmax.f32 %v2184, 0.0
    %v2980 = vmax.f32 %v2188, 0.0
    %v2981 = vmax.f32 %v2190, 0.0
    %v2982 = vmax.f32 %v2192, 0.0
    %v2983 = vmax.f32 %v2194, 0.0
    %v2984 = vmax.f32 %v2198, 0.0
    %v2985 = vmax.f32 %v2200, 0.0
    %v2986 = vmax.f32 %v2202, 0.0
    %v2987 = vmax.f32 %v2204, 0.0
    %v2988 = vmax.f32 %v2208, 0.0
    %v2989 = vmax.f32 %v2210, 0.0
    %v2990 = vmax.f32 %v2212, 0.0
    %v2991 = vmax.f32 %v2214, 0.0
    %v2992 = vmax.f32 %v2218, 0.0
    %v2993 = vmax.f32 %v2220, 0.0
    %v2994 = vmax.f32 %v2222, 0.0
    %v2995 = vmax.f32 %v2224, 0.0
    %v2996 = vmax.f32 %v2228, 0.0
    %v2997 = vmax.f32 %v2230, 0.0
    %v2998 = vmax.f32 %v2232, 0.0
    %v2999 = vmax.f32 %v2234, 0.0
    %v3000 = vmax.f32 %v2238, 0.0
    %v3001 = vmax.f32 %v2240, 0.0
    %v3002 = vmax.f32 %v2242, 0.0
    %v3003 = vmax.f32 %v2244, 0.0
    %v3004 = vmax.f32 %v2248, 0.0
    %v3005 = vmax.f32 %v2250, 0.0
    %v3006 = vmax.f32 %v2252, 0.0
    %v3007 = vmax.f32 %v2254, 0.0
    %v3008 = vmax.f32 %v2258, 0.0
    %v3009 = vmax.f32 %v2260, 0.0
    %v3010 = vmax.f32 %v2262, 0.0
    %v3011 = vmax.f32 %v2264, 0.0
    %v3012 = vmax.f32 %v2268, 0.0
    %v3013 = vmax.f32 %v2270, 0.0
    %v3014 = vmax.f32 %v2272, 0.0
    %v3015 = vmax.f32 %v2274, 0.0
    %v3016 = vmax.f32 %v2278, 0.0
    %v3017 = vmax.f32 %v2280, 0.0
    %v3018 = vmax.f32 %v2282, 0.0
    %v3019 = vmax.f32 %v2284, 0.0
    %v3020 = vmax.f32 %v2288, 0.0
    %v3021 = vmax.f32 %v2290, 0.0
    %v3022 = vmax.f32 %v2292, 0.0
    %v3023 = vmax.f32 %v2294, 0.0
    %v3024 = vmax.f32 %v2298, 0.0
    %v3025 = vmax.f32 %v2300, 0.0
    %v3026 = vmax.f32 %v2302, 0.0
    %v3027 = vmax.f32 %v2304, 0.0
    %v3028 = vmax.f32 %v2308, 0.0
    %v3029 = vmax.f32 %v2310, 0.0
    %v3030 = vmax.f32 %v2312, 0.0
    %v3031 = vmax.f32 %v2314, 0.0
    %v3032 = vmax.f32 %v2318, 0.0
    %v3033 = vmax.f32 %v2320, 0.0
    %v3034 = vmax.f32 %v2322, 0.0
    %v3035 = vmax.f32 %v2324, 0.0
    %v3036 = vmax.f32 %v2328, 0.0
    %v3037 = vmax.f32 %v2330, 0.0
    %v3038 = vmax.f32 %v2332, 0.0
    %v3039 = vmax.f32 %v2334, 0.0
    %v3040 = vmax.f32 %v2338, 0.0
    %v3041 = vmax.f32 %v2340, 0.0
    %v3042 = vmax.f32 %v2342, 0.0
    %v3043 = vmax.f32 %v2344, 0.0
    %v3044 = vmax.f32 %v2348, 0.0
    %v3045 = vmax.f32 %v2350, 0.0
    %v3046 = vmax.f32 %v2352, 0.0
    %v3047 = vmax.f32 %v2354, 0.0
    %v3048 = vmax.f32 %v2358, 0.0
    %v3049 = vmax.f32 %v2360, 0.0
    %v3050 = vmax.f32 %v2362, 0.0
    %v3051 = vmax.f32 %v2364, 0.0
    %v3052 = vmax.f32 %v2368, 0.0
    %v3053 = vmax.f32 %v2370, 0.0
    %v3054 = vmax.f32 %v2372, 0.0
    %v3055 = vmax.f32 %v2374, 0.0
    %v3056 = vmax.f32 %v2378, 0.0
    %v3057 = vmax.f32 %v2380, 0.0
    %v3058 = vmax.f32 %v2382, 0.0
    %v3059 = vmax.f32 %v2384, 0.0
    %v3060 = vmax.f32 %v2388, 0.0
    %v3061 = vmax.f32 %v2390, 0.0
    %v3062 = vmax.f32 %v2392, 0.0
    %v3063 = vmax.f32 %v2394, 0.0
    %v3064 = vmax.f32 %v2398, 0.0
    %v3065 = vmax.f32 %v2400, 0.0
    %v3066 = vmax.f32 %v2402, 0.0
    %v3067 = vmax.f32 %v2404, 0.0
    %v3068 = vmax.f32 %v2408, 0.0
    %v3069 = vmax.f32 %v2410, 0.0
    %v3070 = vmax.f32 %v2412, 0.0
    %v3071 = vmax.f32 %v2414, 0.0
    %v3072 = vmax.f32 %v2418, 0.0
    %v3073 = vmax.f32 %v2420, 0.0
    %v3074 = vmax.f32 %v2422, 0.0
    %v3075 = vmax.f32 %v2424, 0.0
    %v3076 = vmax.f32 %v2428, 0.0
    %v3077 = vmax.f32 %v2430, 0.0
    %v3078 = vmax.f32 %v2432, 0.0
    %v3079 = vmax.f32 %v2434, 0.0
    %v3080 = vmax.f32 %v2438, 0.0
    %v3081 = vmax.f32 %v2440, 0.0
    %v3082 = vmax.f32 %v2442, 0.0
    %v3083 = vmax.f32 %v2444, 0.0
    %v3084 = vmax.f32 %v2448, 0.0
    %v3085 = vmax.f32 %v2450, 0.0
    %v3086 = vmax.f32 %v2452, 0.0
    %v3087 = vmax.f32 %v2454, 0.0
    %v3088 = vmax.f32 %v2458, 0.0
    %v3089 = vmax.f32 %v2460, 0.0
    %v3090 = vmax.f32 %v2462, 0.0
    %v3091 = vmax.f32 %v2464, 0.0
    %v3092 = vmax.f32 %v2468, 0.0
    %v3093 = vmax.f32 %v2470, 0.0
    %v3094 = vmax.f32 %v2472, 0.0
    %v3095 = vmax.f32 %v2474, 0.0
    %v3096 = vmax.f32 %v2478, 0.0
    %v3097 = vmax.f32 %v2480, 0.0
    %v3098 = vmax.f32 %v2482, 0.0
    %v3099 = vmax.f32 %v2484, 0.0
    %v3100 = vmax.f32 %v2488, 0.0
    %v3101 = vmax.f32 %v2490, 0.0
    %v3102 = vmax.f32 %v2492, 0.0
    %v3103 = vmax.f32 %v2494, 0.0
    %v3104 = vmax.f32 %v2498, 0.0
    %v3105 = vmax.f32 %v2500, 0.0
    %v3106 = vmax.f32 %v2502, 0.0
    %v3107 = vmax.f32 %v2504, 0.0
    %v3108 = vmax.f32 %v2508, 0.0
    %v3109 = vmax.f32 %v2510, 0.0
    %v3110 = vmax.f32 %v2512, 0.0
    %v3111 = vmax.f32 %v2514, 0.0
    %v3112 = vmax.f32 %v2518, 0.0
    %v3113 = vmax.f32 %v2520, 0.0
    %v3114 = vmax.f32 %v2522, 0.0
    %v3115 = vmax.f32 %v2524, 0.0
    %v3116 = vmax.f32 %v2528, 0.0
    %v3117 = vmax.f32 %v2530, 0.0
    %v3118 = vmax.f32 %v2532, 0.0
    %v3119 = vmax.f32 %v2534, 0.0
    %v3120 = vmax.f32 %v2538, 0.0
    %v3121 = vmax.f32 %v2540, 0.0
    %v3122 = vmax.f32 %v2542, 0.0
    %v3123 = vmax.f32 %v2544, 0.0
    %v3124 = vmax.f32 %v2548, 0.0
    %v3125 = vmax.f32 %v2550, 0.0
    %v3126 = vmax.f32 %v2552, 0.0
    %v3127 = vmax.f32 %v2554, 0.0
    %v3128 = vmax.f32 %v2558, 0.0
    %v3129 = vmax.f32 %v2560, 0.0
    %v3130 = vmax.f32 %v2562, 0.0
    %v3131 = vmax.f32 %v2564, 0.0
    %v3132 = vmax.f32 %v2568, 0.0
    %v3133 = vmax.f32 %v2570, 0.0
    %v3134 = vmax.f32 %v2572, 0.0
    %v3135 = vmax.f32 %v2574, 0.0
    %v3136 = vmax.f32 %v2578, 0.0
    %v3137 = vmax.f32 %v2580, 0.0
    %v3138 = vmax.f32 %v2582, 0.0
    %v3139 = vmax.f32 %v2584, 0.0
    %v3140 = vmax.f32 %v2588, 0.0
    %v3141 = vmax.f32 %v2590, 0.0
    %v3142 = vmax.f32 %v2592, 0.0
    %v3143 = vmax.f32 %v2594, 0.0
    %v3144 = vmax.f32 %v2598, 0.0
    %v3145 = vmax.f32 %v2600, 0.0
    %v3146 = vmax.f32 %v2602, 0.0
    %v3147 = vmax.f32 %v2604, 0.0
    %v3148 = vmax.f32 %v2608, 0.0
    %v3149 = vmax.f32 %v2610, 0.0
    %v3150 = vmax.f32 %v2612, 0.0
    %v3151 = vmax.f32 %v2614, 0.0
    %v3152 = vmax.f32 %v2618, 0.0
    %v3153 = vmax.f32 %v2620, 0.0
    %v3154 = vmax.f32 %v2622, 0.0
    %v3155 = vmax.f32 %v2624, 0.0
    %v3156 = vmax.f32 %v2628, 0.0
    %v3157 = vmax.f32 %v2630, 0.0
    %v3158 = vmax.f32 %v2632, 0.0
    %v3159 = vmax.f32 %v2634, 0.0
    %v3160 = vmax.f32 %v2638, 0.0
    %v3161 = vmax.f32 %v2640, 0.0
    %v3162 = vmax.f32 %v2642, 0.0
    %v3163 = vmax.f32 %v2644, 0.0
    %v3164 = vmax.f32 %v2648, 0.0
    %v3165 = vmax.f32 %v2650, 0.0
    %v3166 = vmax.f32 %v2652, 0.0
    %v3167 = vmax.f32 %v2654, 0.0
    %v3168 = vadd.f32 %v2656, %v2658
    %v3169 = vadd.f32 %v3168, %v2660
    %v3170 = vadd.f32 %v3169, %v2662
    %v3171 = vadd.f32 %v3170, %v2664
    %v3172 = vadd.f32 %v3171, %v2666
    %v3173 = vadd.f32 %v3172, %v2668
    %v3174 = vadd.f32 %v3173, %v2670
    %v3175 = vadd.f32 %v3174, %v2672
    %v3176 = vadd.f32 %v3175, %v2674
    %v3177 = vadd.f32 %v3176, %v2676
    %v3178 = vadd.f32 %v3177, %v2678
    %v3179 = vadd.f32 %v3178, %v2680
    %v3180 = vadd.f32 %v3179, %v2682
    %v3181 = vadd.f32 %v3180, %v2684
    %v3182 = vadd.f32 %v3181, %v2686
    %v3183 = vadd.f32 %v3182, %v2688
    %v3184 = vadd.f32 %v3183, %v2690
    %v3185 = vadd.f32 %v3184, %v2692
    %v3186 = vadd.f32 %v3185, %v2694
    %v3187 = vadd.f32 %v3186, %v2696
    %v3188 = vadd.f32 %v3187, %v2698
    %v3189 = vadd.f32 %v3188, %v2700
    %v3190 = vadd.f32 %v3189, %v2702
    %v3191 = vadd.f32 %v3190, %v2704
    %v3192 = vadd.f32 %v3191, %v2706
    %v3193 = vadd.f32 %v3192, %v2708
    %v3194 = vadd.f32 %v3193, %v2710
    %v3195 = vadd.f32 %v3194, %v2712
    %v3196 = vadd.f32 %v3195, %v2714
    %v3197 = vadd.f32 %v3196, %v2716
    %v3198 = vadd.f32 %v3197, %v2718
    %v3199 = vrot.slane %v3198, 4
    %v3200 = vadd.f32 %v3198, %v3199
    %v3201 = vrot.slane %v3200, 2
    %v3202 = vadd.f32 %v3200, %v3201
    %v3203 = vrot.slane %v3202, 1
    %v3204 = vadd.f32 %v3202, %v3203
    %v3205 = vadd.f32 %v2657, %v2659
    %v3206 = vadd.f32 %v3205, %v2661
    %v3207 = vadd.f32 %v3206, %v2663
    %v3208 = vadd.f32 %v3207, %v2665
    %v3209 = vadd.f32 %v3208, %v2667
    %v3210 = vadd.f32 %v3209, %v2669
    %v3211 = vadd.f32 %v3210, %v2671
    %v3212 = vadd.f32 %v3211, %v2673
    %v3213 = vadd.f32 %v3212, %v2675
    %v3214 = vadd.f32 %v3213, %v2677
    %v3215 = vadd.f32 %v3214, %v2679
    %v3216 = vadd.f32 %v3215, %v2681
    %v3217 = vadd.f32 %v3216, %v2683
    %v3218 = vadd.f32 %v3217, %v2685
    %v3219 = vadd.f32 %v3218, %v2687
    %v3220 = vadd.f32 %v3219, %v2689
    %v3221 = vadd.f32 %v3220, %v2691
    %v3222 = vadd.f32 %v3221, %v2693
    %v3223 = vadd.f32 %v3222, %v2695
    %v3224 = vadd.f32 %v3223, %v2697
    %v3225 = vadd.f32 %v3224, %v2699
    %v3226 = vadd.f32 %v3225, %v2701
    %v3227 = vadd.f32 %v3226, %v2703
    %v3228 = vadd.f32 %v3227, %v2705
    %v3229 = vadd.f32 %v3228, %v2707
    %v3230 = vadd.f32 %v3229, %v2709
    %v3231 = vadd.f32 %v3230, %v2711
    %v3232 = vadd.f32 %v3231, %v2713
    %v3233 = vadd.f32 %v3232, %v2715
    %v3234 = vadd.f32 %v3233, %v2717
    %v3235 = vadd.f32 %v3234, %v2719
    %v3236 = vrot.slane %v3235, 4
    %v3237 = vadd.f32 %v3235, %v3236
    %v3238 = vrot.slane %v3237, 2
    %v3239 = vadd.f32 %v3237, %v3238
    %v3240 = vrot.slane %v3239, 1
    %v3241 = vadd.f32 %v3239, %v3240
    %v3242 = vadd.f32 %v2720, %v2722
    %v3243 = vadd.f32 %v3242, %v2724
    %v3244 = vadd.f32 %v3243, %v2726
    %v3245 = vadd.f32 %v3244, %v2728
    %v3246 = vadd.f32 %v3245, %v2730
    %v3247 = vadd.f32 %v3246, %v2732
    %v3248 = vadd.f32 %v3247, %v2734
    %v3249 = vadd.f32 %v3248, %v2736
    %v3250 = vadd.f32 %v3249, %v2738
    %v3251 = vadd.f32 %v3250, %v2740
    %v3252 = vadd.f32 %v3251, %v2742
    %v3253 = vadd.f32 %v3252, %v2744
    %v3254 = vadd.f32 %v3253, %v2746
    %v3255 = vadd.f32 %v3254, %v2748
    %v3256 = vadd.f32 %v3255, %v2750
    %v3257 = vadd.f32 %v3256, %v2752
    %v3258 = vadd.f32 %v3257, %v2754
    %v3259 = vadd.f32 %v3258, %v2756
    %v3260 = vadd.f32 %v3259, %v2758
    %v3261 = vadd.f32 %v3260, %v2760
    %v3262 = vadd.f32 %v3261, %v2762
    %v3263 = vadd.f32 %v3262, %v2764
    %v3264 = vadd.f32 %v3263, %v2766
    %v3265 = vadd.f32 %v3264, %v2768
    %v3266 = vadd.f32 %v3265, %v2770
    %v3267 = vadd.f32 %v3266, %v2772
    %v3268 = vadd.f32 %v3267, %v2774
    %v3269 = vadd.f32 %v3268, %v2776
    %v3270 = vadd.f32 %v3269, %v2778
    %v3271 = vadd.f32 %v3270, %v2780
    %v3272 = vadd.f32 %v3271, %v2782
    %v3273 = vrot.slane %v3272, 4
    %v3274 = vadd.f32 %v3272, %v3273
    %v3275 = vrot.slane %v3274, 2
    %v3276 = vadd.f32 %v3274, %v3275
    %v3277 = vrot.slane %v3276, 1
    %v3278 = vadd.f32 %v3276, %v3277
    %v3279 = vadd.f32 %v2721, %v2723
    %v3280 = vadd.f32 %v3279, %v2725
    %v3281 = vadd.f32 %v3280, %v2727
    %v3282 = vadd.f32 %v3281, %v2729
    %v3283 = vadd.f32 %v3282, %v2731
    %v3284 = vadd.f32 %v3283, %v2733
    %v3285 = vadd.f32 %v3284, %v2735
    %v3286 = vadd.f32 %v3285, %v2737
    %v3287 = vadd.f32 %v3286, %v2739
    %v3288 = vadd.f32 %v3287, %v2741
    %v3289 = vadd.f32 %v3288, %v2743
    %v3290 = vadd.f32 %v3289, %v2745
    %v3291 = vadd.f32 %v3290, %v2747
    %v3292 = vadd.f32 %v3291, %v2749
    %v3293 = vadd.f32 %v3292, %v2751
    %v3294 = vadd.f32 %v3293, %v2753
    %v3295 = vadd.f32 %v3294, %v2755
    %v3296 = vadd.f32 %v3295, %v2757
    %v3297 = vadd.f32 %v3296, %v2759
    %v3298 = vadd.f32 %v3297, %v2761
    %v3299 = vadd.f32 %v3298, %v2763
    %v3300 = vadd.f32 %v3299, %v2765
    %v3301 = vadd.f32 %v3300, %v2767
    %v3302 = vadd.f32 %v3301, %v2769
    %v3303 = vadd.f32 %v3302, %v2771
    %v3304 = vadd.f32 %v3303, %v2773
    %v3305 = vadd.f32 %v3304, %v2775
    %v3306 = vadd.f32 %v3305, %v2777
    %v3307 = vadd.f32 %v3306, %v2779
    %v3308 = vadd.f32 %v3307, %v2781
    %v3309 = vadd.f32 %v3308, %v2783
    %v3310 = vrot.slane %v3309, 4
    %v3311 = vadd.f32 %v3309, %v3310
    %v3312 = vrot.slane %v3311, 2
    %v3313 = vadd.f32 %v3311, %v3312
    %v3314 = vrot.slane %v3313, 1
    %v3315 = vadd.f32 %v3313, %v3314
    %v3316 = vadd.f32 %v2784, %v2786
    %v3317 = vadd.f32 %v3316, %v2788
    %v3318 = vadd.f32 %v3317, %v2790
    %v3319 = vadd.f32 %v3318, %v2792
    %v3320 = vadd.f32 %v3319, %v2794
    %v3321 = vadd.f32 %v3320, %v2796
    %v3322 = vadd.f32 %v3321, %v2798
    %v3323 = vadd.f32 %v3322, %v2800
    %v3324 = vadd.f32 %v3323, %v2802
    %v3325 = vadd.f32 %v3324, %v2804
    %v3326 = vadd.f32 %v3325, %v2806
    %v3327 = vadd.f32 %v3326, %v2808
    %v3328 = vadd.f32 %v3327, %v2810
    %v3329 = vadd.f32 %v3328, %v2812
    %v3330 = vadd.f32 %v3329, %v2814
    %v3331 = vadd.f32 %v3330, %v2816
    %v3332 = vadd.f32 %v3331, %v2818
    %v3333 = vadd.f32 %v3332, %v2820
    %v3334 = vadd.f32 %v3333, %v2822
    %v3335 = vadd.f32 %v3334, %v2824
    %v3336 = vadd.f32 %v3335, %v2826
    %v3337 = vadd.f32 %v3336, %v2828
    %v3338 = vadd.f32 %v3337, %v2830
    %v3339 = vadd.f32 %v3338, %v2832
    %v3340 = vadd.f32 %v3339, %v2834
    %v3341 = vadd.f32 %v3340, %v2836
    %v3342 = vadd.f32 %v3341, %v2838
    %v3343 = vadd.f32 %v3342, %v2840
    %v3344 = vadd.f32 %v3343, %v2842
    %v3345 = vadd.f32 %v3344, %v2844
    %v3346 = vadd.f32 %v3345, %v2846
    %v3347 = vrot.slane %v3346, 4
    %v3348 = vadd.f32 %v3346, %v3347
    %v3349 = vrot.slane %v3348, 2
    %v3350 = vadd.f32 %v3348, %v3349
    %v3351 = vrot.slane %v3350, 1
    %v3352 = vadd.f32 %v3350, %v3351
    %v3353 = vadd.f32 %v2785, %v2787
    %v3354 = vadd.f32 %v3353, %v2789
    %v3355 = vadd.f32 %v3354, %v2791
    %v3356 = vadd.f32 %v3355, %v2793
    %v3357 = vadd.f32 %v3356, %v2795
    %v3358 = vadd.f32 %v3357, %v2797
    %v3359 = vadd.f32 %v3358, %v2799
    %v3360 = vadd.f32 %v3359, %v2801
    %v3361 = vadd.f32 %v3360, %v2803
    %v3362 = vadd.f32 %v3361, %v2805
    %v3363 = vadd.f32 %v3362, %v2807
    %v3364 = vadd.f32 %v3363, %v2809
    %v3365 = vadd.f32 %v3364, %v2811
    %v3366 = vadd.f32 %v3365, %v2813
    %v3367 = vadd.f32 %v3366, %v2815
    %v3368 = vadd.f32 %v3367, %v2817
    %v3369 = vadd.f32 %v3368, %v2819
    %v3370 = vadd.f32 %v3369, %v2821
    %v3371 = vadd.f32 %v3370, %v2823
    %v3372 = vadd.f32 %v3371, %v2825
    %v3373 = vadd.f32 %v3372, %v2827
    %v3374 = vadd.f32 %v3373, %v2829
    %v3375 = vadd.f32 %v3374, %v2831
    %v3376 = vadd.f32 %v3375, %v2833
    %v3377 = vadd.f32 %v3376, %v2835
    %v3378 = vadd.f32 %v3377, %v2837
    %v3379 = vadd.f32 %v3378, %v2839
    %v3380 = vadd.f32 %v3379, %v2841
    %v3381 = vadd.f32 %v3380, %v2843
    %v3382 = vadd.f32 %v3381, %v2845
    %v3383 = vadd.f32 %v3382, %v2847
    %v3384 = vrot.slane %v3383, 4
    %v3385 = vadd.f32 %v3383, %v3384
    %v3386 = vrot.slane %v3385, 2
    %v3387 = vadd.f32 %v3385, %v3386
    %v3388 = vrot.slane %v3387, 1
    %v3389 = vadd.f32 %v3387, %v3388
    %v3390 = vadd.f32 %v2848, %v2850
    %v3391 = vadd.f32 %v3390, %v2852
    %v3392 = vadd.f32 %v3391, %v2854
    %v3393 = vadd.f32 %v3392, %v2856
    %v3394 = vadd.f32 %v3393, %v2858
    %v3395 = vadd.f32 %v3394, %v2860
    %v3396 = vadd.f32 %v3395, %v2862
    %v3397 = vadd.f32 %v3396, %v2864
    %v3398 = vadd.f32 %v3397, %v2866
    %v3399 = vadd.f32 %v3398, %v2868
    %v3400 = vadd.f32 %v3399, %v2870
    %v3401 = vadd.f32 %v3400, %v2872
    %v3402 = vadd.f32 %v3401, %v2874
    %v3403 = vadd.f32 %v3402, %v2876
    %v3404 = vadd.f32 %v3403, %v2878
    %v3405 = vadd.f32 %v3404, %v2880
    %v3406 = vadd.f32 %v3405, %v2882
    %v3407 = vadd.f32 %v3406, %v2884
    %v3408 = vadd.f32 %v3407, %v2886
    %v3409 = vadd.f32 %v3408, %v2888
    %v3410 = vadd.f32 %v3409, %v2890
    %v3411 = vadd.f32 %v3410, %v2892
    %v3412 = vadd.f32 %v3411, %v2894
    %v3413 = vadd.f32 %v3412, %v2896
    %v3414 = vadd.f32 %v3413, %v2898
    %v3415 = vadd.f32 %v3414, %v2900
    %v3416 = vadd.f32 %v3415, %v2902
    %v3417 = vadd.f32 %v3416, %v2904
    %v3418 = vadd.f32 %v3417, %v2906
    %v3419 = vadd.f32 %v3418, %v2908
    %v3420 = vadd.f32 %v3419, %v2910
    %v3421 = vrot.slane %v3420, 4
    %v3422 = vadd.f32 %v3420, %v3421
    %v3423 = vrot.slane %v3422, 2
    %v3424 = vadd.f32 %v3422, %v3423
    %v3425 = vrot.slane %v3424, 1
    %v3426 = vadd.f32 %v3424, %v3425
    %v3427 = vadd.f32 %v2849, %v2851
    %v3428 = vadd.f32 %v3427, %v2853
    %v3429 = vadd.f32 %v3428, %v2855
    %v3430 = vadd.f32 %v3429, %v2857
    %v3431 = vadd.f32 %v3430, %v2859
    %v3432 = vadd.f32 %v3431, %v2861
    %v3433 = vadd.f32 %v3432, %v2863
    %v3434 = vadd.f32 %v3433, %v2865
    %v3435 = vadd.f32 %v3434, %v2867
    %v3436 = vadd.f32 %v3435, %v2869
    %v3437 = vadd.f32 %v3436, %v2871
    %v3438 = vadd.f32 %v3437, %v2873
    %v3439 = vadd.f32 %v3438, %v2875
    %v3440 = vadd.f32 %v3439, %v2877
    %v3441 = vadd.f32 %v3440, %v2879
    %v3442 = vadd.f32 %v3441, %v2881
    %v3443 = vadd.f32 %v3442, %v2883
    %v3444 = vadd.f32 %v3443, %v2885
    %v3445 = vadd.f32 %v3444, %v2887
    %v3446 = vadd.f32 %v3445, %v2889
    %v3447 = vadd.f32 %v3446, %v2891
    %v3448 = vadd.f32 %v3447, %v2893
    %v3449 = vadd.f32 %v3448, %v2895
    %v3450 = vadd.f32 %v3449, %v2897
    %v3451 = vadd.f32 %v3450, %v2899
    %v3452 = vadd.f32 %v3451, %v2901
    %v3453 = vadd.f32 %v3452, %v2903
    %v3454 = vadd.f32 %v3453, %v2905
    %v3455 = vadd.f32 %v3454, %v2907
    %v3456 = vadd.f32 %v3455, %v2909
    %v3457 = vadd.f32 %v3456, %v2911
    %v3458 = vrot.slane %v3457, 4
    %v3459 = vadd.f32 %v3457, %v3458
    %v3460 = vrot.slane %v3459, 2
    %v3461 = vadd.f32 %v3459, %v3460
    %v3462 = vrot.slane %v3461, 1
    %v3463 = vadd.f32 %v3461, %v3462
    %v3464 = vadd.f32 %v2912, %v2914
    %v3465 = vadd.f32 %v3464, %v2916
    %v3466 = vadd.f32 %v3465, %v2918
    %v3467 = vadd.f32 %v3466, %v2920
    %v3468 = vadd.f32 %v3467, %v2922
    %v3469 = vadd.f32 %v3468, %v2924
    %v3470 = vadd.f32 %v3469, %v2926
    %v3471 = vadd.f32 %v3470, %v2928
    %v3472 = vadd.f32 %v3471, %v2930
    %v3473 = vadd.f32 %v3472, %v2932
    %v3474 = vadd.f32 %v3473, %v2934
    %v3475 = vadd.f32 %v3474, %v2936
    %v3476 = vadd.f32 %v3475, %v2938
    %v3477 = vadd.f32 %v3476, %v2940
    %v3478 = vadd.f32 %v3477, %v2942
    %v3479 = vadd.f32 %v3478, %v2944
    %v3480 = vadd.f32 %v3479, %v2946
    %v3481 = vadd.f32 %v3480, %v2948
    %v3482 = vadd.f32 %v3481, %v2950
    %v3483 = vadd.f32 %v3482, %v2952
    %v3484 = vadd.f32 %v3483, %v2954
    %v3485 = vadd.f32 %v3484, %v2956
    %v3486 = vadd.f32 %v3485, %v2958
    %v3487 = vadd.f32 %v3486, %v2960
    %v3488 = vadd.f32 %v3487, %v2962
    %v3489 = vadd.f32 %v3488, %v2964
    %v3490 = vadd.f32 %v3489, %v2966
    %v3491 = vadd.f32 %v3490, %v2968
    %v3492 = vadd.f32 %v3491, %v2970
    %v3493 = vadd.f32 %v3492, %v2972
    %v3494 = vadd.f32 %v3493, %v2974
    %v3495 = vrot.slane %v3494, 4
    %v3496 = vadd.f32 %v3494, %v3495
    %v3497 = vrot.slane %v3496, 2
    %v3498 = vadd.f32 %v3496, %v3497
    %v3499 = vrot.slane %v3498, 1
    %v3500 = vadd.f32 %v3498, %v3499
    %v3501 = vadd.f32 %v2913, %v2915
    %v3502 = vadd.f32 %v3501, %v2917
    %v3503 = vadd.f32 %v3502, %v2919
    %v3504 = vadd.f32 %v3503, %v2921
    %v3505 = vadd.f32 %v3504, %v2923
    %v3506 = vadd.f32 %v3505, %v2925
    %v3507 = vadd.f32 %v3506, %v2927
    %v3508 = vadd.f32 %v3507, %v2929
    %v3509 = vadd.f32 %v3508, %v2931
    %v3510 = vadd.f32 %v3509, %v2933
    %v3511 = vadd.f32 %v3510, %v2935
    %v3512 = vadd.f32 %v3511, %v2937
    %v3513 = vadd.f32 %v3512, %v2939
    %v3514 = vadd.f32 %v3513, %v2941
    %v3515 = vadd.f32 %v3514, %v2943
    %v3516 = vadd.f32 %v3515, %v2945
    %v3517 = vadd.f32 %v3516, %v2947
    %v3518 = vadd.f32 %v3517, %v2949
    %v3519 = vadd.f32 %v3518, %v2951
    %v3520 = vadd.f32 %v3519, %v2953
    %v3521 = vadd.f32 %v3520, %v2955
    %v3522 = vadd.f32 %v3521, %v2957
    %v3523 = vadd.f32 %v3522, %v2959
    %v3524 = vadd.f32 %v3523, %v2961
    %v3525 = vadd.f32 %v3524, %v2963
    %v3526 = vadd.f32 %v3525, %v2965
    %v3527 = vadd.f32 %v3526, %v2967
    %v3528 = vadd.f32 %v3527, %v2969
    %v3529 = vadd.f32 %v3528, %v2971
    %v3530 = vadd.f32 %v3529, %v2973
    %v3531 = vadd.f32 %v3530, %v2975
    %v3532 = vrot.slane %v3531, 4
    %v3533 = vadd.f32 %v3531, %v3532
    %v3534 = vrot.slane %v3533, 2
    %v3535 = vadd.f32 %v3533, %v3534
    %v3536 = vrot.slane %v3535, 1
    %v3537 = vadd.f32 %v3535, %v3536
    %v3538 = vadd.f32 %v2976, %v2978
    %v3539 = vadd.f32 %v3538, %v2980
    %v3540 = vadd.f32 %v3539, %v2982
    %v3541 = vadd.f32 %v3540, %v2984
    %v3542 = vadd.f32 %v3541, %v2986
    %v3543 = vadd.f32 %v3542, %v2988
    %v3544 = vadd.f32 %v3543, %v2990
    %v3545 = vadd.f32 %v3544, %v2992
    %v3546 = vadd.f32 %v3545, %v2994
    %v3547 = vadd.f32 %v3546, %v2996
    %v3548 = vadd.f32 %v3547, %v2998
    %v3549 = vadd.f32 %v3548, %v3000
    %v3550 = vadd.f32 %v3549, %v3002
    %v3551 = vadd.f32 %v3550, %v3004
    %v3552 = vadd.f32 %v3551, %v3006
    %v3553 = vadd.f32 %v3552, %v3008
    %v3554 = vadd.f32 %v3553, %v3010
    %v3555 = vadd.f32 %v3554, %v3012
    %v3556 = vadd.f32 %v3555, %v3014
    %v3557 = vadd.f32 %v3556, %v3016
    %v3558 = vadd.f32 %v3557, %v3018
    %v3559 = vadd.f32 %v3558, %v3020
    %v3560 = vadd.f32 %v3559, %v3022
    %v3561 = vadd.f32 %v3560, %v3024
    %v3562 = vadd.f32 %v3561, %v3026
    %v3563 = vadd.f32 %v3562, %v3028
    %v3564 = vadd.f32 %v3563, %v3030
    %v3565 = vadd.f32 %v3564, %v3032
    %v3566 = vadd.f32 %v3565, %v3034
    %v3567 = vadd.f32 %v3566, %v3036
    %v3568 = vadd.f32 %v3567, %v3038
    %v3569 = vrot.slane %v3568, 4
    %v3570 = vadd.f32 %v3568, %v3569
    %v3571 = vrot.slane %v3570, 2
    %v3572 = vadd.f32 %v3570, %v3571
    %v3573 = vrot.slane %v3572, 1
    %v3574 = vadd.f32 %v3572, %v3573
    %v3575 = vadd.f32 %v2977, %v2979
    %v3576 = vadd.f32 %v3575, %v2981
    %v3577 = vadd.f32 %v3576, %v2983
    %v3578 = vadd.f32 %v3577, %v2985
    %v3579 = vadd.f32 %v3578, %v2987
    %v3580 = vadd.f32 %v3579, %v2989
    %v3581 = vadd.f32 %v3580, %v2991
    %v3582 = vadd.f32 %v3581, %v2993
    %v3583 = vadd.f32 %v3582, %v2995
    %v3584 = vadd.f32 %v3583, %v2997
    %v3585 = vadd.f32 %v3584, %v2999
    %v3586 = vadd.f32 %v3585, %v3001
    %v3587 = vadd.f32 %v3586, %v3003
    %v3588 = vadd.f32 %v3587, %v3005
    %v3589 = vadd.f32 %v3588, %v3007
    %v3590 = vadd.f32 %v3589, %v3009
    %v3591 = vadd.f32 %v3590, %v3011
    %v3592 = vadd.f32 %v3591, %v3013
    %v3593 = vadd.f32 %v3592, %v3015
    %v3594 = vadd.f32 %v3593, %v3017
    %v3595 = vadd.f32 %v3594, %v3019
    %v3596 = vadd.f32 %v3595, %v3021
    %v3597 = vadd.f32 %v3596, %v3023
    %v3598 = vadd.f32 %v3597, %v3025
    %v3599 = vadd.f32 %v3598, %v3027
    %v3600 = vadd.f32 %v3599, %v3029
    %v3601 = vadd.f32 %v3600, %v3031
    %v3602 = vadd.f32 %v3601, %v3033
    %v3603 = vadd.f32 %v3602, %v3035
    %v3604 = vadd.f32 %v3603, %v3037
    %v3605 = vadd.f32 %v3604, %v3039
    %v3606 = vrot.slane %v3605, 4
    %v3607 = vadd.f32 %v3605, %v3606
    %v3608 = vrot.slane %v3607, 2
    %v3609 = vadd.f32 %v3607, %v3608
    %v3610 = vrot.slane %v3609, 1
    %v3611 = vadd.f32 %v3609, %v3610
    %v3612 = vadd.f32 %v3040, %v3042
    %v3613 = vadd.f32 %v3612, %v3044
    %v3614 = vadd.f32 %v3613, %v3046
    %v3615 = vadd.f32 %v3614, %v3048
    %v3616 = vadd.f32 %v3615, %v3050
    %v3617 = vadd.f32 %v3616, %v3052
    %v3618 = vadd.f32 %v3617, %v3054
    %v3619 = vadd.f32 %v3618, %v3056
    %v3620 = vadd.f32 %v3619, %v3058
    %v3621 = vadd.f32 %v3620, %v3060
    %v3622 = vadd.f32 %v3621, %v3062
    %v3623 = vadd.f32 %v3622, %v3064
    %v3624 = vadd.f32 %v3623, %v3066
    %v3625 = vadd.f32 %v3624, %v3068
    %v3626 = vadd.f32 %v3625, %v3070
    %v3627 = vadd.f32 %v3626, %v3072
    %v3628 = vadd.f32 %v3627, %v3074
    %v3629 = vadd.f32 %v3628, %v3076
    %v3630 = vadd.f32 %v3629, %v3078
    %v3631 = vadd.f32 %v3630, %v3080
    %v3632 = vadd.f32 %v3631, %v3082
    %v3633 = vadd.f32 %v3632, %v3084
    %v3634 = vadd.f32 %v3633, %v3086
    %v3635 = vadd.f32 %v3634, %v3088
    %v3636 = vadd.f32 %v3635, %v3090
    %v3637 = vadd.f32 %v3636, %v3092
    %v3638 = vadd.f32 %v3637, %v3094
    %v3639 = vadd.f32 %v3638, %v3096
    %v3640 = vadd.f32 %v3639, %v3098
    %v3641 = vadd.f32 %v3640, %v3100
    %v3642 = vadd.f32 %v3641, %v3102
    %v3643 = vrot.slane %v3642, 4
    %v3644 = vadd.f32 %v3642, %v3643
    %v3645 = vrot.slane %v3644, 2
    %v3646 = vadd.f32 %v3644, %v3645
    %v3647 = vrot.slane %v3646, 1
    %v3648 = vadd.f32 %v3646, %v3647
    %v3649 = vadd.f32 %v3041, %v3043
    %v3650 = vadd.f32 %v3649, %v3045
    %v3651 = vadd.f32 %v3650, %v3047
    %v3652 = vadd.f32 %v3651, %v3049
    %v3653 = vadd.f32 %v3652, %v3051
    %v3654 = vadd.f32 %v3653, %v3053
    %v3655 = vadd.f32 %v3654, %v3055
    %v3656 = vadd.f32 %v3655, %v3057
    %v3657 = vadd.f32 %v3656, %v3059
    %v3658 = vadd.f32 %v3657, %v3061
    %v3659 = vadd.f32 %v3658, %v3063
    %v3660 = vadd.f32 %v3659, %v3065
    %v3661 = vadd.f32 %v3660, %v3067
    %v3662 = vadd.f32 %v3661, %v3069
    %v3663 = vadd.f32 %v3662, %v3071
    %v3664 = vadd.f32 %v3663, %v3073
    %v3665 = vadd.f32 %v3664, %v3075
    %v3666 = vadd.f32 %v3665, %v3077
    %v3667 = vadd.f32 %v3666, %v3079
    %v3668 = vadd.f32 %v3667, %v3081
    %v3669 = vadd.f32 %v3668, %v3083
    %v3670 = vadd.f32 %v3669, %v3085
    %v3671 = vadd.f32 %v3670, %v3087
    %v3672 = vadd.f32 %v3671, %v3089
    %v3673 = vadd.f32 %v3672, %v3091
    %v3674 = vadd.f32 %v3673, %v3093
    %v3675 = vadd.f32 %v3674, %v3095
    %v3676 = vadd.f32 %v3675, %v3097
    %v3677 = vadd.f32 %v3676, %v3099
    %v3678 = vadd.f32 %v3677, %v3101
    %v3679 = vadd.f32 %v3678, %v3103
    %v3680 = vrot.slane %v3679, 4
    %v3681 = vadd.f32 %v3679, %v3680
    %v3682 = vrot.slane %v3681, 2
    %v3683 = vadd.f32 %v3681, %v3682
    %v3684 = vrot.slane %v3683, 1
    %v3685 = vadd.f32 %v3683, %v3684
    %v3686 = vadd.f32 %v3104, %v3106
    %v3687 = vadd.f32 %v3686, %v3108
    %v3688 = vadd.f32 %v3687, %v3110
    %v3689 = vadd.f32 %v3688, %v3112
    %v3690 = vadd.f32 %v3689, %v3114
    %v3691 = vadd.f32 %v3690, %v3116
    %v3692 = vadd.f32 %v3691, %v3118
    %v3693 = vadd.f32 %v3692, %v3120
    %v3694 = vadd.f32 %v3693, %v3122
    %v3695 = vadd.f32 %v3694, %v3124
    %v3696 = vadd.f32 %v3695, %v3126
    %v3697 = vadd.f32 %v3696, %v3128
    %v3698 = vadd.f32 %v3697, %v3130
    %v3699 = vadd.f32 %v3698, %v3132
    %v3700 = vadd.f32 %v3699, %v3134
    %v3701 = vadd.f32 %v3700, %v3136
    %v3702 = vadd.f32 %v3701, %v3138
    %v3703 = vadd.f32 %v3702, %v3140
    %v3704 = vadd.f32 %v3703, %v3142
    %v3705 = vadd.f32 %v3704, %v3144
    %v3706 = vadd.f32 %v3705, %v3146
    %v3707 = vadd.f32 %v3706, %v3148
    %v3708 = vadd.f32 %v3707, %v3150
    %v3709 = vadd.f32 %v3708, %v3152
    %v3710 = vadd.f32 %v3709, %v3154
    %v3711 = vadd.f32 %v3710, %v3156
    %v3712 = vadd.f32 %v3711, %v3158
    %v3713 = vadd.f32 %v3712, %v3160
    %v3714 = vadd.f32 %v3713, %v3162
    %v3715 = vadd.f32 %v3714, %v3164
    %v3716 = vadd.f32 %v3715, %v3166
    %v3717 = vrot.slane %v3716, 4
    %v3718 = vadd.f32 %v3716, %v3717
    %v3719 = vrot.slane %v3718, 2
    %v3720 = vadd.f32 %v3718, %v3719
    %v3721 = vrot.slane %v3720, 1
    %v3722 = vadd.f32 %v3720, %v3721
    %v3723 = vadd.f32 %v3105, %v3107
    %v3724 = vadd.f32 %v3723, %v3109
    %v3725 = vadd.f32 %v3724, %v3111
    %v3726 = vadd.f32 %v3725, %v3113
    %v3727 = vadd.f32 %v3726, %v3115
    %v3728 = vadd.f32 %v3727, %v3117
    %v3729 = vadd.f32 %v3728, %v3119
    %v3730 = vadd.f32 %v3729, %v3121
    %v3731 = vadd.f32 %v3730, %v3123
    %v3732 = vadd.f32 %v3731, %v3125
    %v3733 = vadd.f32 %v3732, %v3127
    %v3734 = vadd.f32 %v3733, %v3129
    %v3735 = vadd.f32 %v3734, %v3131
    %v3736 = vadd.f32 %v3735, %v3133
    %v3737 = vadd.f32 %v3736, %v3135
    %v3738 = vadd.f32 %v3737, %v3137
    %v3739 = vadd.f32 %v3738, %v3139
    %v3740 = vadd.f32 %v3739, %v3141
    %v3741 = vadd.f32 %v3740, %v3143
    %v3742 = vadd.f32 %v3741, %v3145
    %v3743 = vadd.f32 %v3742, %v3147
    %v3744 = vadd.f32 %v3743, %v3149
    %v3745 = vadd.f32 %v3744, %v3151
    %v3746 = vadd.f32 %v3745, %v3153
    %v3747 = vadd.f32 %v3746, %v3155
    %v3748 = vadd.f32 %v3747, %v3157
    %v3749 = vadd.f32 %v3748, %v3159
    %v3750 = vadd.f32 %v3749, %v3161
    %v3751 = vadd.f32 %v3750, %v3163
    %v3752 = vadd.f32 %v3751, %v3165
    %v3753 = vadd.f32 %v3752, %v3167
    %v3754 = vrot.slane %v3753, 4
    %v3755 = vadd.f32 %v3753, %v3754
    %v3756 = vrot.slane %v3755, 2
    %v3757 = vadd.f32 %v3755, %v3756
    %v3758 = vrot.slane %v3757, 1
    %v3759 = vadd.f32 %v3757, %v3758
    %v3760 = vmul.f32 %v3204, 0.00390625
    %v3761 = vmul.f32 %v3241, 0.00390625
    %v3762 = vmul.f32 %v3278, 0.00390625
    %v3763 = vmul.f32 %v3315, 0.00390625
    %v3764 = vmul.f32 %v3352, 0.00390625
    %v3765 = vmul.f32 %v3389, 0.00390625
    %v3766 = vmul.f32 %v3426, 0.00390625
    %v3767 = vmul.f32 %v3463, 0.00390625
    %v3768 = vmul.f32 %v3500, 0.00390625
    %v3769 = vmul.f32 %v3537, 0.00390625
    %v3770 = vmul.f32 %v3574, 0.00390625
    %v3771 = vmul.f32 %v3611, 0.00390625
    %v3772 = vmul.f32 %v3648, 0.00390625
    %v3773 = vmul.f32 %v3685, 0.00390625
    %v3774 = vmul.f32 %v3722, 0.00390625
    %v3775 = vmul.f32 %v3759, 0.00390625
    %vm3792 = vcmask 1041409
    %v3793 = vsel %vm3792, %v3762, %v3760
    %vm3794 = vcmask 1042434
    %v3795 = vsel %vm3794, %v3764, %v3793
    %vm3796 = vcmask 1043459
    %v3797 = vsel %vm3796, %v3766, %v3795
    %vm3798 = vcmask 1044484
    %v3799 = vsel %vm3798, %v3768, %v3797
    %vm3800 = vcmask 1045509
    %v3801 = vsel %vm3800, %v3770, %v3799
    %vm3802 = vcmask 1046534
    %v3803 = vsel %vm3802, %v3772, %v3801
    %vm3804 = vcmask 1047559
    %v3805 = vsel %vm3804, %v3774, %v3803
    %v3806 = vsel %vm3792, %v3763, %v3761
    %v3807 = vsel %vm3794, %v3765, %v3806
    %v3808 = vsel %vm3796, %v3767, %v3807
    %v3809 = vsel %vm3798, %v3769, %v3808
    %v3810 = vsel %vm3800, %v3771, %v3809
    %v3811 = vsel %vm3802, %v3773, %v3810
    %v3812 = vsel %vm3804, %v3775, %v3811
    %3815 = vst [vmem:[#allocation2] sm:$0xff] %v3805
    %3816 = vst [vmem:[#allocation2 + $0x8] sm:$0xff] %v3812
    %3817 = vst.msk [vmem:[#allocation5] sm:$0xff] %vm951, 0.0
  $region41: #{grad_sp_wrap.1} parent=0 // pred_fallthru
    _
  %v3818 = vld [vmem:[#allocation2] sm:$0xff]
  %v3819 = vld [vmem:[#allocation2 + $0x8] sm:$0xff]
  %v3820 = vpack.c.bf16 %v3818, %v3818
  %v3821 = vpack.c.bf16 %v3819, %v3819
  %v3822 = vld [vmem:[%s3] sm:$0xf]
  %v3823 = vld [vmem:[%s3 + $0x4] sm:$0xf]
  %v3824 = vld [vmem:[%s3 + $0x8] sm:$0xf]
  %v3825 = vld [vmem:[%s3 + $0xc] sm:$0xf]
  %v3826 = vld [vmem:[%s3 + $0x10] sm:$0xf]
  %v3827 = vld [vmem:[%s3 + $0x14] sm:$0xf]
  %v3828 = vld [vmem:[%s3 + $0x18] sm:$0xf]
  %v3829 = vld [vmem:[%s3 + $0x1c] sm:$0xf]
  %v3830 = vld [vmem:[%s3 + $0x20] sm:$0xf]
  %v3831 = vld [vmem:[%s3 + $0x24] sm:$0xf]
  %v3832 = vld [vmem:[%s3 + $0x28] sm:$0xf]
  %v3833 = vld [vmem:[%s3 + $0x2c] sm:$0xf]
  %v3834 = vld [vmem:[%s3 + $0x30] sm:$0xf]
  %v3835 = vld [vmem:[%s3 + $0x34] sm:$0xf]
  %v3836 = vld [vmem:[%s3 + $0x38] sm:$0xf]
  %v3837 = vld [vmem:[%s3 + $0x3c] sm:$0xf]
  %v3838 = vld [vmem:[%s4] sm:$0x1]
  %v3840 = vlaneseq
  %v3841 = vshrl.u32 %v3840, 7
  %v3842 = vsub.s32 0, %v3841
  %v3843 = vrot.slane %v3838, %v3842
  %v3861 = vunpack.c.l.b16 %v3822
  %v3862 = vunpack.c.l.b16 %v3823
  %v3863 = vunpack.c.l.b16 %v3824
  %v3864 = vunpack.c.l.b16 %v3825
  %v3865 = vunpack.c.l.b16 %v3826
  %v3866 = vunpack.c.l.b16 %v3827
  %v3867 = vunpack.c.l.b16 %v3828
  %v3868 = vunpack.c.l.b16 %v3829
  %v3869 = vunpack.c.l.b16 %v3830
  %v3870 = vunpack.c.l.b16 %v3831
  %v3871 = vunpack.c.l.b16 %v3832
  %v3872 = vunpack.c.l.b16 %v3833
  %v3873 = vunpack.c.l.b16 %v3834
  %v3874 = vunpack.c.l.b16 %v3835
  %v3875 = vunpack.c.l.b16 %v3836
  %v3876 = vunpack.c.l.b16 %v3837
  %v3877 = vpack.c.b16 %v3862, %v3861
  %v3878 = vpack.c.b16 %v3864, %v3863
  %v3879 = vpack.c.b16 %v3866, %v3865
  %v3880 = vpack.c.b16 %v3868, %v3867
  %v3881 = vpack.c.b16 %v3870, %v3869
  %v3882 = vpack.c.b16 %v3872, %v3871
  %v3883 = vpack.c.b16 %v3874, %v3873
  %v3884 = vpack.c.b16 %v3876, %v3875
  %3893 = vmatprep.subr.bf16.mxu0 0
  %3894 = vmatpush1.bf16.msra.mxu0 %v3877
  %3895 = vmatprep.subr.bf16.mxu0 0
  %3896 = vmatpush1.bf16.msra.mxu0 %v3878
  %3897 = vmatprep.subr.bf16.mxu0 0
  %3898 = vmatpush1.bf16.msra.mxu0 %v3879
  %3899 = vmatprep.subr.bf16.mxu0 0
  %3900 = vmatpush1.bf16.msra.mxu0 %v3880
  %3901 = vmatprep.subr.bf16.mxu0 0
  %3902 = vmatpush1.bf16.msra.mxu0 %v3881
  %3903 = vmatprep.subr.bf16.mxu0 0
  %3904 = vmatpush1.bf16.msra.mxu0 %v3882
  %3905 = vmatprep.subr.bf16.mxu0 0
  %3906 = vmatpush1.bf16.msra.mxu0 %v3883
  %3907 = vmatprep.subr.bf16.mxu0 0
  %3908 = vmatpush1.bf16.msra.mxu0 %v3884
  %3909 = vmatprep.subr.bf16.mxu0 0
  %3910 = vmatpush1.bf16.msra.mxu0 0
  %3911 = vmatprep.subr.bf16.mxu0 0
  %3912 = vmatpush1.bf16.msra.mxu0 0
  %3913 = vmatprep.subr.bf16.mxu0 0
  %3914 = vmatpush1.bf16.msra.mxu0 0
  %3915 = vmatprep.subr.bf16.mxu0 0
  %3916 = vmatpush1.bf16.msra.mxu0 0
  %3917 = vmatprep.subr.bf16.mxu0 0
  %3918 = vmatpush1.bf16.msra.mxu0 0
  %3919 = vmatprep.subr.bf16.mxu0 0
  %3920 = vmatpush1.bf16.msra.mxu0 0
  %3921 = vmatprep.subr.bf16.mxu0 0
  %3922 = vmatpush1.bf16.msra.mxu0 0
  %3923 = vmatprep.subr.bf16.mxu0 0
  %3924 = vmatpush1.bf16.msra.mxu0 0
  %3925 = vmatprep.mubr.bf16.mxu0 0
  %3926 = vmatmul.mubr.bf16.gmra.mrb[0].mxu0 %v3820
  %v3927 = vpop.f32.mrb[0].mxu0
  %v3928 = vadd.f32 %v3843, %v3927
  %v3929 = vpop.f32.mrb[0].mxu0
  %v3930 = vpop.f32.mrb[0].mxu0
  %v3931 = vpop.f32.mrb[0].mxu0
  %3932 = vdwg.mxu0
  %v3933 = vld [vmem:[%s5] sm:$0xf]
  %v3934 = vld [vmem:[%s5 + $0x4] sm:$0xf]
  %v3935 = vld [vmem:[%s5 + $0x8] sm:$0xf]
  %v3936 = vld [vmem:[%s5 + $0xc] sm:$0xf]
  %v3937 = vld [vmem:[%s5 + $0x10] sm:$0xf]
  %v3938 = vld [vmem:[%s5 + $0x14] sm:$0xf]
  %v3939 = vld [vmem:[%s5 + $0x18] sm:$0xf]
  %v3940 = vld [vmem:[%s5 + $0x1c] sm:$0xf]
  %v3941 = vld [vmem:[%s5 + $0x20] sm:$0xf]
  %v3942 = vld [vmem:[%s5 + $0x24] sm:$0xf]
  %v3943 = vld [vmem:[%s5 + $0x28] sm:$0xf]
  %v3944 = vld [vmem:[%s5 + $0x2c] sm:$0xf]
  %v3945 = vld [vmem:[%s5 + $0x30] sm:$0xf]
  %v3946 = vld [vmem:[%s5 + $0x34] sm:$0xf]
  %v3947 = vld [vmem:[%s5 + $0x38] sm:$0xf]
  %v3948 = vld [vmem:[%s5 + $0x3c] sm:$0xf]
  %v3949 = vld [vmem:[%s6] sm:$0x1]
  %v3951 = vlaneseq
  %v3952 = vshrl.u32 %v3951, 7
  %v3953 = vsub.s32 0, %v3952
  %v3954 = vrot.slane %v3949, %v3953
  %v3972 = vunpack.c.l.b16 %v3933
  %v3973 = vunpack.c.l.b16 %v3934
  %v3974 = vunpack.c.l.b16 %v3935
  %v3975 = vunpack.c.l.b16 %v3936
  %v3976 = vunpack.c.l.b16 %v3937
  %v3977 = vunpack.c.l.b16 %v3938
  %v3978 = vunpack.c.l.b16 %v3939
  %v3979 = vunpack.c.l.b16 %v3940
  %v3980 = vunpack.c.l.b16 %v3941
  %v3981 = vunpack.c.l.b16 %v3942
  %v3982 = vunpack.c.l.b16 %v3943
  %v3983 = vunpack.c.l.b16 %v3944
  %v3984 = vunpack.c.l.b16 %v3945
  %v3985 = vunpack.c.l.b16 %v3946
  %v3986 = vunpack.c.l.b16 %v3947
  %v3987 = vunpack.c.l.b16 %v3948
  %v3988 = vpack.c.b16 %v3973, %v3972
  %v3989 = vpack.c.b16 %v3975, %v3974
  %v3990 = vpack.c.b16 %v3977, %v3976
  %v3991 = vpack.c.b16 %v3979, %v3978
  %v3992 = vpack.c.b16 %v3981, %v3980
  %v3993 = vpack.c.b16 %v3983, %v3982
  %v3994 = vpack.c.b16 %v3985, %v3984
  %v3995 = vpack.c.b16 %v3987, %v3986
  %4004 = vmatprep.subr.bf16.mxu0 0
  %4005 = vmatpush1.bf16.msra.mxu0 %v3988
  %4006 = vmatprep.subr.bf16.mxu0 0
  %4007 = vmatpush1.bf16.msra.mxu0 %v3989
  %4008 = vmatprep.subr.bf16.mxu0 0
  %4009 = vmatpush1.bf16.msra.mxu0 %v3990
  %4010 = vmatprep.subr.bf16.mxu0 0
  %4011 = vmatpush1.bf16.msra.mxu0 %v3991
  %4012 = vmatprep.subr.bf16.mxu0 0
  %4013 = vmatpush1.bf16.msra.mxu0 %v3992
  %4014 = vmatprep.subr.bf16.mxu0 0
  %4015 = vmatpush1.bf16.msra.mxu0 %v3993
  %4016 = vmatprep.subr.bf16.mxu0 0
  %4017 = vmatpush1.bf16.msra.mxu0 %v3994
  %4018 = vmatprep.subr.bf16.mxu0 0
  %4019 = vmatpush1.bf16.msra.mxu0 %v3995
  %4020 = vmatprep.subr.bf16.mxu0 0
  %4021 = vmatpush1.bf16.msra.mxu0 0
  %4022 = vmatprep.subr.bf16.mxu0 0
  %4023 = vmatpush1.bf16.msra.mxu0 0
  %4024 = vmatprep.subr.bf16.mxu0 0
  %4025 = vmatpush1.bf16.msra.mxu0 0
  %4026 = vmatprep.subr.bf16.mxu0 0
  %4027 = vmatpush1.bf16.msra.mxu0 0
  %4028 = vmatprep.subr.bf16.mxu0 0
  %4029 = vmatpush1.bf16.msra.mxu0 0
  %4030 = vmatprep.subr.bf16.mxu0 0
  %4031 = vmatpush1.bf16.msra.mxu0 0
  %4032 = vmatprep.subr.bf16.mxu0 0
  %4033 = vmatpush1.bf16.msra.mxu0 0
  %4034 = vmatprep.subr.bf16.mxu0 0
  %4035 = vmatpush1.bf16.msra.mxu0 0
  %4036 = vmatprep.mubr.bf16.mxu0 0
  %4037 = vmatmul.mubr.bf16.gmra.mrb[0].mxu0 %v3821
  %v4038 = vpop.f32.mrb[0].mxu0
  %v4039 = vadd.f32 %v3954, %v4038
  %v4040 = vpop.f32.mrb[0].mxu0
  %v4041 = vpop.f32.mrb[0].mxu0
  %v4042 = vpop.f32.mrb[0].mxu0
  %4043 = vdwg.mxu0
  %s4044 = smul.u32 0, 8
  %s4045 = scalar_lea.vmem [#allocation3], %s4044
  %4046 = vst [vmem:[%s4045] sm:$0xff] %v3928
  %s4047 = scalar_lea.vmem [#allocation4], %s4044
  %4048 = vst [vmem:[%s4047] sm:$0xff] %v4039
  %v4049 = vld [vmem:[#allocation5] sm:$0xff]
  %4050 = vmatprep.subr.mxu0 0.0
  %4051 = vmatpush1.xpose.msra.mxu0 %v4039
  %4052 = vmatprep.subr.mxu0 0.0
  %4053 = vmatpush1.xpose.msra.mxu0 0.0
  %4054 = vmatprep.subr.mxu0 0.0
  %4055 = vmatpush1.xpose.msra.mxu0 0.0
  %4056 = vmatprep.subr.mxu0 0.0
  %4057 = vmatpush1.xpose.msra.mxu0 0.0
  %4058 = vmatprep.subr.mxu0 0.0
  %4059 = vmatpush1.xpose.msra.mxu0 0.0
  %4060 = vmatprep.subr.mxu0 0.0
  %4061 = vmatpush1.xpose.msra.mxu0 0.0
  %4062 = vmatprep.subr.mxu0 0.0
  %4063 = vmatpush1.xpose.msra.mxu0 0.0
  %4064 = vmatprep.subr.mxu0 0.0
  %4065 = vmatpush1.xpose.msra.mxu0 0.0
  %4066 = vmatprep.subr.mxu0 0.0
  %4067 = vmatpush1.xpose.msra.mxu0 0.0
  %4068 = vmatprep.subr.mxu0 0.0
  %4069 = vmatpush1.xpose.msra.mxu0 0.0
  %4070 = vmatprep.subr.mxu0 0.0
  %4071 = vmatpush1.xpose.msra.mxu0 0.0
  %4072 = vmatprep.subr.mxu0 0.0
  %4073 = vmatpush1.xpose.msra.mxu0 0.0
  %4074 = vmatprep.subr.mxu0 0.0
  %4075 = vmatpush1.xpose.msra.mxu0 0.0
  %4076 = vmatprep.subr.mxu0 0.0
  %4077 = vmatpush1.xpose.msra.mxu0 0.0
  %4078 = vmatprep.subr.mxu0 0.0
  %4079 = vmatpush1.xpose.msra.mxu0 0.0
  %4080 = vmatprep.subr.mxu0 0.0
  %4081 = vmatpush1.xpose.msra.mxu0 0.0
  %4082 = vmatprep.subr.mxu0 0.0
  %4083 = vmatpush1.xpose.msra.mxu0 0.0
  %4084 = vmatprep.subr.mxu0 0.0
  %4085 = vmatpush1.xpose.msra.mxu0 0.0
  %4086 = vmatprep.subr.mxu0 0.0
  %4087 = vmatpush1.xpose.msra.mxu0 0.0
  %4088 = vmatprep.subr.mxu0 0.0
  %4089 = vmatpush1.xpose.msra.mxu0 0.0
  %4090 = vmatprep.subr.mxu0 0.0
  %4091 = vmatpush1.xpose.msra.mxu0 0.0
  %4092 = vmatprep.subr.mxu0 0.0
  %4093 = vmatpush1.xpose.msra.mxu0 0.0
  %4094 = vmatprep.subr.mxu0 0.0
  %4095 = vmatpush1.xpose.msra.mxu0 0.0
  %4096 = vmatprep.subr.mxu0 0.0
  %4097 = vmatpush1.xpose.msra.mxu0 0.0
  %4098 = vmatprep.subr.mxu0 0.0
  %4099 = vmatpush1.xpose.msra.mxu0 0.0
  %4100 = vmatprep.subr.mxu0 0.0
  %4101 = vmatpush1.xpose.msra.mxu0 0.0
  %4102 = vmatprep.subr.mxu0 0.0
  %4103 = vmatpush1.xpose.msra.mxu0 0.0
  %4104 = vmatprep.subr.mxu0 0.0
  %4105 = vmatpush1.xpose.msra.mxu0 0.0
  %4106 = vmatprep.subr.mxu0 0.0
  %4107 = vmatpush1.xpose.msra.mxu0 0.0
  %4108 = vmatprep.subr.mxu0 0.0
  %4109 = vmatpush1.xpose.msra.mxu0 0.0
  %4110 = vmatprep.subr.mxu0 0.0
  %4111 = vmatpush1.xpose.msra.mxu0 0.0
  %4112 = vmatprep.subr.mxu0 0.0
  %4113 = vmatpush1.xpose.msra.mxu0 0.0
  %4114 = vmatprep.mubr.f32.mxu0 0.0
  %4115 = vmatmul.mubr.f32.gmra.mrb[0].mxu0 %v3928
  %v4116 = vpop.f32.mrb[0].mxu0
  %v4117 = vadd.f32 0.0, %v4116
  %v4118 = vpop.f32.mrb[0].mxu0
  %4119 = vdwg.mxu0
  %v4120 = vmul.f32 %v4117, 0.17677669
  %v4121 = vadd.f32 %v4049, %v4120
  %vm4122 = vcmask 64512
  %4123 = vst.msk [vmem:[#allocation5] sm:$0xff] %vm4122, %v4121
  // Predicated region
  $region42: #{grad_sp_wrap.1} parent=0 // pred_check
    %p4124 = pneg %p33
  $region43: #{grad_sp_wrap.1} parent=0 // pred_check_branch
    %4126 = sbr.rel (%p4124) target = $region45
  $region44: #{grad_sp_wrap.1} parent=0 // pred_region
    %v4127 = vld [vmem:[#allocation5] sm:$0xff]
    %v4128 = vlaneseq
    %v4129 = vand.u32 %v4128, 127
    %vm4130 = vcmp.lt.s32.totalorder %v4129, 2
    %v4131 = vsel %vm4130, %v4127, -1e+30
    %v4132 = vsel %vm4122, %v4131, -inf
    %4133 = vmax.xlane.f32.xlu0 %v4132
    %v4134 = vpop.xlane.xlu0 %4133
    %v4135 = vsub.f32 %v4131, %v4134
    %v4136 = vmul.f32 %v4135, 1.442695
    %v4137 = vpow.pop %v4136
    %v4138 = vsel %vm4122, %v4137, 0.0
    %4139 = vadd.xlane.f32.xlu0 %v4138
    %v4140 = vpop.xlane.xlu0 %4139
    %v4141 = vrcp.pop %v4140
    %v4142 = vmul.f32 %v4137, %v4141
    %v4143 = vld [vmem:[#allocation3] sm:$0xff]
    %v4144 = vld [vmem:[#allocation4] sm:$0xff]
    %v4146 = vsel %vm4122, %v4142, 0
    %4148 = vmatprep.subr.mxu0 0.0
    %4149 = vmatpush1.msra.mxu0 %v4144
    %4150 = vmatprep.subr.mxu0 0.0
    %4151 = vmatpush1.msra.mxu0 0.0
    %4152 = vmatprep.subr.mxu0 0.0
    %4153 = vmatpush1.msra.mxu0 0.0
    %4154 = vmatprep.subr.mxu0 0.0
    %4155 = vmatpush1.msra.mxu0 0.0
    %4156 = vmatprep.subr.mxu0 0.0
    %4157 = vmatpush1.msra.mxu0 0.0
    %4158 = vmatprep.subr.mxu0 0.0
    %4159 = vmatpush1.msra.mxu0 0.0
    %4160 = vmatprep.subr.mxu0 0.0
    %4161 = vmatpush1.msra.mxu0 0.0
    %4162 = vmatprep.subr.mxu0 0.0
    %4163 = vmatpush1.msra.mxu0 0.0
    %4164 = vmatprep.subr.mxu0 0.0
    %4165 = vmatpush1.msra.mxu0 0.0
    %4166 = vmatprep.subr.mxu0 0.0
    %4167 = vmatpush1.msra.mxu0 0.0
    %4168 = vmatprep.subr.mxu0 0.0
    %4169 = vmatpush1.msra.mxu0 0.0
    %4170 = vmatprep.subr.mxu0 0.0
    %4171 = vmatpush1.msra.mxu0 0.0
    %4172 = vmatprep.subr.mxu0 0.0
    %4173 = vmatpush1.msra.mxu0 0.0
    %4174 = vmatprep.subr.mxu0 0.0
    %4175 = vmatpush1.msra.mxu0 0.0
    %4176 = vmatprep.subr.mxu0 0.0
    %4177 = vmatpush1.msra.mxu0 0.0
    %4178 = vmatprep.subr.mxu0 0.0
    %4179 = vmatpush1.msra.mxu0 0.0
    %4180 = vmatprep.subr.mxu0 0.0
    %4181 = vmatpush1.msra.mxu0 0.0
    %4182 = vmatprep.subr.mxu0 0.0
    %4183 = vmatpush1.msra.mxu0 0.0
    %4184 = vmatprep.subr.mxu0 0.0
    %4185 = vmatpush1.msra.mxu0 0.0
    %4186 = vmatprep.subr.mxu0 0.0
    %4187 = vmatpush1.msra.mxu0 0.0
    %4188 = vmatprep.subr.mxu0 0.0
    %4189 = vmatpush1.msra.mxu0 0.0
    %4190 = vmatprep.subr.mxu0 0.0
    %4191 = vmatpush1.msra.mxu0 0.0
    %4192 = vmatprep.subr.mxu0 0.0
    %4193 = vmatpush1.msra.mxu0 0.0
    %4194 = vmatprep.subr.mxu0 0.0
    %4195 = vmatpush1.msra.mxu0 0.0
    %4196 = vmatprep.subr.mxu0 0.0
    %4197 = vmatpush1.msra.mxu0 0.0
    %4198 = vmatprep.subr.mxu0 0.0
    %4199 = vmatpush1.msra.mxu0 0.0
    %4200 = vmatprep.subr.mxu0 0.0
    %4201 = vmatpush1.msra.mxu0 0.0
    %4202 = vmatprep.subr.mxu0 0.0
    %4203 = vmatpush1.msra.mxu0 0.0
    %4204 = vmatprep.subr.mxu0 0.0
    %4205 = vmatpush1.msra.mxu0 0.0
    %4206 = vmatprep.subr.mxu0 0.0
    %4207 = vmatpush1.msra.mxu0 0.0
    %4208 = vmatprep.subr.mxu0 0.0
    %4209 = vmatpush1.msra.mxu0 0.0
    %4210 = vmatprep.subr.mxu0 0.0
    %4211 = vmatpush1.msra.mxu0 0.0
    %4212 = vmatprep.mubr.f32.mxu0 0.0
    %4213 = vmatmul.mubr.f32.gmra.mrb[0].mxu0 %v4146
    %v4214 = vpop.f32.mrb[0].mxu0
    %v4215 = vadd.f32 0.0, %v4214
    %v4216 = vpop.f32.mrb[0].mxu0
    %4217 = vdwg.mxu0
    %v4218 = vadd.f32 %v4143, %v4215
    %v4219 = vld [vmem:[%s7] sm:$0xf]
    %v4220 = vld [vmem:[%s7 + $0x4] sm:$0xf]
    %v4221 = vld [vmem:[%s7 + $0x8] sm:$0xf]
    %v4222 = vld [vmem:[%s7 + $0xc] sm:$0xf]
    %v4223 = vld [vmem:[%s7 + $0x10] sm:$0xf]
    %v4224 = vld [vmem:[%s7 + $0x14] sm:$0xf]
    %v4225 = vld [vmem:[%s7 + $0x18] sm:$0xf]
    %v4226 = vld [vmem:[%s7 + $0x1c] sm:$0xf]
    %v4227 = vld [vmem:[%s7 + $0x20] sm:$0xf]
    %v4228 = vld [vmem:[%s7 + $0x24] sm:$0xf]
    %v4229 = vld [vmem:[%s7 + $0x28] sm:$0xf]
    %v4230 = vld [vmem:[%s7 + $0x2c] sm:$0xf]
    %v4231 = vld [vmem:[%s7 + $0x30] sm:$0xf]
    %v4232 = vld [vmem:[%s7 + $0x34] sm:$0xf]
    %v4233 = vld [vmem:[%s7 + $0x38] sm:$0xf]
    %v4234 = vld [vmem:[%s7 + $0x3c] sm:$0xf]
    %v4235 = vpack.c.bf16 %v4218, %v4218
    %v4236 = vld [vmem:[%s8] sm:$0x1]
    %v4238 = vlaneseq
    %v4239 = vshrl.u32 %v4238, 7
    %v4240 = vsub.s32 0, %v4239
    %v4241 = vrot.slane %v4236, %v4240
    %v4259 = vunpack.c.l.b16 %v4219
    %v4260 = vunpack.c.l.b16 %v4220
    %v4261 = vunpack.c.l.b16 %v4221
    %v4262 = vunpack.c.l.b16 %v4222
    %v4263 = vunpack.c.l.b16 %v4223
    %v4264 = vunpack.c.l.b16 %v4224
    %v4265 = vunpack.c.l.b16 %v4225
    %v4266 = vunpack.c.l.b16 %v4226
    %v4267 = vunpack.c.l.b16 %v4227
    %v4268 = vunpack.c.l.b16 %v4228
    %v4269 = vunpack.c.l.b16 %v4229
    %v4270 = vunpack.c.l.b16 %v4230
    %v4271 = vunpack.c.l.b16 %v4231
    %v4272 = vunpack.c.l.b16 %v4232
    %v4273 = vunpack.c.l.b16 %v4233
    %v4274 = vunpack.c.l.b16 %v4234
    %v4275 = vpack.c.b16 %v4260, %v4259
    %v4276 = vpack.c.b16 %v4262, %v4261
    %v4277 = vpack.c.b16 %v4264, %v4263
    %v4278 = vpack.c.b16 %v4266, %v4265
    %v4279 = vpack.c.b16 %v4268, %v4267
    %v4280 = vpack.c.b16 %v4270, %v4269
    %v4281 = vpack.c.b16 %v4272, %v4271
    %v4282 = vpack.c.b16 %v4274, %v4273
    %4291 = vmatprep.subr.bf16.mxu0 0
    %4292 = vmatpush1.bf16.msra.mxu0 %v4275
    %4293 = vmatprep.subr.bf16.mxu0 0
    %4294 = vmatpush1.bf16.msra.mxu0 %v4276
    %4295 = vmatprep.subr.bf16.mxu0 0
    %4296 = vmatpush1.bf16.msra.mxu0 %v4277
    %4297 = vmatprep.subr.bf16.mxu0 0
    %4298 = vmatpush1.bf16.msra.mxu0 %v4278
    %4299 = vmatprep.subr.bf16.mxu0 0
    %4300 = vmatpush1.bf16.msra.mxu0 %v4279
    %4301 = vmatprep.subr.bf16.mxu0 0
    %4302 = vmatpush1.bf16.msra.mxu0 %v4280
    %4303 = vmatprep.subr.bf16.mxu0 0
    %4304 = vmatpush1.bf16.msra.mxu0 %v4281
    %4305 = vmatprep.subr.bf16.mxu0 0
    %4306 = vmatpush1.bf16.msra.mxu0 %v4282
    %4307 = vmatprep.subr.bf16.mxu0 0
    %4308 = vmatpush1.bf16.msra.mxu0 0
    %4309 = vmatprep.subr.bf16.mxu0 0
    %4310 = vmatpush1.bf16.msra.mxu0 0
    %4311 = vmatprep.subr.bf16.mxu0 0
    %4312 = vmatpush1.bf16.msra.mxu0 0
    %4313 = vmatprep.subr.bf16.mxu0 0
    %4314 = vmatpush1.bf16.msra.mxu0 0
    %4315 = vmatprep.subr.bf16.mxu0 0
    %4316 = vmatpush1.bf16.msra.mxu0 0
    %4317 = vmatprep.subr.bf16.mxu0 0
    %4318 = vmatpush1.bf16.msra.mxu0 0
    %4319 = vmatprep.subr.bf16.mxu0 0
    %4320 = vmatpush1.bf16.msra.mxu0 0
    %4321 = vmatprep.subr.bf16.mxu0 0
    %4322 = vmatpush1.bf16.msra.mxu0 0
    %4323 = vmatprep.mubr.bf16.mxu0 0
    %4324 = vmatmul.mubr.bf16.gmra.mrb[0].mxu0 %v4235
    %v4325 = vpop.f32.mrb[0].mxu0
    %v4326 = vadd.f32 %v4241, %v4325
    %v4327 = vpop.f32.mrb[0].mxu0
    %v4328 = vpop.f32.mrb[0].mxu0
    %v4329 = vpop.f32.mrb[0].mxu0
    %4330 = vdwg.mxu0
    %4331 = vst [vmem:[%s9] sm:$0xff] %v4326
  $region45: #{grad_sp_wrap.1} parent=0 // pred_fallthru
    _
  // Predicated region
  $region46: #{grad_sp_wrap.1} parent=0 // pred_check
    _
  $region47: #{grad_sp_wrap.1} parent=0 // pred_check_branch
    %4333 = sbr.rel (0) target = $region49
  $region48: #{grad_sp_wrap.1} parent=0 // pred_region
    _
  $region49: #{grad_sp_wrap.1} parent=0 // pred_fallthru
    _
  // Predicated region
  $region50: #{grad_sp_wrap.1} parent=0 // pred_check
    _
  $region51: #{grad_sp_wrap.1} parent=0 // pred_check_branch
    %4335 = sbr.rel (0) target = $region53
  $region52: #{grad_sp_wrap.1} parent=0 // pred_region
    _
  $region53: #{grad_sp_wrap.1} parent=0 // pred_fallthru
    _

</llo_original>
